<compile_context>
chip_gen: v6e
topology: v6e:2x2x1
jax: 0.10.0
libtpu: 0.0.40
codegen_flags: <defaults>
</compile_context>

<pallas_src>
import math

import jax
import jax.numpy as jnp
from jax.experimental import pallas as pl
from jax.experimental.pallas import tpu as pltpu

# ----------------------------- model config (small) -------------------------
B = 2            # batch (number of "titles")
S = 8            # max sequence length (stand-in for max_length=30)
H = 32           # hidden size (stand-in for 768)
NH = 4           # attention heads
D = H // NH      # head dim
I = 64           # FFN intermediate size
L = 2            # encoder layers
V = 50           # vocab size
PAD = 1          # padding_idx (RoBERTa convention)
MAXPOS = S + PAD + 1
LN_EPS = 1e-5
BS = B * S
NEG = -1e9       # additive mask value


def _full_spec(shape):
    n = len(shape)
    return pl.BlockSpec(shape, lambda i, n=n: (0,) * n)


# ----------------------------- in-kernel helpers -----------------------------
def _mm(x, w):
    """MXU matmul: bf16 operands, f32 accumulation."""
    return jnp.dot(x.astype(jnp.bfloat16), w.astype(jnp.bfloat16),
                   preferred_element_type=jnp.float32)


def _mm_nt(a, b):
    """a @ b.T on the MXU (contract last dims), bf16 operands, f32 accum."""
    return jax.lax.dot_general(
        a.astype(jnp.bfloat16), b.astype(jnp.bfloat16),
        (((1,), (1,)), ((), ())),
        preferred_element_type=jnp.float32)


def _layernorm(x, g, b):
    mu = jnp.mean(x, axis=-1, keepdims=True)
    xc = x - mu
    var = jnp.mean(xc * xc, axis=-1, keepdims=True)
    return xc * jax.lax.rsqrt(var + LN_EPS) * g + b


def _gelu(x):
    # TODO(synk): HF XLM-RoBERTa uses exact erf-GELU; tanh approximation here.
    c = 0.7978845608028654  # sqrt(2/pi)
    return 0.5 * x * (1.0 + jnp.tanh(c * (x + 0.044715 * x * x * x)))


# ------------------------------- fused kernel --------------------------------
def encoder_kernel(ids_ref, pos_ref, bias_ref,
                   we_ref, pe_ref, te_ref, eg_ref, eb_ref,
                   qkvw_ref, qkvb_ref, ow_ref, ob_ref,
                   ln1g_ref, ln1b_ref,
                   f1w_ref, f1b_ref, f2w_ref, f2b_ref,
                   ln2g_ref, ln2b_ref,
                   out_ref):
    ids = ids_ref[...]          # (BS, 1) int32
    pos = pos_ref[...]          # (BS, 1) int32
    bias = bias_ref[...]        # (BS, BS) f32 additive mask (0 / NEG)

    # ---- fused embeddings: one-hot gathers on the MXU + sum + LayerNorm ----
    v_iota = jax.lax.broadcasted_iota(jnp.int32, (BS, V), 1)
    we = _mm((ids == v_iota).astype(jnp.float32), we_ref[...])       # (BS, H)
    p_iota = jax.lax.broadcasted_iota(jnp.int32, (BS, MAXPOS), 1)
    pe = _mm((pos == p_iota).astype(jnp.float32), pe_ref[...])       # (BS, H)
    h = _layernorm(we + pe + te_ref[...], eg_ref[...], eb_ref[...])  # (BS, H)

    scale = 1.0 / math.sqrt(D)

    # ---- L encoder layers, all VMEM-resident (static unrolled loop) ----
    for l in range(L):
        x = h
        # fused QKV projection: one (H, 3H) matmul
        qkv = _mm(x, qkvw_ref[l]) + qkvb_ref[l]                      # (BS, 3H)

        # per-head attention via static lane slices; batching handled by the
        # block-diagonal additive bias on the (BS, BS) score matrix.
        ctx_heads = []
        for n in range(NH):
            q = qkv[:, n * D:(n + 1) * D]                            # (BS, D)
            k = qkv[:, H + n * D:H + (n + 1) * D]
            v = qkv[:, 2 * H + n * D:2 * H + (n + 1) * D]
            s = _mm_nt(q, k) * scale + bias                          # (BS, BS)
            m = jnp.max(s, axis=-1, keepdims=True)
            e = jnp.exp(s - m)
            denom = jnp.sum(e, axis=-1, keepdims=True)
            p = e * pl.reciprocal(denom, approx=True)
            ctx_heads.append(_mm(p, v))                              # (BS, D)
        ctx = jnp.concatenate(ctx_heads, axis=-1)                    # (BS, H)

        attn = _mm(ctx, ow_ref[l]) + ob_ref[l]
        h = _layernorm(attn + x, ln1g_ref[l], ln1b_ref[l])

        ffn = _gelu(_mm(h, f1w_ref[l]) + f1b_ref[l])
        ffn = _mm(ffn, f2w_ref[l]) + f2b_ref[l]
        h = _layernorm(ffn + h, ln2g_ref[l], ln2b_ref[l])

    out_ref[...] = h


# ------------------------------ parameter init -------------------------------
def init_params(key):
    def nrm(k, shape):
        return jax.random.normal(k, shape, dtype=jnp.float32) * 0.02

    k = jax.random.split(key, 8)
    return {
        "word_emb": nrm(k[0], (V, H)).at[PAD].set(0.0),
        "pos_emb": nrm(k[1], (MAXPOS, H)).at[PAD].set(0.0),
        "type_emb": nrm(k[2], (1, H)),
        "emb_ln_g": jnp.ones((1, H), jnp.float32),
        "emb_ln_b": jnp.zeros((1, H), jnp.float32),
        # per-layer weights stacked along a leading L axis (kept VMEM-resident)
        "qkv_w": nrm(k[3], (L, H, 3 * H)),
        "qkv_b": jnp.zeros((L, 1, 3 * H), jnp.float32),
        "o_w": nrm(k[4], (L, H, H)),
        "o_b": jnp.zeros((L, 1, H), jnp.float32),
        "ln1_g": jnp.ones((L, 1, H), jnp.float32),
        "ln1_b": jnp.zeros((L, 1, H), jnp.float32),
        "fc1_w": nrm(k[5], (L, H, I)),
        "fc1_b": jnp.zeros((L, 1, I), jnp.float32),
        "fc2_w": nrm(k[6], (L, I, H)),
        "fc2_b": jnp.zeros((L, 1, H), jnp.float32),
        "ln2_g": jnp.ones((L, 1, H), jnp.float32),
        "ln2_b": jnp.zeros((L, 1, H), jnp.float32),
    }


# ------------------------------ forward pass ---------------------------------
def xlmroberta_word_embedder(params, input_ids, attention_mask):
    """Returns (token_embeddings (B,S,H) float32, attention_mask (B,S) int32)."""
    # Tiny host-side glue (int ops on (B,S)): RoBERTa position ids and the
    # combined additive attention bias (batch block-diagonal + key padding).
    mask_i = (input_ids != PAD).astype(jnp.int32)
    position_ids = jnp.cumsum(mask_i, axis=1) * mask_i + PAD
    ids2 = input_ids.reshape(BS, 1).astype(jnp.int32)
    pos2 = position_ids.reshape(BS, 1).astype(jnp.int32)

    batch_ids = jnp.repeat(jnp.arange(B, dtype=jnp.int32), S)          # (BS,)
    same_batch = batch_ids[:, None] == batch_ids[None, :]              # (BS,BS)
    key_valid = attention_mask.reshape(BS) > 0
    bias = jnp.where(same_batch & key_valid[None, :], 0.0,
                     jnp.float32(NEG)).astype(jnp.float32)             # (BS,BS)

    inputs = (
        ids2, pos2, bias,
        params["word_emb"], params["pos_emb"], params["type_emb"],
        params["emb_ln_g"], params["emb_ln_b"],
        params["qkv_w"], params["qkv_b"], params["o_w"], params["o_b"],
        params["ln1_g"], params["ln1_b"],
        params["fc1_w"], params["fc1_b"], params["fc2_w"], params["fc2_b"],
        params["ln2_g"], params["ln2_b"],
    )

    out = pl.pallas_call(
        encoder_kernel,
        grid=(1,),
        in_specs=[_full_spec(x.shape) for x in inputs],
        out_specs=_full_spec((BS, H)),
        out_shape=jax.ShapeDtypeStruct((BS, H), jnp.float32),
        compiler_params=pltpu.CompilerParams(
            dimension_semantics=("arbitrary",)),
    )(*inputs)

    return out.reshape(B, S, H), attention_mask


# ----------------------------------- main ------------------------------------
if __name__ == "__main__":
    key = jax.random.PRNGKey(0)
    k_par, k_ids = jax.random.split(key)
    params = init_params(k_par)

    # TODO(synk): XLMRobertaTokenizer (string -> ids) has no Pallas equivalent;
    # deterministic synthetic token ids + padding stand in for tokenizer output.
    lengths = jnp.array([S, 5], dtype=jnp.int32)               # per-example lengths
    ids = jax.random.randint(k_ids, (B, S), 3, V, dtype=jnp.int32)
    pos = jnp.arange(S, dtype=jnp.int32)[None, :]
    attention_mask = (pos < lengths[:, None]).astype(jnp.int32)       # (B,S)
    input_ids = jnp.where(attention_mask == 1, ids, PAD)              # pad id = 1

    fwd = jax.jit(xlmroberta_word_embedder)
    token_embeddings, out_mask = jax.block_until_ready(
        fwd(params, input_ids, attention_mask)
    )

    assert token_embeddings.shape == (B, S, H)
    assert token_embeddings.dtype == jnp.float32
    assert out_mask.shape == (B, S)
    assert bool(jnp.all(jnp.isfinite(token_embeddings)))
    print("KERNEL_OK")
</pallas_src>

<mosaic_0001>
module attributes {stable_mosaic.version = 11 : i64} {
  func.func @encoder_kernel(%arg0: i32, %arg1: memref<16x1xi32, #tpu.memory_space<vmem>>, %arg2: memref<16x1xi32, #tpu.memory_space<vmem>>, %arg3: memref<16x16xf32, #tpu.memory_space<vmem>>, %arg4: memref<50x32xf32, #tpu.memory_space<vmem>>, %arg5: memref<10x32xf32, #tpu.memory_space<vmem>>, %arg6: memref<1x32xf32, #tpu.memory_space<vmem>>, %arg7: memref<1x32xf32, #tpu.memory_space<vmem>>, %arg8: memref<1x32xf32, #tpu.memory_space<vmem>>, %arg9: memref<2x32x96xf32, #tpu.memory_space<vmem>>, %arg10: memref<2x1x96xf32, #tpu.memory_space<vmem>>, %arg11: memref<2x32x32xf32, #tpu.memory_space<vmem>>, %arg12: memref<2x1x32xf32, #tpu.memory_space<vmem>>, %arg13: memref<2x1x32xf32, #tpu.memory_space<vmem>>, %arg14: memref<2x1x32xf32, #tpu.memory_space<vmem>>, %arg15: memref<2x32x64xf32, #tpu.memory_space<vmem>>, %arg16: memref<2x1x64xf32, #tpu.memory_space<vmem>>, %arg17: memref<2x64x32xf32, #tpu.memory_space<vmem>>, %arg18: memref<2x1x32xf32, #tpu.memory_space<vmem>>, %arg19: memref<2x1x32xf32, #tpu.memory_space<vmem>>, %arg20: memref<2x1x32xf32, #tpu.memory_space<vmem>>, %arg21: memref<16x32xf32, #tpu.memory_space<vmem>>) attributes {dimension_semantics = [#tpu.dimension_semantics<arbitrary>], iteration_bounds = array<i64: 1>, scalar_prefetch = 0 : i64, scratch_operands = 0 : i64, tpu.core_type = #tpu.core_type<tc>, window_params = [{pipeline_mode = #tpu.pipeline_mode<synchronous>, transform_indices = @transform_0, window_bounds = array<i64: 16, 1>}, {pipeline_mode = #tpu.pipeline_mode<synchronous>, transform_indices = @transform_1, window_bounds = array<i64: 16, 1>}, {pipeline_mode = #tpu.pipeline_mode<synchronous>, transform_indices = @transform_2, window_bounds = array<i64: 16, 16>}, {pipeline_mode = #tpu.pipeline_mode<synchronous>, transform_indices = @transform_3, window_bounds = array<i64: 50, 32>}, {pipeline_mode = #tpu.pipeline_mode<synchronous>, transform_indices = @transform_4, window_bounds = array<i64: 10, 32>}, {pipeline_mode = #tpu.pipeline_mode<synchronous>, transform_indices = @transform_5, window_bounds = array<i64: 1, 32>}, {pipeline_mode = #tpu.pipeline_mode<synchronous>, transform_indices = @transform_6, window_bounds = array<i64: 1, 32>}, {pipeline_mode = #tpu.pipeline_mode<synchronous>, transform_indices = @transform_7, window_bounds = array<i64: 1, 32>}, {pipeline_mode = #tpu.pipeline_mode<synchronous>, transform_indices = @transform_8, window_bounds = array<i64: 2, 32, 96>}, {pipeline_mode = #tpu.pipeline_mode<synchronous>, transform_indices = @transform_9, window_bounds = array<i64: 2, 1, 96>}, {pipeline_mode = #tpu.pipeline_mode<synchronous>, transform_indices = @transform_10, window_bounds = array<i64: 2, 32, 32>}, {pipeline_mode = #tpu.pipeline_mode<synchronous>, transform_indices = @transform_11, window_bounds = array<i64: 2, 1, 32>}, {pipeline_mode = #tpu.pipeline_mode<synchronous>, transform_indices = @transform_12, window_bounds = array<i64: 2, 1, 32>}, {pipeline_mode = #tpu.pipeline_mode<synchronous>, transform_indices = @transform_13, window_bounds = array<i64: 2, 1, 32>}, {pipeline_mode = #tpu.pipeline_mode<synchronous>, transform_indices = @transform_14, window_bounds = array<i64: 2, 32, 64>}, {pipeline_mode = #tpu.pipeline_mode<synchronous>, transform_indices = @transform_15, window_bounds = array<i64: 2, 1, 64>}, {pipeline_mode = #tpu.pipeline_mode<synchronous>, transform_indices = @transform_16, window_bounds = array<i64: 2, 64, 32>}, {pipeline_mode = #tpu.pipeline_mode<synchronous>, transform_indices = @transform_17, window_bounds = array<i64: 2, 1, 32>}, {pipeline_mode = #tpu.pipeline_mode<synchronous>, transform_indices = @transform_18, window_bounds = array<i64: 2, 1, 32>}, {pipeline_mode = #tpu.pipeline_mode<synchronous>, transform_indices = @transform_19, window_bounds = array<i64: 2, 1, 32>}, {pipeline_mode = #tpu.pipeline_mode<synchronous>, transform_indices = @transform_20, window_bounds = array<i64: 16, 32>}]} {
    %c0 = arith.constant 0 : index
    %c0_0 = arith.constant 0 : index
    %0 = vector.load %arg1[%c0, %c0_0] : memref<16x1xi32, #tpu.memory_space<vmem>>, vector<16x1xi32>
    %c0_1 = arith.constant 0 : index
    %c0_2 = arith.constant 0 : index
    %1 = vector.load %arg2[%c0_1, %c0_2] : memref<16x1xi32, #tpu.memory_space<vmem>>, vector<16x1xi32>
    %c0_3 = arith.constant 0 : index
    %c0_4 = arith.constant 0 : index
    %2 = vector.load %arg3[%c0_3, %c0_4] : memref<16x16xf32, #tpu.memory_space<vmem>>, vector<16x16xf32>
    %3 = tpu.iota {dimensions = array<i32: 1>} : vector<16x50xi32>
    %4 = vector.broadcast %0 : vector<16x1xi32> to vector<16x50xi32>
    %5 = arith.cmpi eq, %4, %3 : vector<16x50xi32>
    %6 = arith.extui %5 : vector<16x50xi1> to vector<16x50xi32>
    %7 = arith.sitofp %6 : vector<16x50xi32> to vector<16x50xf32>
    %c0_5 = arith.constant 0 : index
    %c0_6 = arith.constant 0 : index
    %8 = vector.load %arg4[%c0_5, %c0_6] : memref<50x32xf32, #tpu.memory_space<vmem>>, vector<50x32xf32>
    %9 = arith.truncf %7 : vector<16x50xf32> to vector<16x50xbf16>
    %10 = arith.truncf %8 : vector<50x32xf32> to vector<50x32xbf16>
    %cst = arith.constant dense<0.000000e+00> : vector<16x32xf32>
    %11 = tpu.matmul %9, %10, %cst {dimension_numbers = #tpu.dot_dimension_numbers<[1], [0], [0], [1], [0, 0, 1, 1], [], []>} : vector<16x50xbf16>, vector<50x32xbf16>, vector<16x32xf32> -> vector<16x32xf32>
    %12 = tpu.iota {dimensions = array<i32: 1>} : vector<16x10xi32>
    %13 = vector.broadcast %1 : vector<16x1xi32> to vector<16x10xi32>
    %14 = arith.cmpi eq, %13, %12 : vector<16x10xi32>
    %15 = arith.extui %14 : vector<16x10xi1> to vector<16x10xi32>
    %16 = arith.sitofp %15 : vector<16x10xi32> to vector<16x10xf32>
    %c0_7 = arith.constant 0 : index
    %c0_8 = arith.constant 0 : index
    %17 = vector.load %arg5[%c0_7, %c0_8] : memref<10x32xf32, #tpu.memory_space<vmem>>, vector<10x32xf32>
    %18 = arith.truncf %16 : vector<16x10xf32> to vector<16x10xbf16>
    %19 = arith.truncf %17 : vector<10x32xf32> to vector<10x32xbf16>
    %cst_9 = arith.constant dense<0.000000e+00> : vector<16x32xf32>
    %20 = tpu.matmul %18, %19, %cst_9 {dimension_numbers = #tpu.dot_dimension_numbers<[1], [0], [0], [1], [0, 0, 1, 1], [], []>} : vector<16x10xbf16>, vector<10x32xbf16>, vector<16x32xf32> -> vector<16x32xf32>
    %21 = arith.addf %11, %20 : vector<16x32xf32>
    %c0_10 = arith.constant 0 : index
    %c0_11 = arith.constant 0 : index
    %22 = vector.load %arg6[%c0_10, %c0_11] : memref<1x32xf32, #tpu.memory_space<vmem>>, vector<1x32xf32>
    %23 = vector.broadcast %22 : vector<1x32xf32> to vector<16x32xf32>
    %24 = arith.addf %21, %23 : vector<16x32xf32>
    %c0_12 = arith.constant 0 : index
    %c0_13 = arith.constant 0 : index
    %25 = vector.load %arg7[%c0_12, %c0_13] : memref<1x32xf32, #tpu.memory_space<vmem>>, vector<1x32xf32>
    %c0_14 = arith.constant 0 : index
    %c0_15 = arith.constant 0 : index
    %26 = vector.load %arg8[%c0_14, %c0_15] : memref<1x32xf32, #tpu.memory_space<vmem>>, vector<1x32xf32>
    %cst_16 = arith.constant dense<0.000000e+00> : vector<16xf32>
    %27 = vector.multi_reduction <add>, %24, %cst_16 [1] : vector<16x32xf32> to vector<16xf32>
    %28 = vector.shape_cast %27 : vector<16xf32> to vector<16x1xf32>
    %cst_17 = arith.constant 3.200000e+01 : f32
    %29 = vector.broadcast %cst_17 : f32 to vector<16x1xf32>
    %30 = arith.divf %28, %29 : vector<16x1xf32>
    %31 = vector.broadcast %30 : vector<16x1xf32> to vector<16x32xf32>
    %32 = arith.subf %24, %31 : vector<16x32xf32>
    %33 = arith.mulf %32, %32 : vector<16x32xf32>
    %cst_18 = arith.constant dense<0.000000e+00> : vector<16xf32>
    %34 = vector.multi_reduction <add>, %33, %cst_18 [1] : vector<16x32xf32> to vector<16xf32>
    %35 = vector.shape_cast %34 : vector<16xf32> to vector<16x1xf32>
    %cst_19 = arith.constant 3.200000e+01 : f32
    %36 = vector.broadcast %cst_19 : f32 to vector<16x1xf32>
    %37 = arith.divf %35, %36 : vector<16x1xf32>
    %cst_20 = arith.constant 9.99999974E-6 : f32
    %38 = vector.broadcast %cst_20 : f32 to vector<16x1xf32>
    %39 = arith.addf %37, %38 : vector<16x1xf32>
    %40 = math.rsqrt %39 : vector<16x1xf32>
    %41 = vector.broadcast %40 : vector<16x1xf32> to vector<16x32xf32>
    %42 = arith.mulf %32, %41 : vector<16x32xf32>
    %43 = vector.broadcast %25 : vector<1x32xf32> to vector<16x32xf32>
    %44 = arith.mulf %42, %43 : vector<16x32xf32>
    %45 = vector.broadcast %26 : vector<1x32xf32> to vector<16x32xf32>
    %46 = arith.addf %44, %45 : vector<16x32xf32>
    %c0_21 = arith.constant 0 : index
    %c0_22 = arith.constant 0 : index
    %c0_23 = arith.constant 0 : index
    %47 = vector.load %arg9[%c0_21, %c0_22, %c0_23] : memref<2x32x96xf32, #tpu.memory_space<vmem>>, vector<1x32x96xf32>
    %48 = vector.shape_cast %47 : vector<1x32x96xf32> to vector<32x96xf32>
    %49 = arith.truncf %46 : vector<16x32xf32> to vector<16x32xbf16>
    %50 = arith.truncf %48 : vector<32x96xf32> to vector<32x96xbf16>
    %cst_24 = arith.constant dense<0.000000e+00> : vector<16x96xf32>
    %51 = tpu.matmul %49, %50, %cst_24 {dimension_numbers = #tpu.dot_dimension_numbers<[1], [0], [0], [1], [0, 0, 1, 1], [], []>} : vector<16x32xbf16>, vector<32x96xbf16>, vector<16x96xf32> -> vector<16x96xf32>
    %c0_25 = arith.constant 0 : index
    %c0_26 = arith.constant 0 : index
    %c0_27 = arith.constant 0 : index
    %52 = vector.load %arg10[%c0_25, %c0_26, %c0_27] : memref<2x1x96xf32, #tpu.memory_space<vmem>>, vector<1x1x96xf32>
    %53 = vector.shape_cast %52 : vector<1x1x96xf32> to vector<1x96xf32>
    %54 = vector.broadcast %53 : vector<1x96xf32> to vector<16x96xf32>
    %55 = arith.addf %51, %54 : vector<16x96xf32>
    %56 = vector.extract_strided_slice %55 {offsets = [0, 0], sizes = [16, 8], strides = [1, 1]} : vector<16x96xf32> to vector<16x8xf32>
    %57 = vector.extract_strided_slice %55 {offsets = [0, 32], sizes = [16, 8], strides = [1, 1]} : vector<16x96xf32> to vector<16x8xf32>
    %58 = vector.extract_strided_slice %55 {offsets = [0, 64], sizes = [16, 8], strides = [1, 1]} : vector<16x96xf32> to vector<16x8xf32>
    %59 = arith.truncf %56 : vector<16x8xf32> to vector<16x8xbf16>
    %60 = arith.truncf %57 : vector<16x8xf32> to vector<16x8xbf16>
    %cst_28 = arith.constant dense<0.000000e+00> : vector<16x16xf32>
    %61 = tpu.matmul %59, %60, %cst_28 {dimension_numbers = #tpu.dot_dimension_numbers<[1], [1], [0], [0], [0, 0, 1, 0], [], []>} : vector<16x8xbf16>, vector<16x8xbf16>, vector<16x16xf32> -> vector<16x16xf32>
    %cst_29 = arith.constant 0.353553385 : f32
    %62 = vector.broadcast %cst_29 : f32 to vector<16x16xf32>
    %63 = arith.mulf %61, %62 : vector<16x16xf32>
    %64 = arith.addf %63, %2 : vector<16x16xf32>
    %cst_30 = arith.constant dense<0xFF800000> : vector<16xf32>
    %65 = vector.multi_reduction <maximumf>, %64, %cst_30 [1] : vector<16x16xf32> to vector<16xf32>
    %66 = vector.shape_cast %65 : vector<16xf32> to vector<16x1xf32>
    %67 = vector.broadcast %66 : vector<16x1xf32> to vector<16x16xf32>
    %68 = arith.subf %64, %67 : vector<16x16xf32>
    %69 = math.exp %68 : vector<16x16xf32>
    %cst_31 = arith.constant dense<0.000000e+00> : vector<16xf32>
    %70 = vector.multi_reduction <add>, %69, %cst_31 [1] : vector<16x16xf32> to vector<16xf32>
    %71 = vector.shape_cast %70 : vector<16xf32> to vector<16x1xf32>
    %72 = tpu.reciprocal %71 {approx = true} : vector<16x1xf32> -> vector<16x1xf32>
    %73 = vector.broadcast %72 : vector<16x1xf32> to vector<16x16xf32>
    %74 = arith.mulf %69, %73 : vector<16x16xf32>
    %75 = arith.truncf %74 : vector<16x16xf32> to vector<16x16xbf16>
    %76 = arith.truncf %58 : vector<16x8xf32> to vector<16x8xbf16>
    %cst_32 = arith.constant dense<0.000000e+00> : vector<16x8xf32>
    %77 = tpu.matmul %75, %76, %cst_32 {dimension_numbers = #tpu.dot_dimension_numbers<[1], [0], [0], [1], [0, 0, 1, 1], [], []>} : vector<16x16xbf16>, vector<16x8xbf16>, vector<16x8xf32> -> vector<16x8xf32>
    %78 = vector.extract_strided_slice %55 {offsets = [0, 8], sizes = [16, 8], strides = [1, 1]} : vector<16x96xf32> to vector<16x8xf32>
    %79 = vector.extract_strided_slice %55 {offsets = [0, 40], sizes = [16, 8], strides = [1, 1]} : vector<16x96xf32> to vector<16x8xf32>
    %80 = vector.extract_strided_slice %55 {offsets = [0, 72], sizes = [16, 8], strides = [1, 1]} : vector<16x96xf32> to vector<16x8xf32>
    %81 = arith.truncf %78 : vector<16x8xf32> to vector<16x8xbf16>
    %82 = arith.truncf %79 : vector<16x8xf32> to vector<16x8xbf16>
    %cst_33 = arith.constant dense<0.000000e+00> : vector<16x16xf32>
    %83 = tpu.matmul %81, %82, %cst_33 {dimension_numbers = #tpu.dot_dimension_numbers<[1], [1], [0], [0], [0, 0, 1, 0], [], []>} : vector<16x8xbf16>, vector<16x8xbf16>, vector<16x16xf32> -> vector<16x16xf32>
    %cst_34 = arith.constant 0.353553385 : f32
    %84 = vector.broadcast %cst_34 : f32 to vector<16x16xf32>
    %85 = arith.mulf %83, %84 : vector<16x16xf32>
    %86 = arith.addf %85, %2 : vector<16x16xf32>
    %cst_35 = arith.constant dense<0xFF800000> : vector<16xf32>
    %87 = vector.multi_reduction <maximumf>, %86, %cst_35 [1] : vector<16x16xf32> to vector<16xf32>
    %88 = vector.shape_cast %87 : vector<16xf32> to vector<16x1xf32>
    %89 = vector.broadcast %88 : vector<16x1xf32> to vector<16x16xf32>
    %90 = arith.subf %86, %89 : vector<16x16xf32>
    %91 = math.exp %90 : vector<16x16xf32>
    %cst_36 = arith.constant dense<0.000000e+00> : vector<16xf32>
    %92 = vector.multi_reduction <add>, %91, %cst_36 [1] : vector<16x16xf32> to vector<16xf32>
    %93 = vector.shape_cast %92 : vector<16xf32> to vector<16x1xf32>
    %94 = tpu.reciprocal %93 {approx = true} : vector<16x1xf32> -> vector<16x1xf32>
    %95 = vector.broadcast %94 : vector<16x1xf32> to vector<16x16xf32>
    %96 = arith.mulf %91, %95 : vector<16x16xf32>
    %97 = arith.truncf %96 : vector<16x16xf32> to vector<16x16xbf16>
    %98 = arith.truncf %80 : vector<16x8xf32> to vector<16x8xbf16>
    %cst_37 = arith.constant dense<0.000000e+00> : vector<16x8xf32>
    %99 = tpu.matmul %97, %98, %cst_37 {dimension_numbers = #tpu.dot_dimension_numbers<[1], [0], [0], [1], [0, 0, 1, 1], [], []>} : vector<16x16xbf16>, vector<16x8xbf16>, vector<16x8xf32> -> vector<16x8xf32>
    %100 = vector.extract_strided_slice %55 {offsets = [0, 16], sizes = [16, 8], strides = [1, 1]} : vector<16x96xf32> to vector<16x8xf32>
    %101 = vector.extract_strided_slice %55 {offsets = [0, 48], sizes = [16, 8], strides = [1, 1]} : vector<16x96xf32> to vector<16x8xf32>
    %102 = vector.extract_strided_slice %55 {offsets = [0, 80], sizes = [16, 8], strides = [1, 1]} : vector<16x96xf32> to vector<16x8xf32>
    %103 = arith.truncf %100 : vector<16x8xf32> to vector<16x8xbf16>
    %104 = arith.truncf %101 : vector<16x8xf32> to vector<16x8xbf16>
    %cst_38 = arith.constant dense<0.000000e+00> : vector<16x16xf32>
    %105 = tpu.matmul %103, %104, %cst_38 {dimension_numbers = #tpu.dot_dimension_numbers<[1], [1], [0], [0], [0, 0, 1, 0], [], []>} : vector<16x8xbf16>, vector<16x8xbf16>, vector<16x16xf32> -> vector<16x16xf32>
    %cst_39 = arith.constant 0.353553385 : f32
    %106 = vector.broadcast %cst_39 : f32 to vector<16x16xf32>
    %107 = arith.mulf %105, %106 : vector<16x16xf32>
    %108 = arith.addf %107, %2 : vector<16x16xf32>
    %cst_40 = arith.constant dense<0xFF800000> : vector<16xf32>
    %109 = vector.multi_reduction <maximumf>, %108, %cst_40 [1] : vector<16x16xf32> to vector<16xf32>
    %110 = vector.shape_cast %109 : vector<16xf32> to vector<16x1xf32>
    %111 = vector.broadcast %110 : vector<16x1xf32> to vector<16x16xf32>
    %112 = arith.subf %108, %111 : vector<16x16xf32>
    %113 = math.exp %112 : vector<16x16xf32>
    %cst_41 = arith.constant dense<0.000000e+00> : vector<16xf32>
    %114 = vector.multi_reduction <add>, %113, %cst_41 [1] : vector<16x16xf32> to vector<16xf32>
    %115 = vector.shape_cast %114 : vector<16xf32> to vector<16x1xf32>
    %116 = tpu.reciprocal %115 {approx = true} : vector<16x1xf32> -> vector<16x1xf32>
    %117 = vector.broadcast %116 : vector<16x1xf32> to vector<16x16xf32>
    %118 = arith.mulf %113, %117 : vector<16x16xf32>
    %119 = arith.truncf %118 : vector<16x16xf32> to vector<16x16xbf16>
    %120 = arith.truncf %102 : vector<16x8xf32> to vector<16x8xbf16>
    %cst_42 = arith.constant dense<0.000000e+00> : vector<16x8xf32>
    %121 = tpu.matmul %119, %120, %cst_42 {dimension_numbers = #tpu.dot_dimension_numbers<[1], [0], [0], [1], [0, 0, 1, 1], [], []>} : vector<16x16xbf16>, vector<16x8xbf16>, vector<16x8xf32> -> vector<16x8xf32>
    %122 = vector.extract_strided_slice %55 {offsets = [0, 24], sizes = [16, 8], strides = [1, 1]} : vector<16x96xf32> to vector<16x8xf32>
    %123 = vector.extract_strided_slice %55 {offsets = [0, 56], sizes = [16, 8], strides = [1, 1]} : vector<16x96xf32> to vector<16x8xf32>
    %124 = vector.extract_strided_slice %55 {offsets = [0, 88], sizes = [16, 8], strides = [1, 1]} : vector<16x96xf32> to vector<16x8xf32>
    %125 = arith.truncf %122 : vector<16x8xf32> to vector<16x8xbf16>
    %126 = arith.truncf %123 : vector<16x8xf32> to vector<16x8xbf16>
    %cst_43 = arith.constant dense<0.000000e+00> : vector<16x16xf32>
    %127 = tpu.matmul %125, %126, %cst_43 {dimension_numbers = #tpu.dot_dimension_numbers<[1], [1], [0], [0], [0, 0, 1, 0], [], []>} : vector<16x8xbf16>, vector<16x8xbf16>, vector<16x16xf32> -> vector<16x16xf32>
    %cst_44 = arith.constant 0.353553385 : f32
    %128 = vector.broadcast %cst_44 : f32 to vector<16x16xf32>
    %129 = arith.mulf %127, %128 : vector<16x16xf32>
    %130 = arith.addf %129, %2 : vector<16x16xf32>
    %cst_45 = arith.constant dense<0xFF800000> : vector<16xf32>
    %131 = vector.multi_reduction <maximumf>, %130, %cst_45 [1] : vector<16x16xf32> to vector<16xf32>
    %132 = vector.shape_cast %131 : vector<16xf32> to vector<16x1xf32>
    %133 = vector.broadcast %132 : vector<16x1xf32> to vector<16x16xf32>
    %134 = arith.subf %130, %133 : vector<16x16xf32>
    %135 = math.exp %134 : vector<16x16xf32>
    %cst_46 = arith.constant dense<0.000000e+00> : vector<16xf32>
    %136 = vector.multi_reduction <add>, %135, %cst_46 [1] : vector<16x16xf32> to vector<16xf32>
    %137 = vector.shape_cast %136 : vector<16xf32> to vector<16x1xf32>
    %138 = tpu.reciprocal %137 {approx = true} : vector<16x1xf32> -> vector<16x1xf32>
    %139 = vector.broadcast %138 : vector<16x1xf32> to vector<16x16xf32>
    %140 = arith.mulf %135, %139 : vector<16x16xf32>
    %141 = arith.truncf %140 : vector<16x16xf32> to vector<16x16xbf16>
    %142 = arith.truncf %124 : vector<16x8xf32> to vector<16x8xbf16>
    %cst_47 = arith.constant dense<0.000000e+00> : vector<16x8xf32>
    %143 = tpu.matmul %141, %142, %cst_47 {dimension_numbers = #tpu.dot_dimension_numbers<[1], [0], [0], [1], [0, 0, 1, 1], [], []>} : vector<16x16xbf16>, vector<16x8xbf16>, vector<16x8xf32> -> vector<16x8xf32>
    %144 = tpu.concatenate %77, %99, %121, %143 in 1 : vector<16x8xf32>, vector<16x8xf32>, vector<16x8xf32>, vector<16x8xf32> -> vector<16x32xf32>
    %c0_48 = arith.constant 0 : index
    %c0_49 = arith.constant 0 : index
    %c0_50 = arith.constant 0 : index
    %145 = vector.load %arg11[%c0_48, %c0_49, %c0_50] : memref<2x32x32xf32, #tpu.memory_space<vmem>>, vector<1x32x32xf32>
    %146 = vector.shape_cast %145 : vector<1x32x32xf32> to vector<32x32xf32>
    %147 = arith.truncf %144 : vector<16x32xf32> to vector<16x32xbf16>
    %148 = arith.truncf %146 : vector<32x32xf32> to vector<32x32xbf16>
    %cst_51 = arith.constant dense<0.000000e+00> : vector<16x32xf32>
    %149 = tpu.matmul %147, %148, %cst_51 {dimension_numbers = #tpu.dot_dimension_numbers<[1], [0], [0], [1], [0, 0, 1, 1], [], []>} : vector<16x32xbf16>, vector<32x32xbf16>, vector<16x32xf32> -> vector<16x32xf32>
    %c0_52 = arith.constant 0 : index
    %c0_53 = arith.constant 0 : index
    %c0_54 = arith.constant 0 : index
    %150 = vector.load %arg12[%c0_52, %c0_53, %c0_54] : memref<2x1x32xf32, #tpu.memory_space<vmem>>, vector<1x1x32xf32>
    %151 = vector.shape_cast %150 : vector<1x1x32xf32> to vector<1x32xf32>
    %152 = vector.broadcast %151 : vector<1x32xf32> to vector<16x32xf32>
    %153 = arith.addf %149, %152 : vector<16x32xf32>
    %154 = arith.addf %153, %46 : vector<16x32xf32>
    %c0_55 = arith.constant 0 : index
    %c0_56 = arith.constant 0 : index
    %c0_57 = arith.constant 0 : index
    %155 = vector.load %arg13[%c0_55, %c0_56, %c0_57] : memref<2x1x32xf32, #tpu.memory_space<vmem>>, vector<1x1x32xf32>
    %156 = vector.shape_cast %155 : vector<1x1x32xf32> to vector<1x32xf32>
    %c0_58 = arith.constant 0 : index
    %c0_59 = arith.constant 0 : index
    %c0_60 = arith.constant 0 : index
    %157 = vector.load %arg14[%c0_58, %c0_59, %c0_60] : memref<2x1x32xf32, #tpu.memory_space<vmem>>, vector<1x1x32xf32>
    %158 = vector.shape_cast %157 : vector<1x1x32xf32> to vector<1x32xf32>
    %cst_61 = arith.constant dense<0.000000e+00> : vector<16xf32>
    %159 = vector.multi_reduction <add>, %154, %cst_61 [1] : vector<16x32xf32> to vector<16xf32>
    %160 = vector.shape_cast %159 : vector<16xf32> to vector<16x1xf32>
    %cst_62 = arith.constant 3.200000e+01 : f32
    %161 = vector.broadcast %cst_62 : f32 to vector<16x1xf32>
    %162 = arith.divf %160, %161 : vector<16x1xf32>
    %163 = vector.broadcast %162 : vector<16x1xf32> to vector<16x32xf32>
    %164 = arith.subf %154, %163 : vector<16x32xf32>
    %165 = arith.mulf %164, %164 : vector<16x32xf32>
    %cst_63 = arith.constant dense<0.000000e+00> : vector<16xf32>
    %166 = vector.multi_reduction <add>, %165, %cst_63 [1] : vector<16x32xf32> to vector<16xf32>
    %167 = vector.shape_cast %166 : vector<16xf32> to vector<16x1xf32>
    %cst_64 = arith.constant 3.200000e+01 : f32
    %168 = vector.broadcast %cst_64 : f32 to vector<16x1xf32>
    %169 = arith.divf %167, %168 : vector<16x1xf32>
    %cst_65 = arith.constant 9.99999974E-6 : f32
    %170 = vector.broadcast %cst_65 : f32 to vector<16x1xf32>
    %171 = arith.addf %169, %170 : vector<16x1xf32>
    %172 = math.rsqrt %171 : vector<16x1xf32>
    %173 = vector.broadcast %172 : vector<16x1xf32> to vector<16x32xf32>
    %174 = arith.mulf %164, %173 : vector<16x32xf32>
    %175 = vector.broadcast %156 : vector<1x32xf32> to vector<16x32xf32>
    %176 = arith.mulf %174, %175 : vector<16x32xf32>
    %177 = vector.broadcast %158 : vector<1x32xf32> to vector<16x32xf32>
    %178 = arith.addf %176, %177 : vector<16x32xf32>
    %c0_66 = arith.constant 0 : index
    %c0_67 = arith.constant 0 : index
    %c0_68 = arith.constant 0 : index
    %179 = vector.load %arg15[%c0_66, %c0_67, %c0_68] : memref<2x32x64xf32, #tpu.memory_space<vmem>>, vector<1x32x64xf32>
    %180 = vector.shape_cast %179 : vector<1x32x64xf32> to vector<32x64xf32>
    %181 = arith.truncf %178 : vector<16x32xf32> to vector<16x32xbf16>
    %182 = arith.truncf %180 : vector<32x64xf32> to vector<32x64xbf16>
    %cst_69 = arith.constant dense<0.000000e+00> : vector<16x64xf32>
    %183 = tpu.matmul %181, %182, %cst_69 {dimension_numbers = #tpu.dot_dimension_numbers<[1], [0], [0], [1], [0, 0, 1, 1], [], []>} : vector<16x32xbf16>, vector<32x64xbf16>, vector<16x64xf32> -> vector<16x64xf32>
    %c0_70 = arith.constant 0 : index
    %c0_71 = arith.constant 0 : index
    %c0_72 = arith.constant 0 : index
    %184 = vector.load %arg16[%c0_70, %c0_71, %c0_72] : memref<2x1x64xf32, #tpu.memory_space<vmem>>, vector<1x1x64xf32>
    %185 = vector.shape_cast %184 : vector<1x1x64xf32> to vector<1x64xf32>
    %186 = vector.broadcast %185 : vector<1x64xf32> to vector<16x64xf32>
    %187 = arith.addf %183, %186 : vector<16x64xf32>
    %cst_73 = arith.constant 5.000000e-01 : f32
    %188 = vector.broadcast %cst_73 : f32 to vector<16x64xf32>
    %189 = arith.mulf %188, %187 : vector<16x64xf32>
    %cst_74 = arith.constant 4.471500e-02 : f32
    %190 = vector.broadcast %cst_74 : f32 to vector<16x64xf32>
    %191 = arith.mulf %190, %187 : vector<16x64xf32>
    %192 = arith.mulf %191, %187 : vector<16x64xf32>
    %193 = arith.mulf %192, %187 : vector<16x64xf32>
    %194 = arith.addf %187, %193 : vector<16x64xf32>
    %cst_75 = arith.constant 0.797884583 : f32
    %195 = vector.broadcast %cst_75 : f32 to vector<16x64xf32>
    %196 = arith.mulf %195, %194 : vector<16x64xf32>
    %197 = math.tanh %196 : vector<16x64xf32>
    %cst_76 = arith.constant 1.000000e+00 : f32
    %198 = vector.broadcast %cst_76 : f32 to vector<16x64xf32>
    %199 = arith.addf %198, %197 : vector<16x64xf32>
    %200 = arith.mulf %189, %199 : vector<16x64xf32>
    %c0_77 = arith.constant 0 : index
    %c0_78 = arith.constant 0 : index
    %c0_79 = arith.constant 0 : index
    %201 = vector.load %arg17[%c0_77, %c0_78, %c0_79] : memref<2x64x32xf32, #tpu.memory_space<vmem>>, vector<1x64x32xf32>
    %202 = vector.shape_cast %201 : vector<1x64x32xf32> to vector<64x32xf32>
    %203 = arith.truncf %200 : vector<16x64xf32> to vector<16x64xbf16>
    %204 = arith.truncf %202 : vector<64x32xf32> to vector<64x32xbf16>
    %cst_80 = arith.constant dense<0.000000e+00> : vector<16x32xf32>
    %205 = tpu.matmul %203, %204, %cst_80 {dimension_numbers = #tpu.dot_dimension_numbers<[1], [0], [0], [1], [0, 0, 1, 1], [], []>} : vector<16x64xbf16>, vector<64x32xbf16>, vector<16x32xf32> -> vector<16x32xf32>
    %c0_81 = arith.constant 0 : index
    %c0_82 = arith.constant 0 : index
    %c0_83 = arith.constant 0 : index
    %206 = vector.load %arg18[%c0_81, %c0_82, %c0_83] : memref<2x1x32xf32, #tpu.memory_space<vmem>>, vector<1x1x32xf32>
    %207 = vector.shape_cast %206 : vector<1x1x32xf32> to vector<1x32xf32>
    %208 = vector.broadcast %207 : vector<1x32xf32> to vector<16x32xf32>
    %209 = arith.addf %205, %208 : vector<16x32xf32>
    %210 = arith.addf %209, %178 : vector<16x32xf32>
    %c0_84 = arith.constant 0 : index
    %c0_85 = arith.constant 0 : index
    %c0_86 = arith.constant 0 : index
    %211 = vector.load %arg19[%c0_84, %c0_85, %c0_86] : memref<2x1x32xf32, #tpu.memory_space<vmem>>, vector<1x1x32xf32>
    %212 = vector.shape_cast %211 : vector<1x1x32xf32> to vector<1x32xf32>
    %c0_87 = arith.constant 0 : index
    %c0_88 = arith.constant 0 : index
    %c0_89 = arith.constant 0 : index
    %213 = vector.load %arg20[%c0_87, %c0_88, %c0_89] : memref<2x1x32xf32, #tpu.memory_space<vmem>>, vector<1x1x32xf32>
    %214 = vector.shape_cast %213 : vector<1x1x32xf32> to vector<1x32xf32>
    %cst_90 = arith.constant dense<0.000000e+00> : vector<16xf32>
    %215 = vector.multi_reduction <add>, %210, %cst_90 [1] : vector<16x32xf32> to vector<16xf32>
    %216 = vector.shape_cast %215 : vector<16xf32> to vector<16x1xf32>
    %cst_91 = arith.constant 3.200000e+01 : f32
    %217 = vector.broadcast %cst_91 : f32 to vector<16x1xf32>
    %218 = arith.divf %216, %217 : vector<16x1xf32>
    %219 = vector.broadcast %218 : vector<16x1xf32> to vector<16x32xf32>
    %220 = arith.subf %210, %219 : vector<16x32xf32>
    %221 = arith.mulf %220, %220 : vector<16x32xf32>
    %cst_92 = arith.constant dense<0.000000e+00> : vector<16xf32>
    %222 = vector.multi_reduction <add>, %221, %cst_92 [1] : vector<16x32xf32> to vector<16xf32>
    %223 = vector.shape_cast %222 : vector<16xf32> to vector<16x1xf32>
    %cst_93 = arith.constant 3.200000e+01 : f32
    %224 = vector.broadcast %cst_93 : f32 to vector<16x1xf32>
    %225 = arith.divf %223, %224 : vector<16x1xf32>
    %cst_94 = arith.constant 9.99999974E-6 : f32
    %226 = vector.broadcast %cst_94 : f32 to vector<16x1xf32>
    %227 = arith.addf %225, %226 : vector<16x1xf32>
    %228 = math.rsqrt %227 : vector<16x1xf32>
    %229 = vector.broadcast %228 : vector<16x1xf32> to vector<16x32xf32>
    %230 = arith.mulf %220, %229 : vector<16x32xf32>
    %231 = vector.broadcast %212 : vector<1x32xf32> to vector<16x32xf32>
    %232 = arith.mulf %230, %231 : vector<16x32xf32>
    %233 = vector.broadcast %214 : vector<1x32xf32> to vector<16x32xf32>
    %234 = arith.addf %232, %233 : vector<16x32xf32>
    %c1 = arith.constant 1 : index
    %c0_95 = arith.constant 0 : index
    %c0_96 = arith.constant 0 : index
    %235 = vector.load %arg9[%c1, %c0_95, %c0_96] : memref<2x32x96xf32, #tpu.memory_space<vmem>>, vector<1x32x96xf32>
    %236 = vector.shape_cast %235 : vector<1x32x96xf32> to vector<32x96xf32>
    %237 = arith.truncf %234 : vector<16x32xf32> to vector<16x32xbf16>
    %238 = arith.truncf %236 : vector<32x96xf32> to vector<32x96xbf16>
    %cst_97 = arith.constant dense<0.000000e+00> : vector<16x96xf32>
    %239 = tpu.matmul %237, %238, %cst_97 {dimension_numbers = #tpu.dot_dimension_numbers<[1], [0], [0], [1], [0, 0, 1, 1], [], []>} : vector<16x32xbf16>, vector<32x96xbf16>, vector<16x96xf32> -> vector<16x96xf32>
    %c1_98 = arith.constant 1 : index
    %c0_99 = arith.constant 0 : index
    %c0_100 = arith.constant 0 : index
    %240 = vector.load %arg10[%c1_98, %c0_99, %c0_100] : memref<2x1x96xf32, #tpu.memory_space<vmem>>, vector<1x1x96xf32>
    %241 = vector.shape_cast %240 : vector<1x1x96xf32> to vector<1x96xf32>
    %242 = vector.broadcast %241 : vector<1x96xf32> to vector<16x96xf32>
    %243 = arith.addf %239, %242 : vector<16x96xf32>
    %244 = vector.extract_strided_slice %243 {offsets = [0, 0], sizes = [16, 8], strides = [1, 1]} : vector<16x96xf32> to vector<16x8xf32>
    %245 = vector.extract_strided_slice %243 {offsets = [0, 32], sizes = [16, 8], strides = [1, 1]} : vector<16x96xf32> to vector<16x8xf32>
    %246 = vector.extract_strided_slice %243 {offsets = [0, 64], sizes = [16, 8], strides = [1, 1]} : vector<16x96xf32> to vector<16x8xf32>
    %247 = arith.truncf %244 : vector<16x8xf32> to vector<16x8xbf16>
    %248 = arith.truncf %245 : vector<16x8xf32> to vector<16x8xbf16>
    %cst_101 = arith.constant dense<0.000000e+00> : vector<16x16xf32>
    %249 = tpu.matmul %247, %248, %cst_101 {dimension_numbers = #tpu.dot_dimension_numbers<[1], [1], [0], [0], [0, 0, 1, 0], [], []>} : vector<16x8xbf16>, vector<16x8xbf16>, vector<16x16xf32> -> vector<16x16xf32>
    %cst_102 = arith.constant 0.353553385 : f32
    %250 = vector.broadcast %cst_102 : f32 to vector<16x16xf32>
    %251 = arith.mulf %249, %250 : vector<16x16xf32>
    %252 = arith.addf %251, %2 : vector<16x16xf32>
    %cst_103 = arith.constant dense<0xFF800000> : vector<16xf32>
    %253 = vector.multi_reduction <maximumf>, %252, %cst_103 [1] : vector<16x16xf32> to vector<16xf32>
    %254 = vector.shape_cast %253 : vector<16xf32> to vector<16x1xf32>
    %255 = vector.broadcast %254 : vector<16x1xf32> to vector<16x16xf32>
    %256 = arith.subf %252, %255 : vector<16x16xf32>
    %257 = math.exp %256 : vector<16x16xf32>
    %cst_104 = arith.constant dense<0.000000e+00> : vector<16xf32>
    %258 = vector.multi_reduction <add>, %257, %cst_104 [1] : vector<16x16xf32> to vector<16xf32>
    %259 = vector.shape_cast %258 : vector<16xf32> to vector<16x1xf32>
    %260 = tpu.reciprocal %259 {approx = true} : vector<16x1xf32> -> vector<16x1xf32>
    %261 = vector.broadcast %260 : vector<16x1xf32> to vector<16x16xf32>
    %262 = arith.mulf %257, %261 : vector<16x16xf32>
    %263 = arith.truncf %262 : vector<16x16xf32> to vector<16x16xbf16>
    %264 = arith.truncf %246 : vector<16x8xf32> to vector<16x8xbf16>
    %cst_105 = arith.constant dense<0.000000e+00> : vector<16x8xf32>
    %265 = tpu.matmul %263, %264, %cst_105 {dimension_numbers = #tpu.dot_dimension_numbers<[1], [0], [0], [1], [0, 0, 1, 1], [], []>} : vector<16x16xbf16>, vector<16x8xbf16>, vector<16x8xf32> -> vector<16x8xf32>
    %266 = vector.extract_strided_slice %243 {offsets = [0, 8], sizes = [16, 8], strides = [1, 1]} : vector<16x96xf32> to vector<16x8xf32>
    %267 = vector.extract_strided_slice %243 {offsets = [0, 40], sizes = [16, 8], strides = [1, 1]} : vector<16x96xf32> to vector<16x8xf32>
    %268 = vector.extract_strided_slice %243 {offsets = [0, 72], sizes = [16, 8], strides = [1, 1]} : vector<16x96xf32> to vector<16x8xf32>
    %269 = arith.truncf %266 : vector<16x8xf32> to vector<16x8xbf16>
    %270 = arith.truncf %267 : vector<16x8xf32> to vector<16x8xbf16>
    %cst_106 = arith.constant dense<0.000000e+00> : vector<16x16xf32>
    %271 = tpu.matmul %269, %270, %cst_106 {dimension_numbers = #tpu.dot_dimension_numbers<[1], [1], [0], [0], [0, 0, 1, 0], [], []>} : vector<16x8xbf16>, vector<16x8xbf16>, vector<16x16xf32> -> vector<16x16xf32>
    %cst_107 = arith.constant 0.353553385 : f32
    %272 = vector.broadcast %cst_107 : f32 to vector<16x16xf32>
    %273 = arith.mulf %271, %272 : vector<16x16xf32>
    %274 = arith.addf %273, %2 : vector<16x16xf32>
    %cst_108 = arith.constant dense<0xFF800000> : vector<16xf32>
    %275 = vector.multi_reduction <maximumf>, %274, %cst_108 [1] : vector<16x16xf32> to vector<16xf32>
    %276 = vector.shape_cast %275 : vector<16xf32> to vector<16x1xf32>
    %277 = vector.broadcast %276 : vector<16x1xf32> to vector<16x16xf32>
    %278 = arith.subf %274, %277 : vector<16x16xf32>
    %279 = math.exp %278 : vector<16x16xf32>
    %cst_109 = arith.constant dense<0.000000e+00> : vector<16xf32>
    %280 = vector.multi_reduction <add>, %279, %cst_109 [1] : vector<16x16xf32> to vector<16xf32>
    %281 = vector.shape_cast %280 : vector<16xf32> to vector<16x1xf32>
    %282 = tpu.reciprocal %281 {approx = true} : vector<16x1xf32> -> vector<16x1xf32>
    %283 = vector.broadcast %282 : vector<16x1xf32> to vector<16x16xf32>
    %284 = arith.mulf %279, %283 : vector<16x16xf32>
    %285 = arith.truncf %284 : vector<16x16xf32> to vector<16x16xbf16>
    %286 = arith.truncf %268 : vector<16x8xf32> to vector<16x8xbf16>
    %cst_110 = arith.constant dense<0.000000e+00> : vector<16x8xf32>
    %287 = tpu.matmul %285, %286, %cst_110 {dimension_numbers = #tpu.dot_dimension_numbers<[1], [0], [0], [1], [0, 0, 1, 1], [], []>} : vector<16x16xbf16>, vector<16x8xbf16>, vector<16x8xf32> -> vector<16x8xf32>
    %288 = vector.extract_strided_slice %243 {offsets = [0, 16], sizes = [16, 8], strides = [1, 1]} : vector<16x96xf32> to vector<16x8xf32>
    %289 = vector.extract_strided_slice %243 {offsets = [0, 48], sizes = [16, 8], strides = [1, 1]} : vector<16x96xf32> to vector<16x8xf32>
    %290 = vector.extract_strided_slice %243 {offsets = [0, 80], sizes = [16, 8], strides = [1, 1]} : vector<16x96xf32> to vector<16x8xf32>
    %291 = arith.truncf %288 : vector<16x8xf32> to vector<16x8xbf16>
    %292 = arith.truncf %289 : vector<16x8xf32> to vector<16x8xbf16>
    %cst_111 = arith.constant dense<0.000000e+00> : vector<16x16xf32>
    %293 = tpu.matmul %291, %292, %cst_111 {dimension_numbers = #tpu.dot_dimension_numbers<[1], [1], [0], [0], [0, 0, 1, 0], [], []>} : vector<16x8xbf16>, vector<16x8xbf16>, vector<16x16xf32> -> vector<16x16xf32>
    %cst_112 = arith.constant 0.353553385 : f32
    %294 = vector.broadcast %cst_112 : f32 to vector<16x16xf32>
    %295 = arith.mulf %293, %294 : vector<16x16xf32>
    %296 = arith.addf %295, %2 : vector<16x16xf32>
    %cst_113 = arith.constant dense<0xFF800000> : vector<16xf32>
    %297 = vector.multi_reduction <maximumf>, %296, %cst_113 [1] : vector<16x16xf32> to vector<16xf32>
    %298 = vector.shape_cast %297 : vector<16xf32> to vector<16x1xf32>
    %299 = vector.broadcast %298 : vector<16x1xf32> to vector<16x16xf32>
    %300 = arith.subf %296, %299 : vector<16x16xf32>
    %301 = math.exp %300 : vector<16x16xf32>
    %cst_114 = arith.constant dense<0.000000e+00> : vector<16xf32>
    %302 = vector.multi_reduction <add>, %301, %cst_114 [1] : vector<16x16xf32> to vector<16xf32>
    %303 = vector.shape_cast %302 : vector<16xf32> to vector<16x1xf32>
    %304 = tpu.reciprocal %303 {approx = true} : vector<16x1xf32> -> vector<16x1xf32>
    %305 = vector.broadcast %304 : vector<16x1xf32> to vector<16x16xf32>
    %306 = arith.mulf %301, %305 : vector<16x16xf32>
    %307 = arith.truncf %306 : vector<16x16xf32> to vector<16x16xbf16>
    %308 = arith.truncf %290 : vector<16x8xf32> to vector<16x8xbf16>
    %cst_115 = arith.constant dense<0.000000e+00> : vector<16x8xf32>
    %309 = tpu.matmul %307, %308, %cst_115 {dimension_numbers = #tpu.dot_dimension_numbers<[1], [0], [0], [1], [0, 0, 1, 1], [], []>} : vector<16x16xbf16>, vector<16x8xbf16>, vector<16x8xf32> -> vector<16x8xf32>
    %310 = vector.extract_strided_slice %243 {offsets = [0, 24], sizes = [16, 8], strides = [1, 1]} : vector<16x96xf32> to vector<16x8xf32>
    %311 = vector.extract_strided_slice %243 {offsets = [0, 56], sizes = [16, 8], strides = [1, 1]} : vector<16x96xf32> to vector<16x8xf32>
    %312 = vector.extract_strided_slice %243 {offsets = [0, 88], sizes = [16, 8], strides = [1, 1]} : vector<16x96xf32> to vector<16x8xf32>
    %313 = arith.truncf %310 : vector<16x8xf32> to vector<16x8xbf16>
    %314 = arith.truncf %311 : vector<16x8xf32> to vector<16x8xbf16>
    %cst_116 = arith.constant dense<0.000000e+00> : vector<16x16xf32>
    %315 = tpu.matmul %313, %314, %cst_116 {dimension_numbers = #tpu.dot_dimension_numbers<[1], [1], [0], [0], [0, 0, 1, 0], [], []>} : vector<16x8xbf16>, vector<16x8xbf16>, vector<16x16xf32> -> vector<16x16xf32>
    %cst_117 = arith.constant 0.353553385 : f32
    %316 = vector.broadcast %cst_117 : f32 to vector<16x16xf32>
    %317 = arith.mulf %315, %316 : vector<16x16xf32>
    %318 = arith.addf %317, %2 : vector<16x16xf32>
    %cst_118 = arith.constant dense<0xFF800000> : vector<16xf32>
    %319 = vector.multi_reduction <maximumf>, %318, %cst_118 [1] : vector<16x16xf32> to vector<16xf32>
    %320 = vector.shape_cast %319 : vector<16xf32> to vector<16x1xf32>
    %321 = vector.broadcast %320 : vector<16x1xf32> to vector<16x16xf32>
    %322 = arith.subf %318, %321 : vector<16x16xf32>
    %323 = math.exp %322 : vector<16x16xf32>
    %cst_119 = arith.constant dense<0.000000e+00> : vector<16xf32>
    %324 = vector.multi_reduction <add>, %323, %cst_119 [1] : vector<16x16xf32> to vector<16xf32>
    %325 = vector.shape_cast %324 : vector<16xf32> to vector<16x1xf32>
    %326 = tpu.reciprocal %325 {approx = true} : vector<16x1xf32> -> vector<16x1xf32>
    %327 = vector.broadcast %326 : vector<16x1xf32> to vector<16x16xf32>
    %328 = arith.mulf %323, %327 : vector<16x16xf32>
    %329 = arith.truncf %328 : vector<16x16xf32> to vector<16x16xbf16>
    %330 = arith.truncf %312 : vector<16x8xf32> to vector<16x8xbf16>
    %cst_120 = arith.constant dense<0.000000e+00> : vector<16x8xf32>
    %331 = tpu.matmul %329, %330, %cst_120 {dimension_numbers = #tpu.dot_dimension_numbers<[1], [0], [0], [1], [0, 0, 1, 1], [], []>} : vector<16x16xbf16>, vector<16x8xbf16>, vector<16x8xf32> -> vector<16x8xf32>
    %332 = tpu.concatenate %265, %287, %309, %331 in 1 : vector<16x8xf32>, vector<16x8xf32>, vector<16x8xf32>, vector<16x8xf32> -> vector<16x32xf32>
    %c1_121 = arith.constant 1 : index
    %c0_122 = arith.constant 0 : index
    %c0_123 = arith.constant 0 : index
    %333 = vector.load %arg11[%c1_121, %c0_122, %c0_123] : memref<2x32x32xf32, #tpu.memory_space<vmem>>, vector<1x32x32xf32>
    %334 = vector.shape_cast %333 : vector<1x32x32xf32> to vector<32x32xf32>
    %335 = arith.truncf %332 : vector<16x32xf32> to vector<16x32xbf16>
    %336 = arith.truncf %334 : vector<32x32xf32> to vector<32x32xbf16>
    %cst_124 = arith.constant dense<0.000000e+00> : vector<16x32xf32>
    %337 = tpu.matmul %335, %336, %cst_124 {dimension_numbers = #tpu.dot_dimension_numbers<[1], [0], [0], [1], [0, 0, 1, 1], [], []>} : vector<16x32xbf16>, vector<32x32xbf16>, vector<16x32xf32> -> vector<16x32xf32>
    %c1_125 = arith.constant 1 : index
    %c0_126 = arith.constant 0 : index
    %c0_127 = arith.constant 0 : index
    %338 = vector.load %arg12[%c1_125, %c0_126, %c0_127] : memref<2x1x32xf32, #tpu.memory_space<vmem>>, vector<1x1x32xf32>
    %339 = vector.shape_cast %338 : vector<1x1x32xf32> to vector<1x32xf32>
    %340 = vector.broadcast %339 : vector<1x32xf32> to vector<16x32xf32>
    %341 = arith.addf %337, %340 : vector<16x32xf32>
    %342 = arith.addf %341, %234 : vector<16x32xf32>
    %c1_128 = arith.constant 1 : index
    %c0_129 = arith.constant 0 : index
    %c0_130 = arith.constant 0 : index
    %343 = vector.load %arg13[%c1_128, %c0_129, %c0_130] : memref<2x1x32xf32, #tpu.memory_space<vmem>>, vector<1x1x32xf32>
    %344 = vector.shape_cast %343 : vector<1x1x32xf32> to vector<1x32xf32>
    %c1_131 = arith.constant 1 : index
    %c0_132 = arith.constant 0 : index
    %c0_133 = arith.constant 0 : index
    %345 = vector.load %arg14[%c1_131, %c0_132, %c0_133] : memref<2x1x32xf32, #tpu.memory_space<vmem>>, vector<1x1x32xf32>
    %346 = vector.shape_cast %345 : vector<1x1x32xf32> to vector<1x32xf32>
    %cst_134 = arith.constant dense<0.000000e+00> : vector<16xf32>
    %347 = vector.multi_reduction <add>, %342, %cst_134 [1] : vector<16x32xf32> to vector<16xf32>
    %348 = vector.shape_cast %347 : vector<16xf32> to vector<16x1xf32>
    %cst_135 = arith.constant 3.200000e+01 : f32
    %349 = vector.broadcast %cst_135 : f32 to vector<16x1xf32>
    %350 = arith.divf %348, %349 : vector<16x1xf32>
    %351 = vector.broadcast %350 : vector<16x1xf32> to vector<16x32xf32>
    %352 = arith.subf %342, %351 : vector<16x32xf32>
    %353 = arith.mulf %352, %352 : vector<16x32xf32>
    %cst_136 = arith.constant dense<0.000000e+00> : vector<16xf32>
    %354 = vector.multi_reduction <add>, %353, %cst_136 [1] : vector<16x32xf32> to vector<16xf32>
    %355 = vector.shape_cast %354 : vector<16xf32> to vector<16x1xf32>
    %cst_137 = arith.constant 3.200000e+01 : f32
    %356 = vector.broadcast %cst_137 : f32 to vector<16x1xf32>
    %357 = arith.divf %355, %356 : vector<16x1xf32>
    %cst_138 = arith.constant 9.99999974E-6 : f32
    %358 = vector.broadcast %cst_138 : f32 to vector<16x1xf32>
    %359 = arith.addf %357, %358 : vector<16x1xf32>
    %360 = math.rsqrt %359 : vector<16x1xf32>
    %361 = vector.broadcast %360 : vector<16x1xf32> to vector<16x32xf32>
    %362 = arith.mulf %352, %361 : vector<16x32xf32>
    %363 = vector.broadcast %344 : vector<1x32xf32> to vector<16x32xf32>
    %364 = arith.mulf %362, %363 : vector<16x32xf32>
    %365 = vector.broadcast %346 : vector<1x32xf32> to vector<16x32xf32>
    %366 = arith.addf %364, %365 : vector<16x32xf32>
    %c1_139 = arith.constant 1 : index
    %c0_140 = arith.constant 0 : index
    %c0_141 = arith.constant 0 : index
    %367 = vector.load %arg15[%c1_139, %c0_140, %c0_141] : memref<2x32x64xf32, #tpu.memory_space<vmem>>, vector<1x32x64xf32>
    %368 = vector.shape_cast %367 : vector<1x32x64xf32> to vector<32x64xf32>
    %369 = arith.truncf %366 : vector<16x32xf32> to vector<16x32xbf16>
    %370 = arith.truncf %368 : vector<32x64xf32> to vector<32x64xbf16>
    %cst_142 = arith.constant dense<0.000000e+00> : vector<16x64xf32>
    %371 = tpu.matmul %369, %370, %cst_142 {dimension_numbers = #tpu.dot_dimension_numbers<[1], [0], [0], [1], [0, 0, 1, 1], [], []>} : vector<16x32xbf16>, vector<32x64xbf16>, vector<16x64xf32> -> vector<16x64xf32>
    %c1_143 = arith.constant 1 : index
    %c0_144 = arith.constant 0 : index
    %c0_145 = arith.constant 0 : index
    %372 = vector.load %arg16[%c1_143, %c0_144, %c0_145] : memref<2x1x64xf32, #tpu.memory_space<vmem>>, vector<1x1x64xf32>
    %373 = vector.shape_cast %372 : vector<1x1x64xf32> to vector<1x64xf32>
    %374 = vector.broadcast %373 : vector<1x64xf32> to vector<16x64xf32>
    %375 = arith.addf %371, %374 : vector<16x64xf32>
    %cst_146 = arith.constant 5.000000e-01 : f32
    %376 = vector.broadcast %cst_146 : f32 to vector<16x64xf32>
    %377 = arith.mulf %376, %375 : vector<16x64xf32>
    %cst_147 = arith.constant 4.471500e-02 : f32
    %378 = vector.broadcast %cst_147 : f32 to vector<16x64xf32>
    %379 = arith.mulf %378, %375 : vector<16x64xf32>
    %380 = arith.mulf %379, %375 : vector<16x64xf32>
    %381 = arith.mulf %380, %375 : vector<16x64xf32>
    %382 = arith.addf %375, %381 : vector<16x64xf32>
    %cst_148 = arith.constant 0.797884583 : f32
    %383 = vector.broadcast %cst_148 : f32 to vector<16x64xf32>
    %384 = arith.mulf %383, %382 : vector<16x64xf32>
    %385 = math.tanh %384 : vector<16x64xf32>
    %cst_149 = arith.constant 1.000000e+00 : f32
    %386 = vector.broadcast %cst_149 : f32 to vector<16x64xf32>
    %387 = arith.addf %386, %385 : vector<16x64xf32>
    %388 = arith.mulf %377, %387 : vector<16x64xf32>
    %c1_150 = arith.constant 1 : index
    %c0_151 = arith.constant 0 : index
    %c0_152 = arith.constant 0 : index
    %389 = vector.load %arg17[%c1_150, %c0_151, %c0_152] : memref<2x64x32xf32, #tpu.memory_space<vmem>>, vector<1x64x32xf32>
    %390 = vector.shape_cast %389 : vector<1x64x32xf32> to vector<64x32xf32>
    %391 = arith.truncf %388 : vector<16x64xf32> to vector<16x64xbf16>
    %392 = arith.truncf %390 : vector<64x32xf32> to vector<64x32xbf16>
    %cst_153 = arith.constant dense<0.000000e+00> : vector<16x32xf32>
    %393 = tpu.matmul %391, %392, %cst_153 {dimension_numbers = #tpu.dot_dimension_numbers<[1], [0], [0], [1], [0, 0, 1, 1], [], []>} : vector<16x64xbf16>, vector<64x32xbf16>, vector<16x32xf32> -> vector<16x32xf32>
    %c1_154 = arith.constant 1 : index
    %c0_155 = arith.constant 0 : index
    %c0_156 = arith.constant 0 : index
    %394 = vector.load %arg18[%c1_154, %c0_155, %c0_156] : memref<2x1x32xf32, #tpu.memory_space<vmem>>, vector<1x1x32xf32>
    %395 = vector.shape_cast %394 : vector<1x1x32xf32> to vector<1x32xf32>
    %396 = vector.broadcast %395 : vector<1x32xf32> to vector<16x32xf32>
    %397 = arith.addf %393, %396 : vector<16x32xf32>
    %398 = arith.addf %397, %366 : vector<16x32xf32>
    %c1_157 = arith.constant 1 : index
    %c0_158 = arith.constant 0 : index
    %c0_159 = arith.constant 0 : index
    %399 = vector.load %arg19[%c1_157, %c0_158, %c0_159] : memref<2x1x32xf32, #tpu.memory_space<vmem>>, vector<1x1x32xf32>
    %400 = vector.shape_cast %399 : vector<1x1x32xf32> to vector<1x32xf32>
    %c1_160 = arith.constant 1 : index
    %c0_161 = arith.constant 0 : index
    %c0_162 = arith.constant 0 : index
    %401 = vector.load %arg20[%c1_160, %c0_161, %c0_162] : memref<2x1x32xf32, #tpu.memory_space<vmem>>, vector<1x1x32xf32>
    %402 = vector.shape_cast %401 : vector<1x1x32xf32> to vector<1x32xf32>
    %cst_163 = arith.constant dense<0.000000e+00> : vector<16xf32>
    %403 = vector.multi_reduction <add>, %398, %cst_163 [1] : vector<16x32xf32> to vector<16xf32>
    %404 = vector.shape_cast %403 : vector<16xf32> to vector<16x1xf32>
    %cst_164 = arith.constant 3.200000e+01 : f32
    %405 = vector.broadcast %cst_164 : f32 to vector<16x1xf32>
    %406 = arith.divf %404, %405 : vector<16x1xf32>
    %407 = vector.broadcast %406 : vector<16x1xf32> to vector<16x32xf32>
    %408 = arith.subf %398, %407 : vector<16x32xf32>
    %409 = arith.mulf %408, %408 : vector<16x32xf32>
    %cst_165 = arith.constant dense<0.000000e+00> : vector<16xf32>
    %410 = vector.multi_reduction <add>, %409, %cst_165 [1] : vector<16x32xf32> to vector<16xf32>
    %411 = vector.shape_cast %410 : vector<16xf32> to vector<16x1xf32>
    %cst_166 = arith.constant 3.200000e+01 : f32
    %412 = vector.broadcast %cst_166 : f32 to vector<16x1xf32>
    %413 = arith.divf %411, %412 : vector<16x1xf32>
    %cst_167 = arith.constant 9.99999974E-6 : f32
    %414 = vector.broadcast %cst_167 : f32 to vector<16x1xf32>
    %415 = arith.addf %413, %414 : vector<16x1xf32>
    %416 = math.rsqrt %415 : vector<16x1xf32>
    %417 = vector.broadcast %416 : vector<16x1xf32> to vector<16x32xf32>
    %418 = arith.mulf %408, %417 : vector<16x32xf32>
    %419 = vector.broadcast %400 : vector<1x32xf32> to vector<16x32xf32>
    %420 = arith.mulf %418, %419 : vector<16x32xf32>
    %421 = vector.broadcast %402 : vector<1x32xf32> to vector<16x32xf32>
    %422 = arith.addf %420, %421 : vector<16x32xf32>
    %c0_168 = arith.constant 0 : index
    %c0_169 = arith.constant 0 : index
    %423 = vector.load %arg21[%c0_168, %c0_169] : memref<16x32xf32, #tpu.memory_space<vmem>>, vector<16x32xf32>
    tpu.vector_store %arg21[%c0_168, %c0_169], %422 {strides = array<i32>} : memref<16x32xf32, #tpu.memory_space<vmem>>, vector<16x32xf32>,
    return
  }
  func.func @transform_0(%arg0: i32) -> (i32, i32) {
    %c0_i32 = arith.constant 0 : i32
    %c0_i32_0 = arith.constant 0 : i32
    %c0_i32_1 = arith.constant 0 : i32
    return %c0_i32, %c0_i32_0 : i32, i32
  }
  func.func @transform_1(%arg0: i32) -> (i32, i32) {
    %c0_i32 = arith.constant 0 : i32
    %c0_i32_0 = arith.constant 0 : i32
    %c0_i32_1 = arith.constant 0 : i32
    return %c0_i32, %c0_i32_0 : i32, i32
  }
  func.func @transform_2(%arg0: i32) -> (i32, i32) {
    %c0_i32 = arith.constant 0 : i32
    %c0_i32_0 = arith.constant 0 : i32
    %c0_i32_1 = arith.constant 0 : i32
    return %c0_i32, %c0_i32_0 : i32, i32
  }
  func.func @transform_3(%arg0: i32) -> (i32, i32) {
    %c0_i32 = arith.constant 0 : i32
    %c0_i32_0 = arith.constant 0 : i32
    %c0_i32_1 = arith.constant 0 : i32
    return %c0_i32, %c0_i32_0 : i32, i32
  }
  func.func @transform_4(%arg0: i32) -> (i32, i32) {
    %c0_i32 = arith.constant 0 : i32
    %c0_i32_0 = arith.constant 0 : i32
    %c0_i32_1 = arith.constant 0 : i32
    return %c0_i32, %c0_i32_0 : i32, i32
  }
  func.func @transform_5(%arg0: i32) -> (i32, i32) {
    %c0_i32 = arith.constant 0 : i32
    %c0_i32_0 = arith.constant 0 : i32
    %c0_i32_1 = arith.constant 0 : i32
    return %c0_i32, %c0_i32_0 : i32, i32
  }
  func.func @transform_6(%arg0: i32) -> (i32, i32) {
    %c0_i32 = arith.constant 0 : i32
    %c0_i32_0 = arith.constant 0 : i32
    %c0_i32_1 = arith.constant 0 : i32
    return %c0_i32, %c0_i32_0 : i32, i32
  }
  func.func @transform_7(%arg0: i32) -> (i32, i32) {
    %c0_i32 = arith.constant 0 : i32
    %c0_i32_0 = arith.constant 0 : i32
    %c0_i32_1 = arith.constant 0 : i32
    return %c0_i32, %c0_i32_0 : i32, i32
  }
  func.func @transform_8(%arg0: i32) -> (i32, i32, i32) {
    %c0_i32 = arith.constant 0 : i32
    %c0_i32_0 = arith.constant 0 : i32
    %c0_i32_1 = arith.constant 0 : i32
    %c0_i32_2 = arith.constant 0 : i32
    return %c0_i32, %c0_i32_0, %c0_i32_1 : i32, i32, i32
  }
  func.func @transform_9(%arg0: i32) -> (i32, i32, i32) {
    %c0_i32 = arith.constant 0 : i32
    %c0_i32_0 = arith.constant 0 : i32
    %c0_i32_1 = arith.constant 0 : i32
    %c0_i32_2 = arith.constant 0 : i32
    return %c0_i32, %c0_i32_0, %c0_i32_1 : i32, i32, i32
  }
  func.func @transform_10(%arg0: i32) -> (i32, i32, i32) {
    %c0_i32 = arith.constant 0 : i32
    %c0_i32_0 = arith.constant 0 : i32
    %c0_i32_1 = arith.constant 0 : i32
    %c0_i32_2 = arith.constant 0 : i32
    return %c0_i32, %c0_i32_0, %c0_i32_1 : i32, i32, i32
  }
  func.func @transform_11(%arg0: i32) -> (i32, i32, i32) {
    %c0_i32 = arith.constant 0 : i32
    %c0_i32_0 = arith.constant 0 : i32
    %c0_i32_1 = arith.constant 0 : i32
    %c0_i32_2 = arith.constant 0 : i32
    return %c0_i32, %c0_i32_0, %c0_i32_1 : i32, i32, i32
  }
  func.func @transform_12(%arg0: i32) -> (i32, i32, i32) {
    %c0_i32 = arith.constant 0 : i32
    %c0_i32_0 = arith.constant 0 : i32
    %c0_i32_1 = arith.constant 0 : i32
    %c0_i32_2 = arith.constant 0 : i32
    return %c0_i32, %c0_i32_0, %c0_i32_1 : i32, i32, i32
  }
  func.func @transform_13(%arg0: i32) -> (i32, i32, i32) {
    %c0_i32 = arith.constant 0 : i32
    %c0_i32_0 = arith.constant 0 : i32
    %c0_i32_1 = arith.constant 0 : i32
    %c0_i32_2 = arith.constant 0 : i32
    return %c0_i32, %c0_i32_0, %c0_i32_1 : i32, i32, i32
  }
  func.func @transform_14(%arg0: i32) -> (i32, i32, i32) {
    %c0_i32 = arith.constant 0 : i32
    %c0_i32_0 = arith.constant 0 : i32
    %c0_i32_1 = arith.constant 0 : i32
    %c0_i32_2 = arith.constant 0 : i32
    return %c0_i32, %c0_i32_0, %c0_i32_1 : i32, i32, i32
  }
  func.func @transform_15(%arg0: i32) -> (i32, i32, i32) {
    %c0_i32 = arith.constant 0 : i32
    %c0_i32_0 = arith.constant 0 : i32
    %c0_i32_1 = arith.constant 0 : i32
    %c0_i32_2 = arith.constant 0 : i32
    return %c0_i32, %c0_i32_0, %c0_i32_1 : i32, i32, i32
  }
  func.func @transform_16(%arg0: i32) -> (i32, i32, i32) {
    %c0_i32 = arith.constant 0 : i32
    %c0_i32_0 = arith.constant 0 : i32
    %c0_i32_1 = arith.constant 0 : i32
    %c0_i32_2 = arith.constant 0 : i32
    return %c0_i32, %c0_i32_0, %c0_i32_1 : i32, i32, i32
  }
  func.func @transform_17(%arg0: i32) -> (i32, i32, i32) {
    %c0_i32 = arith.constant 0 : i32
    %c0_i32_0 = arith.constant 0 : i32
    %c0_i32_1 = arith.constant 0 : i32
    %c0_i32_2 = arith.constant 0 : i32
    return %c0_i32, %c0_i32_0, %c0_i32_1 : i32, i32, i32
  }
  func.func @transform_18(%arg0: i32) -> (i32, i32, i32) {
    %c0_i32 = arith.constant 0 : i32
    %c0_i32_0 = arith.constant 0 : i32
    %c0_i32_1 = arith.constant 0 : i32
    %c0_i32_2 = arith.constant 0 : i32
    return %c0_i32, %c0_i32_0, %c0_i32_1 : i32, i32, i32
  }
  func.func @transform_19(%arg0: i32) -> (i32, i32, i32) {
    %c0_i32 = arith.constant 0 : i32
    %c0_i32_0 = arith.constant 0 : i32
    %c0_i32_1 = arith.constant 0 : i32
    %c0_i32_2 = arith.constant 0 : i32
    return %c0_i32, %c0_i32_0, %c0_i32_1 : i32, i32, i32
  }
  func.func @transform_20(%arg0: i32) -> (i32, i32) {
    %c0_i32 = arith.constant 0 : i32
    %c0_i32_0 = arith.constant 0 : i32
    %c0_i32_1 = arith.constant 0 : i32
    return %c0_i32, %c0_i32_0 : i32, i32
  }
}

</mosaic_0001>

<llo_original>
// kernel: eq.8
$region0: #{eq.8}
  %s0 = inlined_call_operand.vmem [shape: s32[2,8], index: 0, kind: input, shape index: {}]
  %s1 = inlined_call_operand.vmem [shape: s32[16], index: 1, kind: output, shape index: {}]
  $region1: #{eq.8} parent=0
    #allocation0 [shape = 'u8[4096]{0}', space=vmem, size = 0x1000, scoped, tag = 'scoped mem for output reshape']
    #allocation1 [shape = 'u8[4096]{0}', space=vmem, size = 0x1000, scoped, tag = 'scoped mem for input reshape']
    %s3 = sshll.u32 1, 2
    %s4 = ssub.s32 %s3, 1
    %v5 = vld [vmem:[%s0] sm:%s4]
    %6 = vst [vmem:[#allocation1] sm:%s4] %v5
    %v7 = vld [vmem:[#allocation1] sm:$0x1]
    %vm8 = vcmask 64512
    %9 = vst.msk [vmem:[#allocation0] sm:$0x1] %vm8, %v7
    %s10 = scalar_lea.vmem [#allocation1], 1
    %v11 = vld [vmem:[%s10] sm:$0x1]
    %12 = vrot.lane.b32.xlu0 %v11, 8
    %v13 = vpop.permute.xlu0 %12
    %vm14 = vcmask 130112
    %15 = vst.msk [vmem:[#allocation0] sm:$0x1] %vm14, %v13
    %s17 = sshll.u32 1, 1
    %s18 = ssub.s32 %s17, 1
    %v20 = vld [vmem:[#allocation0] sm:%s18]
    %s21 = sshll.u32 1, 1
    %s22 = ssub.s32 %s21, 1
    %23 = vst [vmem:[%s1] sm:%s22] %v20

// kernel: xlmroberta_word_embedder.1
$region0: #{xlmroberta_word_embedder.1}
  #allocation0 [shape = 'u32[]', space=smem, size = 0x4, offset = 0x4, fixed_abs, tag = 'smem constant byte address 0x4 - core index']
  #allocation1 [shape = 'u32[144,128]{1,0:T(1,128)}', space=vmem, size = 0x12000, scoped, tag = 'internal scratch']
  %s0 = inlined_call_operand.vmem [shape: s32[16,1], index: 0, kind: input, shape index: {}]
  %s1 = inlined_call_operand.vmem [shape: s32[16,1], index: 1, kind: input, shape index: {}]
  %s2 = inlined_call_operand.vmem [shape: f32[16,16], index: 2, kind: input, shape index: {}]
  %s3 = inlined_call_operand.vmem [shape: f32[50,32], index: 3, kind: input, shape index: {}]
  %s4 = inlined_call_operand.vmem [shape: f32[10,32], index: 4, kind: input, shape index: {}]
  %s5 = inlined_call_operand.vmem [shape: f32[1,32], index: 5, kind: input, shape index: {}]
  %s6 = inlined_call_operand.vmem [shape: f32[1,32], index: 6, kind: input, shape index: {}]
  %s7 = inlined_call_operand.vmem [shape: f32[1,32], index: 7, kind: input, shape index: {}]
  %s8 = inlined_call_operand.vmem [shape: f32[2,32,96], index: 8, kind: input, shape index: {}]
  %s9 = inlined_call_operand.vmem [shape: f32[2,1,96], index: 9, kind: input, shape index: {}]
  %s10 = inlined_call_operand.vmem [shape: f32[2,32,32], index: 10, kind: input, shape index: {}]
  %s11 = inlined_call_operand.vmem [shape: f32[2,1,32], index: 11, kind: input, shape index: {}]
  %s12 = inlined_call_operand.vmem [shape: f32[2,1,32], index: 12, kind: input, shape index: {}]
  %s13 = inlined_call_operand.vmem [shape: f32[2,1,32], index: 13, kind: input, shape index: {}]
  %s14 = inlined_call_operand.vmem [shape: f32[2,32,64], index: 14, kind: input, shape index: {}]
  %s15 = inlined_call_operand.vmem [shape: f32[2,1,64], index: 15, kind: input, shape index: {}]
  %s16 = inlined_call_operand.vmem [shape: f32[2,64,32], index: 16, kind: input, shape index: {}]
  %s17 = inlined_call_operand.vmem [shape: f32[2,1,32], index: 17, kind: input, shape index: {}]
  %s18 = inlined_call_operand.vmem [shape: f32[2,1,32], index: 18, kind: input, shape index: {}]
  %s19 = inlined_call_operand.vmem [shape: f32[2,1,32], index: 19, kind: input, shape index: {}]
  %s20 = inlined_call_operand.hbm [shape: f32[16,32], index: 20, kind: output, shape index: {}]
  %s21 = sld [smem:[#allocation0]]
  $region90: #{xlmroberta_word_embedder.1} parent=0
    _
  %s23 = ssub.s32 1, %s21
  %s24 = scalar_select 0, %s23, %s21
  $region1: #{xlmroberta_word_embedder.1} parent=0
    #allocation2 [shape = 'u8[8192]{0}', space=vmem, size = 0x2000, scoped, tag = 'output window, operand 0, single buffered']
    #allocation3 [shape = 's32[1]{0}', space=sflag, size = 0x4, scoped, tag = 'scoped memory for xlmroberta_word_embedder.1']
    %25 = vsyncpa [#allocation3], 0
    // Predicated region
    $region2: #{xlmroberta_word_embedder.1} parent=1 // pred_check
      _
    $region3: #{xlmroberta_word_embedder.1} parent=1 // pred_check_branch
      %27 = sbr.rel (0) target = $region5
    $region4: #{xlmroberta_word_embedder.1} parent=1 // pred_region
      _
    $region5: #{xlmroberta_word_embedder.1} parent=1 // pred_fallthru
      _
    // Predicated region
    $region6: #{xlmroberta_word_embedder.1} parent=1 // pred_check
      _
    $region7: #{xlmroberta_word_embedder.1} parent=1 // pred_check_branch
      %29 = sbr.rel (0) target = $region9
    $region8: #{xlmroberta_word_embedder.1} parent=1 // pred_region
      _
    $region9: #{xlmroberta_word_embedder.1} parent=1 // pred_fallthru
      _
    // Predicated region
    $region10: #{xlmroberta_word_embedder.1} parent=1 // pred_check
      _
    $region11: #{xlmroberta_word_embedder.1} parent=1 // pred_check_branch
      %31 = sbr.rel (0) target = $region13
    $region12: #{xlmroberta_word_embedder.1} parent=1 // pred_region
      _
    $region13: #{xlmroberta_word_embedder.1} parent=1 // pred_fallthru
      _
    // Predicated region
    $region14: #{xlmroberta_word_embedder.1} parent=1 // pred_check
      _
    $region15: #{xlmroberta_word_embedder.1} parent=1 // pred_check_branch
      %33 = sbr.rel (0) target = $region17
    $region16: #{xlmroberta_word_embedder.1} parent=1 // pred_region
      _
    $region17: #{xlmroberta_word_embedder.1} parent=1 // pred_fallthru
      _
    // Predicated region
    $region18: #{xlmroberta_word_embedder.1} parent=1 // pred_check
      _
    $region19: #{xlmroberta_word_embedder.1} parent=1 // pred_check_branch
      %35 = sbr.rel (0) target = $region21
    $region20: #{xlmroberta_word_embedder.1} parent=1 // pred_region
      _
    $region21: #{xlmroberta_word_embedder.1} parent=1 // pred_fallthru
      _
    // Predicated region
    $region22: #{xlmroberta_word_embedder.1} parent=1 // pred_check
      _
    $region23: #{xlmroberta_word_embedder.1} parent=1 // pred_check_branch
      %37 = sbr.rel (0) target = $region25
    $region24: #{xlmroberta_word_embedder.1} parent=1 // pred_region
      _
    $region25: #{xlmroberta_word_embedder.1} parent=1 // pred_fallthru
      _
    // Predicated region
    $region26: #{xlmroberta_word_embedder.1} parent=1 // pred_check
      _
    $region27: #{xlmroberta_word_embedder.1} parent=1 // pred_check_branch
      %39 = sbr.rel (0) target = $region29
    $region28: #{xlmroberta_word_embedder.1} parent=1 // pred_region
      _
    $region29: #{xlmroberta_word_embedder.1} parent=1 // pred_fallthru
      _
    // Predicated region
    $region30: #{xlmroberta_word_embedder.1} parent=1 // pred_check
      _
    $region31: #{xlmroberta_word_embedder.1} parent=1 // pred_check_branch
      %41 = sbr.rel (0) target = $region33
    $region32: #{xlmroberta_word_embedder.1} parent=1 // pred_region
      _
    $region33: #{xlmroberta_word_embedder.1} parent=1 // pred_fallthru
      _
    // Predicated region
    $region34: #{xlmroberta_word_embedder.1} parent=1 // pred_check
      _
    $region35: #{xlmroberta_word_embedder.1} parent=1 // pred_check_branch
      %43 = sbr.rel (0) target = $region37
    $region36: #{xlmroberta_word_embedder.1} parent=1 // pred_region
      _
    $region37: #{xlmroberta_word_embedder.1} parent=1 // pred_fallthru
      _
    // Predicated region
    $region38: #{xlmroberta_word_embedder.1} parent=1 // pred_check
      _
    $region39: #{xlmroberta_word_embedder.1} parent=1 // pred_check_branch
      %45 = sbr.rel (0) target = $region41
    $region40: #{xlmroberta_word_embedder.1} parent=1 // pred_region
      _
    $region41: #{xlmroberta_word_embedder.1} parent=1 // pred_fallthru
      _
    // Predicated region
    $region42: #{xlmroberta_word_embedder.1} parent=1 // pred_check
      _
    $region43: #{xlmroberta_word_embedder.1} parent=1 // pred_check_branch
      %47 = sbr.rel (0) target = $region45
    $region44: #{xlmroberta_word_embedder.1} parent=1 // pred_region
      _
    $region45: #{xlmroberta_word_embedder.1} parent=1 // pred_fallthru
      _
    // Predicated region
    $region46: #{xlmroberta_word_embedder.1} parent=1 // pred_check
      _
    $region47: #{xlmroberta_word_embedder.1} parent=1 // pred_check_branch
      %49 = sbr.rel (0) target = $region49
    $region48: #{xlmroberta_word_embedder.1} parent=1 // pred_region
      _
    $region49: #{xlmroberta_word_embedder.1} parent=1 // pred_fallthru
      _
    // Predicated region
    $region50: #{xlmroberta_word_embedder.1} parent=1 // pred_check
      _
    $region51: #{xlmroberta_word_embedder.1} parent=1 // pred_check_branch
      %51 = sbr.rel (0) target = $region53
    $region52: #{xlmroberta_word_embedder.1} parent=1 // pred_region
      _
    $region53: #{xlmroberta_word_embedder.1} parent=1 // pred_fallthru
      _
    // Predicated region
    $region54: #{xlmroberta_word_embedder.1} parent=1 // pred_check
      _
    $region55: #{xlmroberta_word_embedder.1} parent=1 // pred_check_branch
      %53 = sbr.rel (0) target = $region57
    $region56: #{xlmroberta_word_embedder.1} parent=1 // pred_region
      _
    $region57: #{xlmroberta_word_embedder.1} parent=1 // pred_fallthru
      _
    // Predicated region
    $region58: #{xlmroberta_word_embedder.1} parent=1 // pred_check
      _
    $region59: #{xlmroberta_word_embedder.1} parent=1 // pred_check_branch
      %55 = sbr.rel (0) target = $region61
    $region60: #{xlmroberta_word_embedder.1} parent=1 // pred_region
      _
    $region61: #{xlmroberta_word_embedder.1} parent=1 // pred_fallthru
      _
    // Predicated region
    $region62: #{xlmroberta_word_embedder.1} parent=1 // pred_check
      _
    $region63: #{xlmroberta_word_embedder.1} parent=1 // pred_check_branch
      %57 = sbr.rel (0) target = $region65
    $region64: #{xlmroberta_word_embedder.1} parent=1 // pred_region
      _
    $region65: #{xlmroberta_word_embedder.1} parent=1 // pred_fallthru
      _
    // Predicated region
    $region66: #{xlmroberta_word_embedder.1} parent=1 // pred_check
      _
    $region67: #{xlmroberta_word_embedder.1} parent=1 // pred_check_branch
      %59 = sbr.rel (0) target = $region69
    $region68: #{xlmroberta_word_embedder.1} parent=1 // pred_region
      _
    $region69: #{xlmroberta_word_embedder.1} parent=1 // pred_fallthru
      _
    // Predicated region
    $region70: #{xlmroberta_word_embedder.1} parent=1 // pred_check
      _
    $region71: #{xlmroberta_word_embedder.1} parent=1 // pred_check_branch
      %61 = sbr.rel (0) target = $region73
    $region72: #{xlmroberta_word_embedder.1} parent=1 // pred_region
      _
    $region73: #{xlmroberta_word_embedder.1} parent=1 // pred_fallthru
      _
    // Predicated region
    $region74: #{xlmroberta_word_embedder.1} parent=1 // pred_check
      _
    $region75: #{xlmroberta_word_embedder.1} parent=1 // pred_check_branch
      %63 = sbr.rel (0) target = $region77
    $region76: #{xlmroberta_word_embedder.1} parent=1 // pred_region
      _
    $region77: #{xlmroberta_word_embedder.1} parent=1 // pred_fallthru
      _
    // Predicated region
    $region78: #{xlmroberta_word_embedder.1} parent=1 // pred_check
      _
    $region79: #{xlmroberta_word_embedder.1} parent=1 // pred_check_branch
      %65 = sbr.rel (0) target = $region81
    $region80: #{xlmroberta_word_embedder.1} parent=1 // pred_region
      _
    $region81: #{xlmroberta_word_embedder.1} parent=1 // pred_fallthru
      _
    %v67 = vld [vmem:[%s0] sm:$0xff]
    %v68 = vld [vmem:[%s0 + $0x8] sm:$0xff]
    %v69 = vld [vmem:[%s1] sm:$0xff]
    %v70 = vld [vmem:[%s1 + $0x8] sm:$0xff]
    %v71 = vld [vmem:[%s2] sm:$0xff]
    %v72 = vld [vmem:[%s2 + $0x8] sm:$0xff]
    %v73 = vlaneseq
    %v74 = vand.u32 %v73, 127
    %75 = vset.pattern.permute.xlu0 0
    %76 = vperm.xlu0 %75, %v67
    %v77 = vpop.permute.xlu0 %76
    %78 = vset.pattern.permute.xlu0 0
    %79 = vperm.xlu0 %78, %v68
    %v80 = vpop.permute.xlu0 %79
    %vm81 = vcmp.eq.s32.totalorder %v77, %v74
    %vm82 = vcmp.eq.s32.totalorder %v80, %v74
    %v83 = vld [vmem:[%s3] sm:$0xff]
    %v84 = vld [vmem:[%s3 + $0x8] sm:$0xff]
    %v85 = vld [vmem:[%s3 + $0x10] sm:$0xff]
    %v86 = vld [vmem:[%s3 + $0x18] sm:$0xff]
    %v87 = vld [vmem:[%s3 + $0x20] sm:$0xff]
    %v88 = vld [vmem:[%s3 + $0x28] sm:$0xff]
    %v89 = vld [vmem:[%s3 + $0x30] sm:$0x3]
    %v90 = vsel %vm81, 1, 0
    %v91 = vsel %vm82, 1, 0
    %v92 = vcvt.s32.f32 %v90
    %v93 = vcvt.s32.f32 %v91
    %v94 = vpack.c.bf16 %v93, %v92
    %v95 = vpack.c.bf16 %v84, %v83
    %v96 = vpack.c.bf16 %v86, %v85
    %v97 = vpack.c.bf16 %v88, %v87
    %v98 = vpack.c.bf16 %v89, %v89
    %99 = vset.pattern.permute.xlu0 0
    %100 = vperm.xlu0 %99, %v69
    %v101 = vpop.permute.xlu0 %100
    %102 = vset.pattern.permute.xlu0 0
    %103 = vperm.xlu0 %102, %v70
    %v104 = vpop.permute.xlu0 %103
    %vm105 = vcmp.eq.s32.totalorder %v101, %v74
    %vm106 = vcmp.eq.s32.totalorder %v104, %v74
    %v107 = vld [vmem:[%s4] sm:$0xff]
    %v108 = vld [vmem:[%s4 + $0x8] sm:$0x3]
    %v109 = vsel %vm105, 1, 0
    %v110 = vsel %vm106, 1, 0
    %v111 = vcvt.s32.f32 %v109
    %v112 = vcvt.s32.f32 %v110
    %v113 = vpack.c.bf16 %v112, %v111
    %v114 = vpack.c.bf16 %v108, %v107
    %vm115 = vcmask 80896
    %v117 = vsel %vm115, %v113, 0
    %vm119 = vcmask 1044480
    %v121 = vsel %vm119, %v114, 0
    %123 = vmatprep.subr.bf16.mxu0 0
    %124 = vmatpush1.bf16.msra.mxu0 0
    %125 = vmatprep.subr.bf16.mxu0 0
    %126 = vmatpush1.bf16.msra.mxu0 0
    %127 = vmatprep.subr.bf16.mxu0 0
    %128 = vmatpush1.bf16.msra.mxu0 0
    %129 = vmatprep.subr.bf16.mxu0 0
    %130 = vmatpush1.bf16.msra.mxu0 0
    %131 = vmatprep.subr.bf16.mxu0 0
    %132 = vmatpush1.bf16.msra.mxu0 0
    %133 = vmatprep.subr.bf16.mxu0 0
    %134 = vmatpush1.bf16.msra.mxu0 0
    %135 = vmatprep.subr.bf16.mxu0 0
    %136 = vmatpush1.bf16.msra.mxu0 0
    %137 = vmatprep.subr.bf16.mxu0 0
    %138 = vmatpush1.bf16.msra.mxu0 %v121
    %139 = vmatprep.subr.bf16.mxu0 0
    %140 = vmatpush2.bf16.msra.mxu0 0
    %141 = vmatprep.subr.bf16.mxu0 0
    %142 = vmatpush2.bf16.msra.mxu0 0
    %143 = vmatprep.subr.bf16.mxu0 0
    %144 = vmatpush2.bf16.msra.mxu0 0
    %145 = vmatprep.subr.bf16.mxu0 0
    %146 = vmatpush2.bf16.msra.mxu0 0
    %147 = vmatprep.subr.bf16.mxu0 0
    %148 = vmatpush2.bf16.msra.mxu0 0
    %149 = vmatprep.subr.bf16.mxu0 0
    %150 = vmatpush2.bf16.msra.mxu0 0
    %151 = vmatprep.subr.bf16.mxu0 0
    %152 = vmatpush2.bf16.msra.mxu0 0
    %153 = vmatprep.subr.bf16.mxu0 0
    %154 = vmatpush2.bf16.msra.mxu0 0
    %155 = vmatprep.mubr.bf16.mxu0 0
    %156 = vmatmul.mubr.bf16.gmra.mxu0 %v117
    %v157 = vpop.f32.mrf.mxu0
    %v158 = vadd.f32 0.0, %v157
    %v159 = vpop.f32.mrf.mxu0
    %v160 = vpop.f32.mrf.mxu0
    %v161 = vadd.f32 0.0, %v160
    %v162 = vpop.f32.mrf.mxu0
    %163 = vdwg.mxu0
    %vm164 = vcmask 408576
    %v166 = vsel %vm164, %v94, 0
    %vm168 = vcmask 1040384
    %v170 = vsel %vm168, %v98, 0
    %172 = vmatprep.subr.bf16.mxu0 0
    %173 = vmatpush1.bf16.msra.mxu0 0
    %174 = vmatprep.subr.bf16.mxu0 0
    %175 = vmatpush1.bf16.msra.mxu0 0
    %176 = vmatprep.subr.bf16.mxu0 0
    %177 = vmatpush1.bf16.msra.mxu0 0
    %178 = vmatprep.subr.bf16.mxu0 0
    %179 = vmatpush1.bf16.msra.mxu0 0
    %180 = vmatprep.subr.bf16.mxu0 0
    %181 = vmatpush1.bf16.msra.mxu0 %v170
    %182 = vmatprep.subr.bf16.mxu0 0
    %183 = vmatpush1.bf16.msra.mxu0 %v97
    %184 = vmatprep.subr.bf16.mxu0 0
    %185 = vmatpush1.bf16.msra.mxu0 %v96
    %186 = vmatprep.subr.bf16.mxu0 0
    %187 = vmatpush1.bf16.msra.mxu0 %v95
    %188 = vmatprep.subr.bf16.mxu0 0
    %189 = vmatpush2.bf16.msra.mxu0 0
    %190 = vmatprep.subr.bf16.mxu0 0
    %191 = vmatpush2.bf16.msra.mxu0 0
    %192 = vmatprep.subr.bf16.mxu0 0
    %193 = vmatpush2.bf16.msra.mxu0 0
    %194 = vmatprep.subr.bf16.mxu0 0
    %195 = vmatpush2.bf16.msra.mxu0 0
    %196 = vmatprep.subr.bf16.mxu0 0
    %197 = vmatpush2.bf16.msra.mxu0 0
    %198 = vmatprep.subr.bf16.mxu0 0
    %199 = vmatpush2.bf16.msra.mxu0 0
    %200 = vmatprep.subr.bf16.mxu0 0
    %201 = vmatpush2.bf16.msra.mxu0 0
    %202 = vmatprep.subr.bf16.mxu0 0
    %203 = vmatpush2.bf16.msra.mxu0 0
    %204 = vmatprep.mubr.bf16.mxu0 0
    %205 = vmatmul.mubr.bf16.gmra.mxu0 %v166
    %v206 = vpop.f32.mrf.mxu0
    %v207 = vadd.f32 %v158, %v206
    %v208 = vpop.f32.mrf.mxu0
    %v209 = vpop.f32.mrf.mxu0
    %v210 = vadd.f32 %v161, %v209
    %v211 = vpop.f32.mrf.mxu0
    %212 = vdwg.mxu0
    %v213 = vld [vmem:[%s5] sm:$0x1]
    %v215 = vlaneseq
    %v216 = vshrl.u32 %v215, 7
    %v217 = vsub.s32 0, %v216
    %v218 = vrot.slane %v213, %v217
    %v220 = vadd.f32 %v207, %v218
    %v221 = vadd.f32 %v210, %v218
    %v222 = vld [vmem:[%s6] sm:$0x1]
    %v223 = vld [vmem:[%s7] sm:$0x1]
    %vm224 = vcmask 261120
    %v225 = vsel %vm224, %v220, 0.0
    %226 = vadd.xlane.f32.xlu0 %v225
    %v227 = vpop.xlane.xlu0 %226
    %v228 = vsel %vm224, %v221, 0.0
    %229 = vadd.xlane.f32.xlu0 %v228
    %v230 = vpop.xlane.xlu0 %229
    %v231 = vrcp.pop 32.0
    %v232 = vmul.f32 %v227, %v231
    %v233 = vmul.f32 %v230, %v231
    %v234 = vsub.f32 %v220, %v232
    %v235 = vsub.f32 %v221, %v233
    %v236 = vmul.f32 %v234, %v234
    %v237 = vmul.f32 %v235, %v235
    %v238 = vsel %vm224, %v236, 0.0
    %239 = vadd.xlane.f32.xlu0 %v238
    %v240 = vpop.xlane.xlu0 %239
    %v241 = vsel %vm224, %v237, 0.0
    %242 = vadd.xlane.f32.xlu0 %v241
    %v243 = vpop.xlane.xlu0 %242
    %v244 = vmul.f32 %v240, %v231
    %v245 = vmul.f32 %v243, %v231
    %v246 = vadd.f32 %v244, 1e-05
    %v247 = vadd.f32 %v245, 1e-05
    %v248 = vrsqrt.pop %v246
    %v249 = vrsqrt.pop %v247
    %v250 = vmul.f32 %v234, %v248
    %v251 = vmul.f32 %v235, %v249
    %v253 = vlaneseq
    %v254 = vshrl.u32 %v253, 7
    %v255 = vsub.s32 0, %v254
    %v256 = vrot.slane %v222, %v255
    %v258 = vmul.f32 %v250, %v256
    %v259 = vmul.f32 %v251, %v256
    %v261 = vlaneseq
    %v262 = vshrl.u32 %v261, 7
    %v263 = vsub.s32 0, %v262
    %v264 = vrot.slane %v223, %v263
    %v266 = vadd.f32 %v258, %v264
    %v267 = vadd.f32 %v259, %v264
    %v268 = vld [vmem:[%s8] sm:$0xff]
    %v269 = vld [vmem:[%s8 + $0x8] sm:$0xff]
    %v270 = vld [vmem:[%s8 + $0x10] sm:$0xff]
    %v271 = vld [vmem:[%s8 + $0x18] sm:$0xff]
    %v272 = vpack.c.bf16 %v267, %v266
    %v273 = vpack.c.bf16 %v269, %v268
    %v274 = vpack.c.bf16 %v271, %v270
    %v275 = vld [vmem:[%s9] sm:$0x1]
    %v277 = vlaneseq
    %v278 = vshrl.u32 %v277, 7
    %v279 = vsub.s32 0, %v278
    %v280 = vrot.slane %v275, %v279
    %v283 = vsel %vm224, %v272, 0
    %285 = vmatprep.subr.bf16.mxu0 0
    %286 = vmatpush1.bf16.msra.mxu0 0
    %287 = vmatprep.subr.bf16.mxu0 0
    %288 = vmatpush1.bf16.msra.mxu0 0
    %289 = vmatprep.subr.bf16.mxu0 0
    %290 = vmatpush1.bf16.msra.mxu0 0
    %291 = vmatprep.subr.bf16.mxu0 0
    %292 = vmatpush1.bf16.msra.mxu0 0
    %293 = vmatprep.subr.bf16.mxu0 0
    %294 = vmatpush1.bf16.msra.mxu0 0
    %295 = vmatprep.subr.bf16.mxu0 0
    %296 = vmatpush1.bf16.msra.mxu0 0
    %297 = vmatprep.subr.bf16.mxu0 0
    %298 = vmatpush1.bf16.msra.mxu0 %v274
    %299 = vmatprep.subr.bf16.mxu0 0
    %300 = vmatpush1.bf16.msra.mxu0 %v273
    %301 = vmatprep.subr.bf16.mxu0 0
    %302 = vmatpush2.bf16.msra.mxu0 0
    %303 = vmatprep.subr.bf16.mxu0 0
    %304 = vmatpush2.bf16.msra.mxu0 0
    %305 = vmatprep.subr.bf16.mxu0 0
    %306 = vmatpush2.bf16.msra.mxu0 0
    %307 = vmatprep.subr.bf16.mxu0 0
    %308 = vmatpush2.bf16.msra.mxu0 0
    %309 = vmatprep.subr.bf16.mxu0 0
    %310 = vmatpush2.bf16.msra.mxu0 0
    %311 = vmatprep.subr.bf16.mxu0 0
    %312 = vmatpush2.bf16.msra.mxu0 0
    %313 = vmatprep.subr.bf16.mxu0 0
    %314 = vmatpush2.bf16.msra.mxu0 0
    %315 = vmatprep.subr.bf16.mxu0 0
    %316 = vmatpush2.bf16.msra.mxu0 0
    %317 = vmatprep.mubr.bf16.mxu0 0
    %318 = vmatmul.mubr.bf16.gmra.mxu0 %v283
    %v319 = vpop.f32.mrf.mxu0
    %v320 = vadd.f32 %v280, %v319
    %v321 = vpop.f32.mrf.mxu0
    %v322 = vpop.f32.mrf.mxu0
    %v323 = vadd.f32 %v280, %v322
    %v324 = vpop.f32.mrf.mxu0
    %325 = vdwg.mxu0
    %v326 = vpack.c.bf16 %v323, %v320
    %328 = vrot.lane.b32.xlu0 %v326, 96
    %v329 = vpop.permute.xlu0 %328
    %vm330 = vcmask 64512
    %v332 = vsel %vm330, %v326, 0
    %v335 = vsel %vm330, %v329, 0
    %337 = vmatprep.subr.bf16.mxu0 0
    %338 = vmatpush1.bf16.xpose.msra.mxu0 0
    %339 = vmatprep.subr.bf16.mxu0 0
    %340 = vmatpush1.bf16.xpose.msra.mxu0 0
    %341 = vmatprep.subr.bf16.mxu0 0
    %342 = vmatpush1.bf16.xpose.msra.mxu0 0
    %343 = vmatprep.subr.bf16.mxu0 0
    %344 = vmatpush1.bf16.xpose.msra.mxu0 0
    %345 = vmatprep.subr.bf16.mxu0 0
    %346 = vmatpush1.bf16.xpose.msra.mxu0 0
    %347 = vmatprep.subr.bf16.mxu0 0
    %348 = vmatpush1.bf16.xpose.msra.mxu0 0
    %349 = vmatprep.subr.bf16.mxu0 0
    %350 = vmatpush1.bf16.xpose.msra.mxu0 0
    %351 = vmatprep.subr.bf16.mxu0 0
    %352 = vmatpush1.bf16.xpose.msra.mxu0 %v335
    %353 = vmatprep.subr.bf16.mxu0 0
    %354 = vmatpush2.bf16.xpose.msra.mxu0 0
    %355 = vmatprep.subr.bf16.mxu0 0
    %356 = vmatpush2.bf16.xpose.msra.mxu0 0
    %357 = vmatprep.subr.bf16.mxu0 0
    %358 = vmatpush2.bf16.xpose.msra.mxu0 0
    %359 = vmatprep.subr.bf16.mxu0 0
    %360 = vmatpush2.bf16.xpose.msra.mxu0 0
    %361 = vmatprep.subr.bf16.mxu0 0
    %362 = vmatpush2.bf16.xpose.msra.mxu0 0
    %363 = vmatprep.subr.bf16.mxu0 0
    %364 = vmatpush2.bf16.xpose.msra.mxu0 0
    %365 = vmatprep.subr.bf16.mxu0 0
    %366 = vmatpush2.bf16.xpose.msra.mxu0 0
    %367 = vmatprep.subr.bf16.mxu0 0
    %368 = vmatpush2.bf16.xpose.msra.mxu0 0
    %369 = vmatprep.mubr.bf16.mxu0 0
    %370 = vmatmul.mubr.bf16.gmra.mxu0 %v332
    %v371 = vpop.f32.mrf.mxu0
    %v372 = vadd.f32 0.0, %v371
    %v373 = vpop.f32.mrf.mxu0
    %v374 = vpop.f32.mrf.mxu0
    %v375 = vadd.f32 0.0, %v374
    %v376 = vpop.f32.mrf.mxu0
    %377 = vdwg.mxu0
    %v378 = vmul.f32 %v372, 0.35355338
    %v379 = vmul.f32 %v375, 0.35355338
    %v380 = vadd.f32 %v378, %v71
    %v381 = vadd.f32 %v379, %v72
    %vm382 = vcmask 130048
    %v383 = vsel %vm382, %v380, -inf
    %384 = vmax.xlane.f32.xlu0 %v383
    %v385 = vpop.xlane.xlu0 %384
    %v386 = vsel %vm382, %v381, -inf
    %387 = vmax.xlane.f32.xlu0 %v386
    %v388 = vpop.xlane.xlu0 %387
    %v389 = vsub.f32 %v380, %v385
    %v390 = vsub.f32 %v381, %v388
    %v391 = vmul.f32 %v389, 1.442695
    %v392 = vpow.pop %v391
    %v393 = vmul.f32 %v390, 1.442695
    %v394 = vpow.pop %v393
    %v395 = vsel %vm382, %v392, 0.0
    %396 = vadd.xlane.f32.xlu0 %v395
    %v397 = vpop.xlane.xlu0 %396
    %v398 = vsel %vm382, %v394, 0.0
    %399 = vadd.xlane.f32.xlu0 %v398
    %v400 = vpop.xlane.xlu0 %399
    %v401 = vrcp.pop %v397
    %v402 = vrcp.pop %v400
    %v403 = vmul.f32 %v392, %v401
    %v404 = vmul.f32 %v394, %v402
    %v405 = vpack.c.bf16 %v404, %v403
    %406 = vrot.lane.b32.xlu0 %v326, 64
    %v407 = vpop.permute.xlu0 %406
    %v410 = vsel %vm382, %v405, 0
    %412 = vmatprep.subr.bf16.mxu0 0
    %413 = vmatpush1.bf16.msra.mxu0 0
    %414 = vmatprep.subr.bf16.mxu0 0
    %415 = vmatpush1.bf16.msra.mxu0 0
    %416 = vmatprep.subr.bf16.mxu0 0
    %417 = vmatpush1.bf16.msra.mxu0 0
    %418 = vmatprep.subr.bf16.mxu0 0
    %419 = vmatpush1.bf16.msra.mxu0 0
    %420 = vmatprep.subr.bf16.mxu0 0
    %421 = vmatpush1.bf16.msra.mxu0 0
    %422 = vmatprep.subr.bf16.mxu0 0
    %423 = vmatpush1.bf16.msra.mxu0 0
    %424 = vmatprep.subr.bf16.mxu0 0
    %425 = vmatpush1.bf16.msra.mxu0 0
    %426 = vmatprep.subr.bf16.mxu0 0
    %427 = vmatpush1.bf16.msra.mxu0 %v407
    %428 = vmatprep.subr.bf16.mxu0 0
    %429 = vmatpush2.bf16.msra.mxu0 0
    %430 = vmatprep.subr.bf16.mxu0 0
    %431 = vmatpush2.bf16.msra.mxu0 0
    %432 = vmatprep.subr.bf16.mxu0 0
    %433 = vmatpush2.bf16.msra.mxu0 0
    %434 = vmatprep.subr.bf16.mxu0 0
    %435 = vmatpush2.bf16.msra.mxu0 0
    %436 = vmatprep.subr.bf16.mxu0 0
    %437 = vmatpush2.bf16.msra.mxu0 0
    %438 = vmatprep.subr.bf16.mxu0 0
    %439 = vmatpush2.bf16.msra.mxu0 0
    %440 = vmatprep.subr.bf16.mxu0 0
    %441 = vmatpush2.bf16.msra.mxu0 0
    %442 = vmatprep.subr.bf16.mxu0 0
    %443 = vmatpush2.bf16.msra.mxu0 0
    %444 = vmatprep.mubr.bf16.mxu0 0
    %445 = vmatmul.mubr.bf16.gmra.mxu0 %v410
    %v446 = vpop.f32.mrf.mxu0
    %v447 = vadd.f32 0.0, %v446
    %v448 = vpop.f32.mrf.mxu0
    %v449 = vpop.f32.mrf.mxu0
    %v450 = vadd.f32 0.0, %v449
    %v451 = vpop.f32.mrf.mxu0
    %452 = vdwg.mxu0
    %453 = vrot.lane.b32.xlu0 %v326, 120
    %v454 = vpop.permute.xlu0 %453
    %455 = vrot.lane.b32.xlu0 %v326, 88
    %v456 = vpop.permute.xlu0 %455
    %v458 = vsel %vm330, %v454, 0
    %v461 = vsel %vm330, %v456, 0
    %463 = vmatprep.subr.bf16.mxu0 0
    %464 = vmatpush1.bf16.xpose.msra.mxu0 0
    %465 = vmatprep.subr.bf16.mxu0 0
    %466 = vmatpush1.bf16.xpose.msra.mxu0 0
    %467 = vmatprep.subr.bf16.mxu0 0
    %468 = vmatpush1.bf16.xpose.msra.mxu0 0
    %469 = vmatprep.subr.bf16.mxu0 0
    %470 = vmatpush1.bf16.xpose.msra.mxu0 0
    %471 = vmatprep.subr.bf16.mxu0 0
    %472 = vmatpush1.bf16.xpose.msra.mxu0 0
    %473 = vmatprep.subr.bf16.mxu0 0
    %474 = vmatpush1.bf16.xpose.msra.mxu0 0
    %475 = vmatprep.subr.bf16.mxu0 0
    %476 = vmatpush1.bf16.xpose.msra.mxu0 0
    %477 = vmatprep.subr.bf16.mxu0 0
    %478 = vmatpush1.bf16.xpose.msra.mxu0 %v461
    %479 = vmatprep.subr.bf16.mxu0 0
    %480 = vmatpush2.bf16.xpose.msra.mxu0 0
    %481 = vmatprep.subr.bf16.mxu0 0
    %482 = vmatpush2.bf16.xpose.msra.mxu0 0
    %483 = vmatprep.subr.bf16.mxu0 0
    %484 = vmatpush2.bf16.xpose.msra.mxu0 0
    %485 = vmatprep.subr.bf16.mxu0 0
    %486 = vmatpush2.bf16.xpose.msra.mxu0 0
    %487 = vmatprep.subr.bf16.mxu0 0
    %488 = vmatpush2.bf16.xpose.msra.mxu0 0
    %489 = vmatprep.subr.bf16.mxu0 0
    %490 = vmatpush2.bf16.xpose.msra.mxu0 0
    %491 = vmatprep.subr.bf16.mxu0 0
    %492 = vmatpush2.bf16.xpose.msra.mxu0 0
    %493 = vmatprep.subr.bf16.mxu0 0
    %494 = vmatpush2.bf16.xpose.msra.mxu0 0
    %495 = vmatprep.mubr.bf16.mxu0 0
    %496 = vmatmul.mubr.bf16.gmra.mxu0 %v458
    %v497 = vpop.f32.mrf.mxu0
    %v498 = vadd.f32 0.0, %v497
    %v499 = vpop.f32.mrf.mxu0
    %v500 = vpop.f32.mrf.mxu0
    %v501 = vadd.f32 0.0, %v500
    %v502 = vpop.f32.mrf.mxu0
    %503 = vdwg.mxu0
    %v504 = vmul.f32 %v498, 0.35355338
    %v505 = vmul.f32 %v501, 0.35355338
    %v506 = vadd.f32 %v504, %v71
    %v507 = vadd.f32 %v505, %v72
    %v508 = vsel %vm382, %v506, -inf
    %509 = vmax.xlane.f32.xlu0 %v508
    %v510 = vpop.xlane.xlu0 %509
    %v511 = vsel %vm382, %v507, -inf
    %512 = vmax.xlane.f32.xlu0 %v511
    %v513 = vpop.xlane.xlu0 %512
    %v514 = vsub.f32 %v506, %v510
    %v515 = vsub.f32 %v507, %v513
    %v516 = vmul.f32 %v514, 1.442695
    %v517 = vpow.pop %v516
    %v518 = vmul.f32 %v515, 1.442695
    %v519 = vpow.pop %v518
    %v520 = vsel %vm382, %v517, 0.0
    %521 = vadd.xlane.f32.xlu0 %v520
    %v522 = vpop.xlane.xlu0 %521
    %v523 = vsel %vm382, %v519, 0.0
    %524 = vadd.xlane.f32.xlu0 %v523
    %v525 = vpop.xlane.xlu0 %524
    %v526 = vrcp.pop %v522
    %v527 = vrcp.pop %v525
    %v528 = vmul.f32 %v517, %v526
    %v529 = vmul.f32 %v519, %v527
    %v530 = vpack.c.bf16 %v529, %v528
    %531 = vrot.lane.b32.xlu0 %v326, 56
    %v532 = vpop.permute.xlu0 %531
    %v535 = vsel %vm382, %v530, 0
    %537 = vmatprep.subr.bf16.mxu0 0
    %538 = vmatpush1.bf16.msra.mxu0 0
    %539 = vmatprep.subr.bf16.mxu0 0
    %540 = vmatpush1.bf16.msra.mxu0 0
    %541 = vmatprep.subr.bf16.mxu0 0
    %542 = vmatpush1.bf16.msra.mxu0 0
    %543 = vmatprep.subr.bf16.mxu0 0
    %544 = vmatpush1.bf16.msra.mxu0 0
    %545 = vmatprep.subr.bf16.mxu0 0
    %546 = vmatpush1.bf16.msra.mxu0 0
    %547 = vmatprep.subr.bf16.mxu0 0
    %548 = vmatpush1.bf16.msra.mxu0 0
    %549 = vmatprep.subr.bf16.mxu0 0
    %550 = vmatpush1.bf16.msra.mxu0 0
    %551 = vmatprep.subr.bf16.mxu0 0
    %552 = vmatpush1.bf16.msra.mxu0 %v532
    %553 = vmatprep.subr.bf16.mxu0 0
    %554 = vmatpush2.bf16.msra.mxu0 0
    %555 = vmatprep.subr.bf16.mxu0 0
    %556 = vmatpush2.bf16.msra.mxu0 0
    %557 = vmatprep.subr.bf16.mxu0 0
    %558 = vmatpush2.bf16.msra.mxu0 0
    %559 = vmatprep.subr.bf16.mxu0 0
    %560 = vmatpush2.bf16.msra.mxu0 0
    %561 = vmatprep.subr.bf16.mxu0 0
    %562 = vmatpush2.bf16.msra.mxu0 0
    %563 = vmatprep.subr.bf16.mxu0 0
    %564 = vmatpush2.bf16.msra.mxu0 0
    %565 = vmatprep.subr.bf16.mxu0 0
    %566 = vmatpush2.bf16.msra.mxu0 0
    %567 = vmatprep.subr.bf16.mxu0 0
    %568 = vmatpush2.bf16.msra.mxu0 0
    %569 = vmatprep.mubr.bf16.mxu0 0
    %570 = vmatmul.mubr.bf16.gmra.mxu0 %v535
    %v571 = vpop.f32.mrf.mxu0
    %v572 = vadd.f32 0.0, %v571
    %v573 = vpop.f32.mrf.mxu0
    %v574 = vpop.f32.mrf.mxu0
    %v575 = vadd.f32 0.0, %v574
    %v576 = vpop.f32.mrf.mxu0
    %577 = vdwg.mxu0
    %578 = vrot.lane.b32.xlu0 %v326, 112
    %v579 = vpop.permute.xlu0 %578
    %580 = vrot.lane.b32.xlu0 %v326, 80
    %v581 = vpop.permute.xlu0 %580
    %v583 = vsel %vm330, %v579, 0
    %v586 = vsel %vm330, %v581, 0
    %588 = vmatprep.subr.bf16.mxu0 0
    %589 = vmatpush1.bf16.xpose.msra.mxu0 0
    %590 = vmatprep.subr.bf16.mxu0 0
    %591 = vmatpush1.bf16.xpose.msra.mxu0 0
    %592 = vmatprep.subr.bf16.mxu0 0
    %593 = vmatpush1.bf16.xpose.msra.mxu0 0
    %594 = vmatprep.subr.bf16.mxu0 0
    %595 = vmatpush1.bf16.xpose.msra.mxu0 0
    %596 = vmatprep.subr.bf16.mxu0 0
    %597 = vmatpush1.bf16.xpose.msra.mxu0 0
    %598 = vmatprep.subr.bf16.mxu0 0
    %599 = vmatpush1.bf16.xpose.msra.mxu0 0
    %600 = vmatprep.subr.bf16.mxu0 0
    %601 = vmatpush1.bf16.xpose.msra.mxu0 0
    %602 = vmatprep.subr.bf16.mxu0 0
    %603 = vmatpush1.bf16.xpose.msra.mxu0 %v586
    %604 = vmatprep.subr.bf16.mxu0 0
    %605 = vmatpush2.bf16.xpose.msra.mxu0 0
    %606 = vmatprep.subr.bf16.mxu0 0
    %607 = vmatpush2.bf16.xpose.msra.mxu0 0
    %608 = vmatprep.subr.bf16.mxu0 0
    %609 = vmatpush2.bf16.xpose.msra.mxu0 0
    %610 = vmatprep.subr.bf16.mxu0 0
    %611 = vmatpush2.bf16.xpose.msra.mxu0 0
    %612 = vmatprep.subr.bf16.mxu0 0
    %613 = vmatpush2.bf16.xpose.msra.mxu0 0
    %614 = vmatprep.subr.bf16.mxu0 0
    %615 = vmatpush2.bf16.xpose.msra.mxu0 0
    %616 = vmatprep.subr.bf16.mxu0 0
    %617 = vmatpush2.bf16.xpose.msra.mxu0 0
    %618 = vmatprep.subr.bf16.mxu0 0
    %619 = vmatpush2.bf16.xpose.msra.mxu0 0
    %620 = vmatprep.mubr.bf16.mxu0 0
    %621 = vmatmul.mubr.bf16.gmra.mxu0 %v583
    %v622 = vpop.f32.mrf.mxu0
    %v623 = vadd.f32 0.0, %v622
    %v624 = vpop.f32.mrf.mxu0
    %v625 = vpop.f32.mrf.mxu0
    %v626 = vadd.f32 0.0, %v625
    %v627 = vpop.f32.mrf.mxu0
    %628 = vdwg.mxu0
    %v629 = vmul.f32 %v623, 0.35355338
    %v630 = vmul.f32 %v626, 0.35355338
    %v631 = vadd.f32 %v629, %v71
    %v632 = vadd.f32 %v630, %v72
    %v633 = vsel %vm382, %v631, -inf
    %634 = vmax.xlane.f32.xlu0 %v633
    %v635 = vpop.xlane.xlu0 %634
    %v636 = vsel %vm382, %v632, -inf
    %637 = vmax.xlane.f32.xlu0 %v636
    %v638 = vpop.xlane.xlu0 %637
    %v639 = vsub.f32 %v631, %v635
    %v640 = vsub.f32 %v632, %v638
    %v641 = vmul.f32 %v639, 1.442695
    %v642 = vpow.pop %v641
    %v643 = vmul.f32 %v640, 1.442695
    %v644 = vpow.pop %v643
    %v645 = vsel %vm382, %v642, 0.0
    %646 = vadd.xlane.f32.xlu0 %v645
    %v647 = vpop.xlane.xlu0 %646
    %v648 = vsel %vm382, %v644, 0.0
    %649 = vadd.xlane.f32.xlu0 %v648
    %v650 = vpop.xlane.xlu0 %649
    %v651 = vrcp.pop %v647
    %v652 = vrcp.pop %v650
    %v653 = vmul.f32 %v642, %v651
    %v654 = vmul.f32 %v644, %v652
    %v655 = vpack.c.bf16 %v654, %v653
    %656 = vrot.lane.b32.xlu0 %v326, 48
    %v657 = vpop.permute.xlu0 %656
    %v660 = vsel %vm382, %v655, 0
    %662 = vmatprep.subr.bf16.mxu0 0
    %663 = vmatpush1.bf16.msra.mxu0 0
    %664 = vmatprep.subr.bf16.mxu0 0
    %665 = vmatpush1.bf16.msra.mxu0 0
    %666 = vmatprep.subr.bf16.mxu0 0
    %667 = vmatpush1.bf16.msra.mxu0 0
    %668 = vmatprep.subr.bf16.mxu0 0
    %669 = vmatpush1.bf16.msra.mxu0 0
    %670 = vmatprep.subr.bf16.mxu0 0
    %671 = vmatpush1.bf16.msra.mxu0 0
    %672 = vmatprep.subr.bf16.mxu0 0
    %673 = vmatpush1.bf16.msra.mxu0 0
    %674 = vmatprep.subr.bf16.mxu0 0
    %675 = vmatpush1.bf16.msra.mxu0 0
    %676 = vmatprep.subr.bf16.mxu0 0
    %677 = vmatpush1.bf16.msra.mxu0 %v657
    %678 = vmatprep.subr.bf16.mxu0 0
    %679 = vmatpush2.bf16.msra.mxu0 0
    %680 = vmatprep.subr.bf16.mxu0 0
    %681 = vmatpush2.bf16.msra.mxu0 0
    %682 = vmatprep.subr.bf16.mxu0 0
    %683 = vmatpush2.bf16.msra.mxu0 0
    %684 = vmatprep.subr.bf16.mxu0 0
    %685 = vmatpush2.bf16.msra.mxu0 0
    %686 = vmatprep.subr.bf16.mxu0 0
    %687 = vmatpush2.bf16.msra.mxu0 0
    %688 = vmatprep.subr.bf16.mxu0 0
    %689 = vmatpush2.bf16.msra.mxu0 0
    %690 = vmatprep.subr.bf16.mxu0 0
    %691 = vmatpush2.bf16.msra.mxu0 0
    %692 = vmatprep.subr.bf16.mxu0 0
    %693 = vmatpush2.bf16.msra.mxu0 0
    %694 = vmatprep.mubr.bf16.mxu0 0
    %695 = vmatmul.mubr.bf16.gmra.mxu0 %v660
    %v696 = vpop.f32.mrf.mxu0
    %v697 = vadd.f32 0.0, %v696
    %v698 = vpop.f32.mrf.mxu0
    %v699 = vpop.f32.mrf.mxu0
    %v700 = vadd.f32 0.0, %v699
    %v701 = vpop.f32.mrf.mxu0
    %702 = vdwg.mxu0
    %703 = vrot.lane.b32.xlu0 %v326, 104
    %v704 = vpop.permute.xlu0 %703
    %705 = vrot.lane.b32.xlu0 %v326, 72
    %v706 = vpop.permute.xlu0 %705
    %v708 = vsel %vm330, %v704, 0
    %v711 = vsel %vm330, %v706, 0
    %713 = vmatprep.subr.bf16.mxu0 0
    %714 = vmatpush1.bf16.xpose.msra.mxu0 0
    %715 = vmatprep.subr.bf16.mxu0 0
    %716 = vmatpush1.bf16.xpose.msra.mxu0 0
    %717 = vmatprep.subr.bf16.mxu0 0
    %718 = vmatpush1.bf16.xpose.msra.mxu0 0
    %719 = vmatprep.subr.bf16.mxu0 0
    %720 = vmatpush1.bf16.xpose.msra.mxu0 0
    %721 = vmatprep.subr.bf16.mxu0 0
    %722 = vmatpush1.bf16.xpose.msra.mxu0 0
    %723 = vmatprep.subr.bf16.mxu0 0
    %724 = vmatpush1.bf16.xpose.msra.mxu0 0
    %725 = vmatprep.subr.bf16.mxu0 0
    %726 = vmatpush1.bf16.xpose.msra.mxu0 0
    %727 = vmatprep.subr.bf16.mxu0 0
    %728 = vmatpush1.bf16.xpose.msra.mxu0 %v711
    %729 = vmatprep.subr.bf16.mxu0 0
    %730 = vmatpush2.bf16.xpose.msra.mxu0 0
    %731 = vmatprep.subr.bf16.mxu0 0
    %732 = vmatpush2.bf16.xpose.msra.mxu0 0
    %733 = vmatprep.subr.bf16.mxu0 0
    %734 = vmatpush2.bf16.xpose.msra.mxu0 0
    %735 = vmatprep.subr.bf16.mxu0 0
    %736 = vmatpush2.bf16.xpose.msra.mxu0 0
    %737 = vmatprep.subr.bf16.mxu0 0
    %738 = vmatpush2.bf16.xpose.msra.mxu0 0
    %739 = vmatprep.subr.bf16.mxu0 0
    %740 = vmatpush2.bf16.xpose.msra.mxu0 0
    %741 = vmatprep.subr.bf16.mxu0 0
    %742 = vmatpush2.bf16.xpose.msra.mxu0 0
    %743 = vmatprep.subr.bf16.mxu0 0
    %744 = vmatpush2.bf16.xpose.msra.mxu0 0
    %745 = vmatprep.mubr.bf16.mxu0 0
    %746 = vmatmul.mubr.bf16.gmra.mxu0 %v708
    %v747 = vpop.f32.mrf.mxu0
    %v748 = vadd.f32 0.0, %v747
    %v749 = vpop.f32.mrf.mxu0
    %v750 = vpop.f32.mrf.mxu0
    %v751 = vadd.f32 0.0, %v750
    %v752 = vpop.f32.mrf.mxu0
    %753 = vdwg.mxu0
    %v754 = vmul.f32 %v748, 0.35355338
    %v755 = vmul.f32 %v751, 0.35355338
    %v756 = vadd.f32 %v754, %v71
    %v757 = vadd.f32 %v755, %v72
    %v758 = vsel %vm382, %v756, -inf
    %759 = vmax.xlane.f32.xlu0 %v758
    %v760 = vpop.xlane.xlu0 %759
    %v761 = vsel %vm382, %v757, -inf
    %762 = vmax.xlane.f32.xlu0 %v761
    %v763 = vpop.xlane.xlu0 %762
    %v764 = vsub.f32 %v756, %v760
    %v765 = vsub.f32 %v757, %v763
    %v766 = vmul.f32 %v764, 1.442695
    %v767 = vpow.pop %v766
    %v768 = vmul.f32 %v765, 1.442695
    %v769 = vpow.pop %v768
    %v770 = vsel %vm382, %v767, 0.0
    %771 = vadd.xlane.f32.xlu0 %v770
    %v772 = vpop.xlane.xlu0 %771
    %v773 = vsel %vm382, %v769, 0.0
    %774 = vadd.xlane.f32.xlu0 %v773
    %v775 = vpop.xlane.xlu0 %774
    %v776 = vrcp.pop %v772
    %v777 = vrcp.pop %v775
    %v778 = vmul.f32 %v767, %v776
    %v779 = vmul.f32 %v769, %v777
    %v780 = vpack.c.bf16 %v779, %v778
    %781 = vrot.lane.b32.xlu0 %v326, 40
    %v782 = vpop.permute.xlu0 %781
    %v785 = vsel %vm382, %v780, 0
    %787 = vmatprep.subr.bf16.mxu0 0
    %788 = vmatpush1.bf16.msra.mxu0 0
    %789 = vmatprep.subr.bf16.mxu0 0
    %790 = vmatpush1.bf16.msra.mxu0 0
    %791 = vmatprep.subr.bf16.mxu0 0
    %792 = vmatpush1.bf16.msra.mxu0 0
    %793 = vmatprep.subr.bf16.mxu0 0
    %794 = vmatpush1.bf16.msra.mxu0 0
    %795 = vmatprep.subr.bf16.mxu0 0
    %796 = vmatpush1.bf16.msra.mxu0 0
    %797 = vmatprep.subr.bf16.mxu0 0
    %798 = vmatpush1.bf16.msra.mxu0 0
    %799 = vmatprep.subr.bf16.mxu0 0
    %800 = vmatpush1.bf16.msra.mxu0 0
    %801 = vmatprep.subr.bf16.mxu0 0
    %802 = vmatpush1.bf16.msra.mxu0 %v782
    %803 = vmatprep.subr.bf16.mxu0 0
    %804 = vmatpush2.bf16.msra.mxu0 0
    %805 = vmatprep.subr.bf16.mxu0 0
    %806 = vmatpush2.bf16.msra.mxu0 0
    %807 = vmatprep.subr.bf16.mxu0 0
    %808 = vmatpush2.bf16.msra.mxu0 0
    %809 = vmatprep.subr.bf16.mxu0 0
    %810 = vmatpush2.bf16.msra.mxu0 0
    %811 = vmatprep.subr.bf16.mxu0 0
    %812 = vmatpush2.bf16.msra.mxu0 0
    %813 = vmatprep.subr.bf16.mxu0 0
    %814 = vmatpush2.bf16.msra.mxu0 0
    %815 = vmatprep.subr.bf16.mxu0 0
    %816 = vmatpush2.bf16.msra.mxu0 0
    %817 = vmatprep.subr.bf16.mxu0 0
    %818 = vmatpush2.bf16.msra.mxu0 0
    %819 = vmatprep.mubr.bf16.mxu0 0
    %820 = vmatmul.mubr.bf16.gmra.mxu0 %v785
    %v821 = vpop.f32.mrf.mxu0
    %v822 = vadd.f32 0.0, %v821
    %v823 = vpop.f32.mrf.mxu0
    %v824 = vpop.f32.mrf.mxu0
    %v825 = vadd.f32 0.0, %v824
    %v826 = vpop.f32.mrf.mxu0
    %827 = vdwg.mxu0
    %830 = vrot.lane.b32.xlu0 %v572, 8
    %v831 = vpop.permute.xlu0 %830
    %832 = vrot.lane.b32.xlu0 %v575, 8
    %v833 = vpop.permute.xlu0 %832
    %838 = vrot.lane.b32.xlu0 %v697, 16
    %v839 = vpop.permute.xlu0 %838
    %840 = vrot.lane.b32.xlu0 %v700, 16
    %v841 = vpop.permute.xlu0 %840
    %846 = vrot.lane.b32.xlu0 %v822, 24
    %v847 = vpop.permute.xlu0 %846
    %848 = vrot.lane.b32.xlu0 %v825, 24
    %v849 = vpop.permute.xlu0 %848
    %v852 = vsel %vm330, %v447, %v831
    %v853 = vsel %vm330, %v450, %v833
    %v854 = vsel %vm382, %v852, %v839
    %v855 = vsel %vm382, %v853, %v841
    %vm856 = vcmask 195584
    %v857 = vsel %vm856, %v854, %v847
    %v858 = vsel %vm856, %v855, %v849
    %v859 = vld [vmem:[%s10] sm:$0xff]
    %v860 = vld [vmem:[%s10 + $0x8] sm:$0xff]
    %v861 = vld [vmem:[%s10 + $0x10] sm:$0xff]
    %v862 = vld [vmem:[%s10 + $0x18] sm:$0xff]
    %v863 = vpack.c.bf16 %v858, %v857
    %v864 = vpack.c.bf16 %v860, %v859
    %v865 = vpack.c.bf16 %v862, %v861
    %v866 = vld [vmem:[%s11] sm:$0x1]
    %v868 = vlaneseq
    %v869 = vshrl.u32 %v868, 7
    %v870 = vsub.s32 0, %v869
    %v871 = vrot.slane %v866, %v870
    %v874 = vsel %vm224, %v863, 0
    %876 = vmatprep.subr.bf16.mxu0 0
    %877 = vmatpush1.bf16.msra.mxu0 0
    %878 = vmatprep.subr.bf16.mxu0 0
    %879 = vmatpush1.bf16.msra.mxu0 0
    %880 = vmatprep.subr.bf16.mxu0 0
    %881 = vmatpush1.bf16.msra.mxu0 0
    %882 = vmatprep.subr.bf16.mxu0 0
    %883 = vmatpush1.bf16.msra.mxu0 0
    %884 = vmatprep.subr.bf16.mxu0 0
    %885 = vmatpush1.bf16.msra.mxu0 0
    %886 = vmatprep.subr.bf16.mxu0 0
    %887 = vmatpush1.bf16.msra.mxu0 0
    %888 = vmatprep.subr.bf16.mxu0 0
    %889 = vmatpush1.bf16.msra.mxu0 %v865
    %890 = vmatprep.subr.bf16.mxu0 0
    %891 = vmatpush1.bf16.msra.mxu0 %v864
    %892 = vmatprep.subr.bf16.mxu0 0
    %893 = vmatpush2.bf16.msra.mxu0 0
    %894 = vmatprep.subr.bf16.mxu0 0
    %895 = vmatpush2.bf16.msra.mxu0 0
    %896 = vmatprep.subr.bf16.mxu0 0
    %897 = vmatpush2.bf16.msra.mxu0 0
    %898 = vmatprep.subr.bf16.mxu0 0
    %899 = vmatpush2.bf16.msra.mxu0 0
    %900 = vmatprep.subr.bf16.mxu0 0
    %901 = vmatpush2.bf16.msra.mxu0 0
    %902 = vmatprep.subr.bf16.mxu0 0
    %903 = vmatpush2.bf16.msra.mxu0 0
    %904 = vmatprep.subr.bf16.mxu0 0
    %905 = vmatpush2.bf16.msra.mxu0 0
    %906 = vmatprep.subr.bf16.mxu0 0
    %907 = vmatpush2.bf16.msra.mxu0 0
    %908 = vmatprep.mubr.bf16.mxu0 0
    %909 = vmatmul.mubr.bf16.gmra.mxu0 %v874
    %v910 = vpop.f32.mrf.mxu0
    %v911 = vadd.f32 %v871, %v910
    %v912 = vpop.f32.mrf.mxu0
    %v913 = vpop.f32.mrf.mxu0
    %v914 = vadd.f32 %v871, %v913
    %v915 = vpop.f32.mrf.mxu0
    %916 = vdwg.mxu0
    %v917 = vadd.f32 %v911, %v266
    %v918 = vadd.f32 %v914, %v267
    %v919 = vld [vmem:[%s12] sm:$0x1]
    %v920 = vld [vmem:[%s13] sm:$0x1]
    %v921 = vsel %vm224, %v917, 0.0
    %922 = vadd.xlane.f32.xlu0 %v921
    %v923 = vpop.xlane.xlu0 %922
    %v924 = vsel %vm224, %v918, 0.0
    %925 = vadd.xlane.f32.xlu0 %v924
    %v926 = vpop.xlane.xlu0 %925
    %v927 = vmul.f32 %v923, %v231
    %v928 = vmul.f32 %v926, %v231
    %v929 = vsub.f32 %v917, %v927
    %v930 = vsub.f32 %v918, %v928
    %v931 = vmul.f32 %v929, %v929
    %v932 = vmul.f32 %v930, %v930
    %v933 = vsel %vm224, %v931, 0.0
    %934 = vadd.xlane.f32.xlu0 %v933
    %v935 = vpop.xlane.xlu0 %934
    %v936 = vsel %vm224, %v932, 0.0
    %937 = vadd.xlane.f32.xlu0 %v936
    %v938 = vpop.xlane.xlu0 %937
    %v939 = vmul.f32 %v935, %v231
    %v940 = vmul.f32 %v938, %v231
    %v941 = vadd.f32 %v939, 1e-05
    %v942 = vadd.f32 %v940, 1e-05
    %v943 = vrsqrt.pop %v941
    %v944 = vrsqrt.pop %v942
    %v945 = vmul.f32 %v929, %v943
    %v946 = vmul.f32 %v930, %v944
    %v948 = vlaneseq
    %v949 = vshrl.u32 %v948, 7
    %v950 = vsub.s32 0, %v949
    %v951 = vrot.slane %v919, %v950
    %v953 = vmul.f32 %v945, %v951
    %v954 = vmul.f32 %v946, %v951
    %v956 = vlaneseq
    %v957 = vshrl.u32 %v956, 7
    %v958 = vsub.s32 0, %v957
    %v959 = vrot.slane %v920, %v958
    %v961 = vadd.f32 %v953, %v959
    %v962 = vadd.f32 %v954, %v959
    %v963 = vld [vmem:[%s14] sm:$0xff]
    %v964 = vld [vmem:[%s14 + $0x8] sm:$0xff]
    %v965 = vld [vmem:[%s14 + $0x10] sm:$0xff]
    %v966 = vld [vmem:[%s14 + $0x18] sm:$0xff]
    %v967 = vpack.c.bf16 %v962, %v961
    %v968 = vpack.c.bf16 %v964, %v963
    %v969 = vpack.c.bf16 %v966, %v965
    %v970 = vld [vmem:[%s15] sm:$0x1]
    %v972 = vlaneseq
    %v973 = vshrl.u32 %v972, 7
    %v974 = vsub.s32 0, %v973
    %v975 = vrot.slane %v970, %v974
    %v978 = vsel %vm224, %v967, 0
    %980 = vmatprep.subr.bf16.mxu0 0
    %981 = vmatpush1.bf16.msra.mxu0 0
    %982 = vmatprep.subr.bf16.mxu0 0
    %983 = vmatpush1.bf16.msra.mxu0 0
    %984 = vmatprep.subr.bf16.mxu0 0
    %985 = vmatpush1.bf16.msra.mxu0 0
    %986 = vmatprep.subr.bf16.mxu0 0
    %987 = vmatpush1.bf16.msra.mxu0 0
    %988 = vmatprep.subr.bf16.mxu0 0
    %989 = vmatpush1.bf16.msra.mxu0 0
    %990 = vmatprep.subr.bf16.mxu0 0
    %991 = vmatpush1.bf16.msra.mxu0 0
    %992 = vmatprep.subr.bf16.mxu0 0
    %993 = vmatpush1.bf16.msra.mxu0 %v969
    %994 = vmatprep.subr.bf16.mxu0 0
    %995 = vmatpush1.bf16.msra.mxu0 %v968
    %996 = vmatprep.subr.bf16.mxu0 0
    %997 = vmatpush2.bf16.msra.mxu0 0
    %998 = vmatprep.subr.bf16.mxu0 0
    %999 = vmatpush2.bf16.msra.mxu0 0
    %1000 = vmatprep.subr.bf16.mxu0 0
    %1001 = vmatpush2.bf16.msra.mxu0 0
    %1002 = vmatprep.subr.bf16.mxu0 0
    %1003 = vmatpush2.bf16.msra.mxu0 0
    %1004 = vmatprep.subr.bf16.mxu0 0
    %1005 = vmatpush2.bf16.msra.mxu0 0
    %1006 = vmatprep.subr.bf16.mxu0 0
    %1007 = vmatpush2.bf16.msra.mxu0 0
    %1008 = vmatprep.subr.bf16.mxu0 0
    %1009 = vmatpush2.bf16.msra.mxu0 0
    %1010 = vmatprep.subr.bf16.mxu0 0
    %1011 = vmatpush2.bf16.msra.mxu0 0
    %1012 = vmatprep.mubr.bf16.mxu0 0
    %1013 = vmatmul.mubr.bf16.gmra.mxu0 %v978
    %v1014 = vpop.f32.mrf.mxu0
    %v1015 = vadd.f32 %v975, %v1014
    %v1016 = vpop.f32.mrf.mxu0
    %v1017 = vpop.f32.mrf.mxu0
    %v1018 = vadd.f32 %v975, %v1017
    %v1019 = vpop.f32.mrf.mxu0
    %1020 = vdwg.mxu0
    %v1021 = vmul.f32 %v1015, 0.5
    %v1022 = vmul.f32 %v1018, 0.5
    %v1023 = vmul.f32 %v1015, 0.044715
    %v1024 = vmul.f32 %v1018, 0.044715
    %v1025 = vmul.f32 %v1023, %v1015
    %v1026 = vmul.f32 %v1024, %v1018
    %v1027 = vmul.f32 %v1025, %v1015
    %v1028 = vmul.f32 %v1026, %v1018
    %v1029 = vadd.f32 %v1015, %v1027
    %v1030 = vadd.f32 %v1018, %v1028
    %v1031 = vmul.f32 %v1029, 0.7978846
    %v1032 = vmul.f32 %v1030, 0.7978846
    %v1033 = vtanh.pop %v1031
    %v1034 = vtanh.pop %v1032
    %v1035 = vadd.f32 %v1033, 1.0
    %v1036 = vadd.f32 %v1034, 1.0
    %v1037 = vmul.f32 %v1021, %v1035
    %v1038 = vmul.f32 %v1022, %v1036
    %v1039 = vld [vmem:[%s16] sm:$0xff]
    %v1040 = vld [vmem:[%s16 + $0x8] sm:$0xff]
    %v1041 = vld [vmem:[%s16 + $0x10] sm:$0xff]
    %v1042 = vld [vmem:[%s16 + $0x18] sm:$0xff]
    %v1043 = vld [vmem:[%s16 + $0x20] sm:$0xff]
    %v1044 = vld [vmem:[%s16 + $0x28] sm:$0xff]
    %v1045 = vld [vmem:[%s16 + $0x30] sm:$0xff]
    %v1046 = vld [vmem:[%s16 + $0x38] sm:$0xff]
    %v1047 = vpack.c.bf16 %v1038, %v1037
    %v1048 = vpack.c.bf16 %v1040, %v1039
    %v1049 = vpack.c.bf16 %v1042, %v1041
    %v1050 = vpack.c.bf16 %v1044, %v1043
    %v1051 = vpack.c.bf16 %v1046, %v1045
    %v1052 = vld [vmem:[%s17] sm:$0x1]
    %v1054 = vlaneseq
    %v1055 = vshrl.u32 %v1054, 7
    %v1056 = vsub.s32 0, %v1055
    %v1057 = vrot.slane %v1052, %v1056
    %vm1059 = vcmask 523264
    %v1061 = vsel %vm1059, %v1047, 0
    %1063 = vmatprep.subr.bf16.mxu0 0
    %1064 = vmatpush1.bf16.msra.mxu0 0
    %1065 = vmatprep.subr.bf16.mxu0 0
    %1066 = vmatpush1.bf16.msra.mxu0 0
    %1067 = vmatprep.subr.bf16.mxu0 0
    %1068 = vmatpush1.bf16.msra.mxu0 0
    %1069 = vmatprep.subr.bf16.mxu0 0
    %1070 = vmatpush1.bf16.msra.mxu0 0
    %1071 = vmatprep.subr.bf16.mxu0 0
    %1072 = vmatpush1.bf16.msra.mxu0 %v1051
    %1073 = vmatprep.subr.bf16.mxu0 0
    %1074 = vmatpush1.bf16.msra.mxu0 %v1050
    %1075 = vmatprep.subr.bf16.mxu0 0
    %1076 = vmatpush1.bf16.msra.mxu0 %v1049
    %1077 = vmatprep.subr.bf16.mxu0 0
    %1078 = vmatpush1.bf16.msra.mxu0 %v1048
    %1079 = vmatprep.subr.bf16.mxu0 0
    %1080 = vmatpush2.bf16.msra.mxu0 0
    %1081 = vmatprep.subr.bf16.mxu0 0
    %1082 = vmatpush2.bf16.msra.mxu0 0
    %1083 = vmatprep.subr.bf16.mxu0 0
    %1084 = vmatpush2.bf16.msra.mxu0 0
    %1085 = vmatprep.subr.bf16.mxu0 0
    %1086 = vmatpush2.bf16.msra.mxu0 0
    %1087 = vmatprep.subr.bf16.mxu0 0
    %1088 = vmatpush2.bf16.msra.mxu0 0
    %1089 = vmatprep.subr.bf16.mxu0 0
    %1090 = vmatpush2.bf16.msra.mxu0 0
    %1091 = vmatprep.subr.bf16.mxu0 0
    %1092 = vmatpush2.bf16.msra.mxu0 0
    %1093 = vmatprep.subr.bf16.mxu0 0
    %1094 = vmatpush2.bf16.msra.mxu0 0
    %1095 = vmatprep.mubr.bf16.mxu0 0
    %1096 = vmatmul.mubr.bf16.gmra.mxu0 %v1061
    %v1097 = vpop.f32.mrf.mxu0
    %v1098 = vadd.f32 %v1057, %v1097
    %v1099 = vpop.f32.mrf.mxu0
    %v1100 = vpop.f32.mrf.mxu0
    %v1101 = vadd.f32 %v1057, %v1100
    %v1102 = vpop.f32.mrf.mxu0
    %1103 = vdwg.mxu0
    %v1104 = vadd.f32 %v1098, %v961
    %v1105 = vadd.f32 %v1101, %v962
    %v1106 = vld [vmem:[%s18] sm:$0x1]
    %v1107 = vld [vmem:[%s19] sm:$0x1]
    %v1108 = vsel %vm224, %v1104, 0.0
    %1109 = vadd.xlane.f32.xlu0 %v1108
    %v1110 = vpop.xlane.xlu0 %1109
    %v1111 = vsel %vm224, %v1105, 0.0
    %1112 = vadd.xlane.f32.xlu0 %v1111
    %v1113 = vpop.xlane.xlu0 %1112
    %v1114 = vmul.f32 %v1110, %v231
    %v1115 = vmul.f32 %v1113, %v231
    %v1116 = vsub.f32 %v1104, %v1114
    %v1117 = vsub.f32 %v1105, %v1115
    %v1118 = vmul.f32 %v1116, %v1116
    %v1119 = vmul.f32 %v1117, %v1117
    %v1120 = vsel %vm224, %v1118, 0.0
    %1121 = vadd.xlane.f32.xlu0 %v1120
    %v1122 = vpop.xlane.xlu0 %1121
    %v1123 = vsel %vm224, %v1119, 0.0
    %1124 = vadd.xlane.f32.xlu0 %v1123
    %v1125 = vpop.xlane.xlu0 %1124
    %v1126 = vmul.f32 %v1122, %v231
    %v1127 = vmul.f32 %v1125, %v231
    %v1128 = vadd.f32 %v1126, 1e-05
    %v1129 = vadd.f32 %v1127, 1e-05
    %v1130 = vrsqrt.pop %v1128
    %v1131 = vrsqrt.pop %v1129
    %v1132 = vmul.f32 %v1116, %v1130
    %v1133 = vmul.f32 %v1117, %v1131
    %v1135 = vlaneseq
    %v1136 = vshrl.u32 %v1135, 7
    %v1137 = vsub.s32 0, %v1136
    %v1138 = vrot.slane %v1106, %v1137
    %v1140 = vmul.f32 %v1132, %v1138
    %v1141 = vmul.f32 %v1133, %v1138
    %v1143 = vlaneseq
    %v1144 = vshrl.u32 %v1143, 7
    %v1145 = vsub.s32 0, %v1144
    %v1146 = vrot.slane %v1107, %v1145
    %v1148 = vadd.f32 %v1140, %v1146
    %v1149 = vadd.f32 %v1141, %v1146
    %s1150 = scalar_lea.vmem %s8, 32
    %v1151 = vld [vmem:[%s1150] sm:$0xff]
    %v1152 = vld [vmem:[%s1150 + $0x8] sm:$0xff]
    %v1153 = vld [vmem:[%s1150 + $0x10] sm:$0xff]
    %v1154 = vld [vmem:[%s1150 + $0x18] sm:$0xff]
    %v1155 = vpack.c.bf16 %v1149, %v1148
    %v1156 = vpack.c.bf16 %v1152, %v1151
    %v1157 = vpack.c.bf16 %v1154, %v1153
    %s1158 = scalar_lea.vmem %s9, 1
    %v1159 = vld [vmem:[%s1158] sm:$0x1]
    %v1161 = vlaneseq
    %v1162 = vshrl.u32 %v1161, 7
    %v1163 = vsub.s32 0, %v1162
    %v1164 = vrot.slane %v1159, %v1163
    %v1167 = vsel %vm224, %v1155, 0
    %1169 = vmatprep.subr.bf16.mxu0 0
    %1170 = vmatpush1.bf16.msra.mxu0 0
    %1171 = vmatprep.subr.bf16.mxu0 0
    %1172 = vmatpush1.bf16.msra.mxu0 0
    %1173 = vmatprep.subr.bf16.mxu0 0
    %1174 = vmatpush1.bf16.msra.mxu0 0
    %1175 = vmatprep.subr.bf16.mxu0 0
    %1176 = vmatpush1.bf16.msra.mxu0 0
    %1177 = vmatprep.subr.bf16.mxu0 0
    %1178 = vmatpush1.bf16.msra.mxu0 0
    %1179 = vmatprep.subr.bf16.mxu0 0
    %1180 = vmatpush1.bf16.msra.mxu0 0
    %1181 = vmatprep.subr.bf16.mxu0 0
    %1182 = vmatpush1.bf16.msra.mxu0 %v1157
    %1183 = vmatprep.subr.bf16.mxu0 0
    %1184 = vmatpush1.bf16.msra.mxu0 %v1156
    %1185 = vmatprep.subr.bf16.mxu0 0
    %1186 = vmatpush2.bf16.msra.mxu0 0
    %1187 = vmatprep.subr.bf16.mxu0 0
    %1188 = vmatpush2.bf16.msra.mxu0 0
    %1189 = vmatprep.subr.bf16.mxu0 0
    %1190 = vmatpush2.bf16.msra.mxu0 0
    %1191 = vmatprep.subr.bf16.mxu0 0
    %1192 = vmatpush2.bf16.msra.mxu0 0
    %1193 = vmatprep.subr.bf16.mxu0 0
    %1194 = vmatpush2.bf16.msra.mxu0 0
    %1195 = vmatprep.subr.bf16.mxu0 0
    %1196 = vmatpush2.bf16.msra.mxu0 0
    %1197 = vmatprep.subr.bf16.mxu0 0
    %1198 = vmatpush2.bf16.msra.mxu0 0
    %1199 = vmatprep.subr.bf16.mxu0 0
    %1200 = vmatpush2.bf16.msra.mxu0 0
    %1201 = vmatprep.mubr.bf16.mxu0 0
    %1202 = vmatmul.mubr.bf16.gmra.mxu0 %v1167
    %v1203 = vpop.f32.mrf.mxu0
    %v1204 = vadd.f32 %v1164, %v1203
    %v1205 = vpop.f32.mrf.mxu0
    %v1206 = vpop.f32.mrf.mxu0
    %v1207 = vadd.f32 %v1164, %v1206
    %v1208 = vpop.f32.mrf.mxu0
    %1209 = vdwg.mxu0
    %v1210 = vpack.c.bf16 %v1207, %v1204
    %1212 = vrot.lane.b32.xlu0 %v1210, 96
    %v1213 = vpop.permute.xlu0 %1212
    %v1215 = vsel %vm330, %v1210, 0
    %v1218 = vsel %vm330, %v1213, 0
    %1220 = vmatprep.subr.bf16.mxu0 0
    %1221 = vmatpush1.bf16.xpose.msra.mxu0 0
    %1222 = vmatprep.subr.bf16.mxu0 0
    %1223 = vmatpush1.bf16.xpose.msra.mxu0 0
    %1224 = vmatprep.subr.bf16.mxu0 0
    %1225 = vmatpush1.bf16.xpose.msra.mxu0 0
    %1226 = vmatprep.subr.bf16.mxu0 0
    %1227 = vmatpush1.bf16.xpose.msra.mxu0 0
    %1228 = vmatprep.subr.bf16.mxu0 0
    %1229 = vmatpush1.bf16.xpose.msra.mxu0 0
    %1230 = vmatprep.subr.bf16.mxu0 0
    %1231 = vmatpush1.bf16.xpose.msra.mxu0 0
    %1232 = vmatprep.subr.bf16.mxu0 0
    %1233 = vmatpush1.bf16.xpose.msra.mxu0 0
    %1234 = vmatprep.subr.bf16.mxu0 0
    %1235 = vmatpush1.bf16.xpose.msra.mxu0 %v1218
    %1236 = vmatprep.subr.bf16.mxu0 0
    %1237 = vmatpush2.bf16.xpose.msra.mxu0 0
    %1238 = vmatprep.subr.bf16.mxu0 0
    %1239 = vmatpush2.bf16.xpose.msra.mxu0 0
    %1240 = vmatprep.subr.bf16.mxu0 0
    %1241 = vmatpush2.bf16.xpose.msra.mxu0 0
    %1242 = vmatprep.subr.bf16.mxu0 0
    %1243 = vmatpush2.bf16.xpose.msra.mxu0 0
    %1244 = vmatprep.subr.bf16.mxu0 0
    %1245 = vmatpush2.bf16.xpose.msra.mxu0 0
    %1246 = vmatprep.subr.bf16.mxu0 0
    %1247 = vmatpush2.bf16.xpose.msra.mxu0 0
    %1248 = vmatprep.subr.bf16.mxu0 0
    %1249 = vmatpush2.bf16.xpose.msra.mxu0 0
    %1250 = vmatprep.subr.bf16.mxu0 0
    %1251 = vmatpush2.bf16.xpose.msra.mxu0 0
    %1252 = vmatprep.mubr.bf16.mxu0 0
    %1253 = vmatmul.mubr.bf16.gmra.mxu0 %v1215
    %v1254 = vpop.f32.mrf.mxu0
    %v1255 = vadd.f32 0.0, %v1254
    %v1256 = vpop.f32.mrf.mxu0
    %v1257 = vpop.f32.mrf.mxu0
    %v1258 = vadd.f32 0.0, %v1257
    %v1259 = vpop.f32.mrf.mxu0
    %1260 = vdwg.mxu0
    %v1261 = vmul.f32 %v1255, 0.35355338
    %v1262 = vmul.f32 %v1258, 0.35355338
    %v1263 = vadd.f32 %v1261, %v71
    %v1264 = vadd.f32 %v1262, %v72
    %v1265 = vsel %vm382, %v1263, -inf
    %1266 = vmax.xlane.f32.xlu0 %v1265
    %v1267 = vpop.xlane.xlu0 %1266
    %v1268 = vsel %vm382, %v1264, -inf
    %1269 = vmax.xlane.f32.xlu0 %v1268
    %v1270 = vpop.xlane.xlu0 %1269
    %v1271 = vsub.f32 %v1263, %v1267
    %v1272 = vsub.f32 %v1264, %v1270
    %v1273 = vmul.f32 %v1271, 1.442695
    %v1274 = vpow.pop %v1273
    %v1275 = vmul.f32 %v1272, 1.442695
    %v1276 = vpow.pop %v1275
    %v1277 = vsel %vm382, %v1274, 0.0
    %1278 = vadd.xlane.f32.xlu0 %v1277
    %v1279 = vpop.xlane.xlu0 %1278
    %v1280 = vsel %vm382, %v1276, 0.0
    %1281 = vadd.xlane.f32.xlu0 %v1280
    %v1282 = vpop.xlane.xlu0 %1281
    %v1283 = vrcp.pop %v1279
    %v1284 = vrcp.pop %v1282
    %v1285 = vmul.f32 %v1274, %v1283
    %v1286 = vmul.f32 %v1276, %v1284
    %v1287 = vpack.c.bf16 %v1286, %v1285
    %1288 = vrot.lane.b32.xlu0 %v1210, 64
    %v1289 = vpop.permute.xlu0 %1288
    %v1292 = vsel %vm382, %v1287, 0
    %1294 = vmatprep.subr.bf16.mxu0 0
    %1295 = vmatpush1.bf16.msra.mxu0 0
    %1296 = vmatprep.subr.bf16.mxu0 0
    %1297 = vmatpush1.bf16.msra.mxu0 0
    %1298 = vmatprep.subr.bf16.mxu0 0
    %1299 = vmatpush1.bf16.msra.mxu0 0
    %1300 = vmatprep.subr.bf16.mxu0 0
    %1301 = vmatpush1.bf16.msra.mxu0 0
    %1302 = vmatprep.subr.bf16.mxu0 0
    %1303 = vmatpush1.bf16.msra.mxu0 0
    %1304 = vmatprep.subr.bf16.mxu0 0
    %1305 = vmatpush1.bf16.msra.mxu0 0
    %1306 = vmatprep.subr.bf16.mxu0 0
    %1307 = vmatpush1.bf16.msra.mxu0 0
    %1308 = vmatprep.subr.bf16.mxu0 0
    %1309 = vmatpush1.bf16.msra.mxu0 %v1289
    %1310 = vmatprep.subr.bf16.mxu0 0
    %1311 = vmatpush2.bf16.msra.mxu0 0
    %1312 = vmatprep.subr.bf16.mxu0 0
    %1313 = vmatpush2.bf16.msra.mxu0 0
    %1314 = vmatprep.subr.bf16.mxu0 0
    %1315 = vmatpush2.bf16.msra.mxu0 0
    %1316 = vmatprep.subr.bf16.mxu0 0
    %1317 = vmatpush2.bf16.msra.mxu0 0
    %1318 = vmatprep.subr.bf16.mxu0 0
    %1319 = vmatpush2.bf16.msra.mxu0 0
    %1320 = vmatprep.subr.bf16.mxu0 0
    %1321 = vmatpush2.bf16.msra.mxu0 0
    %1322 = vmatprep.subr.bf16.mxu0 0
    %1323 = vmatpush2.bf16.msra.mxu0 0
    %1324 = vmatprep.subr.bf16.mxu0 0
    %1325 = vmatpush2.bf16.msra.mxu0 0
    %1326 = vmatprep.mubr.bf16.mxu0 0
    %1327 = vmatmul.mubr.bf16.gmra.mxu0 %v1292
    %v1328 = vpop.f32.mrf.mxu0
    %v1329 = vadd.f32 0.0, %v1328
    %v1330 = vpop.f32.mrf.mxu0
    %v1331 = vpop.f32.mrf.mxu0
    %v1332 = vadd.f32 0.0, %v1331
    %v1333 = vpop.f32.mrf.mxu0
    %1334 = vdwg.mxu0
    %1335 = vrot.lane.b32.xlu0 %v1210, 120
    %v1336 = vpop.permute.xlu0 %1335
    %1337 = vrot.lane.b32.xlu0 %v1210, 88
    %v1338 = vpop.permute.xlu0 %1337
    %v1340 = vsel %vm330, %v1336, 0
    %v1343 = vsel %vm330, %v1338, 0
    %1345 = vmatprep.subr.bf16.mxu0 0
    %1346 = vmatpush1.bf16.xpose.msra.mxu0 0
    %1347 = vmatprep.subr.bf16.mxu0 0
    %1348 = vmatpush1.bf16.xpose.msra.mxu0 0
    %1349 = vmatprep.subr.bf16.mxu0 0
    %1350 = vmatpush1.bf16.xpose.msra.mxu0 0
    %1351 = vmatprep.subr.bf16.mxu0 0
    %1352 = vmatpush1.bf16.xpose.msra.mxu0 0
    %1353 = vmatprep.subr.bf16.mxu0 0
    %1354 = vmatpush1.bf16.xpose.msra.mxu0 0
    %1355 = vmatprep.subr.bf16.mxu0 0
    %1356 = vmatpush1.bf16.xpose.msra.mxu0 0
    %1357 = vmatprep.subr.bf16.mxu0 0
    %1358 = vmatpush1.bf16.xpose.msra.mxu0 0
    %1359 = vmatprep.subr.bf16.mxu0 0
    %1360 = vmatpush1.bf16.xpose.msra.mxu0 %v1343
    %1361 = vmatprep.subr.bf16.mxu0 0
    %1362 = vmatpush2.bf16.xpose.msra.mxu0 0
    %1363 = vmatprep.subr.bf16.mxu0 0
    %1364 = vmatpush2.bf16.xpose.msra.mxu0 0
    %1365 = vmatprep.subr.bf16.mxu0 0
    %1366 = vmatpush2.bf16.xpose.msra.mxu0 0
    %1367 = vmatprep.subr.bf16.mxu0 0
    %1368 = vmatpush2.bf16.xpose.msra.mxu0 0
    %1369 = vmatprep.subr.bf16.mxu0 0
    %1370 = vmatpush2.bf16.xpose.msra.mxu0 0
    %1371 = vmatprep.subr.bf16.mxu0 0
    %1372 = vmatpush2.bf16.xpose.msra.mxu0 0
    %1373 = vmatprep.subr.bf16.mxu0 0
    %1374 = vmatpush2.bf16.xpose.msra.mxu0 0
    %1375 = vmatprep.subr.bf16.mxu0 0
    %1376 = vmatpush2.bf16.xpose.msra.mxu0 0
    %1377 = vmatprep.mubr.bf16.mxu0 0
    %1378 = vmatmul.mubr.bf16.gmra.mxu0 %v1340
    %v1379 = vpop.f32.mrf.mxu0
    %v1380 = vadd.f32 0.0, %v1379
    %v1381 = vpop.f32.mrf.mxu0
    %v1382 = vpop.f32.mrf.mxu0
    %v1383 = vadd.f32 0.0, %v1382
    %v1384 = vpop.f32.mrf.mxu0
    %1385 = vdwg.mxu0
    %v1386 = vmul.f32 %v1380, 0.35355338
    %v1387 = vmul.f32 %v1383, 0.35355338
    %v1388 = vadd.f32 %v1386, %v71
    %v1389 = vadd.f32 %v1387, %v72
    %v1390 = vsel %vm382, %v1388, -inf
    %1391 = vmax.xlane.f32.xlu0 %v1390
    %v1392 = vpop.xlane.xlu0 %1391
    %v1393 = vsel %vm382, %v1389, -inf
    %1394 = vmax.xlane.f32.xlu0 %v1393
    %v1395 = vpop.xlane.xlu0 %1394
    %v1396 = vsub.f32 %v1388, %v1392
    %v1397 = vsub.f32 %v1389, %v1395
    %v1398 = vmul.f32 %v1396, 1.442695
    %v1399 = vpow.pop %v1398
    %v1400 = vmul.f32 %v1397, 1.442695
    %v1401 = vpow.pop %v1400
    %v1402 = vsel %vm382, %v1399, 0.0
    %1403 = vadd.xlane.f32.xlu0 %v1402
    %v1404 = vpop.xlane.xlu0 %1403
    %v1405 = vsel %vm382, %v1401, 0.0
    %1406 = vadd.xlane.f32.xlu0 %v1405
    %v1407 = vpop.xlane.xlu0 %1406
    %v1408 = vrcp.pop %v1404
    %v1409 = vrcp.pop %v1407
    %v1410 = vmul.f32 %v1399, %v1408
    %v1411 = vmul.f32 %v1401, %v1409
    %v1412 = vpack.c.bf16 %v1411, %v1410
    %1413 = vrot.lane.b32.xlu0 %v1210, 56
    %v1414 = vpop.permute.xlu0 %1413
    %v1417 = vsel %vm382, %v1412, 0
    %1419 = vmatprep.subr.bf16.mxu0 0
    %1420 = vmatpush1.bf16.msra.mxu0 0
    %1421 = vmatprep.subr.bf16.mxu0 0
    %1422 = vmatpush1.bf16.msra.mxu0 0
    %1423 = vmatprep.subr.bf16.mxu0 0
    %1424 = vmatpush1.bf16.msra.mxu0 0
    %1425 = vmatprep.subr.bf16.mxu0 0
    %1426 = vmatpush1.bf16.msra.mxu0 0
    %1427 = vmatprep.subr.bf16.mxu0 0
    %1428 = vmatpush1.bf16.msra.mxu0 0
    %1429 = vmatprep.subr.bf16.mxu0 0
    %1430 = vmatpush1.bf16.msra.mxu0 0
    %1431 = vmatprep.subr.bf16.mxu0 0
    %1432 = vmatpush1.bf16.msra.mxu0 0
    %1433 = vmatprep.subr.bf16.mxu0 0
    %1434 = vmatpush1.bf16.msra.mxu0 %v1414
    %1435 = vmatprep.subr.bf16.mxu0 0
    %1436 = vmatpush2.bf16.msra.mxu0 0
    %1437 = vmatprep.subr.bf16.mxu0 0
    %1438 = vmatpush2.bf16.msra.mxu0 0
    %1439 = vmatprep.subr.bf16.mxu0 0
    %1440 = vmatpush2.bf16.msra.mxu0 0
    %1441 = vmatprep.subr.bf16.mxu0 0
    %1442 = vmatpush2.bf16.msra.mxu0 0
    %1443 = vmatprep.subr.bf16.mxu0 0
    %1444 = vmatpush2.bf16.msra.mxu0 0
    %1445 = vmatprep.subr.bf16.mxu0 0
    %1446 = vmatpush2.bf16.msra.mxu0 0
    %1447 = vmatprep.subr.bf16.mxu0 0
    %1448 = vmatpush2.bf16.msra.mxu0 0
    %1449 = vmatprep.subr.bf16.mxu0 0
    %1450 = vmatpush2.bf16.msra.mxu0 0
    %1451 = vmatprep.mubr.bf16.mxu0 0
    %1452 = vmatmul.mubr.bf16.gmra.mxu0 %v1417
    %v1453 = vpop.f32.mrf.mxu0
    %v1454 = vadd.f32 0.0, %v1453
    %v1455 = vpop.f32.mrf.mxu0
    %v1456 = vpop.f32.mrf.mxu0
    %v1457 = vadd.f32 0.0, %v1456
    %v1458 = vpop.f32.mrf.mxu0
    %1459 = vdwg.mxu0
    %1460 = vrot.lane.b32.xlu0 %v1210, 112
    %v1461 = vpop.permute.xlu0 %1460
    %1462 = vrot.lane.b32.xlu0 %v1210, 80
    %v1463 = vpop.permute.xlu0 %1462
    %v1465 = vsel %vm330, %v1461, 0
    %v1468 = vsel %vm330, %v1463, 0
    %1470 = vmatprep.subr.bf16.mxu0 0
    %1471 = vmatpush1.bf16.xpose.msra.mxu0 0
    %1472 = vmatprep.subr.bf16.mxu0 0
    %1473 = vmatpush1.bf16.xpose.msra.mxu0 0
    %1474 = vmatprep.subr.bf16.mxu0 0
    %1475 = vmatpush1.bf16.xpose.msra.mxu0 0
    %1476 = vmatprep.subr.bf16.mxu0 0
    %1477 = vmatpush1.bf16.xpose.msra.mxu0 0
    %1478 = vmatprep.subr.bf16.mxu0 0
    %1479 = vmatpush1.bf16.xpose.msra.mxu0 0
    %1480 = vmatprep.subr.bf16.mxu0 0
    %1481 = vmatpush1.bf16.xpose.msra.mxu0 0
    %1482 = vmatprep.subr.bf16.mxu0 0
    %1483 = vmatpush1.bf16.xpose.msra.mxu0 0
    %1484 = vmatprep.subr.bf16.mxu0 0
    %1485 = vmatpush1.bf16.xpose.msra.mxu0 %v1468
    %1486 = vmatprep.subr.bf16.mxu0 0
    %1487 = vmatpush2.bf16.xpose.msra.mxu0 0
    %1488 = vmatprep.subr.bf16.mxu0 0
    %1489 = vmatpush2.bf16.xpose.msra.mxu0 0
    %1490 = vmatprep.subr.bf16.mxu0 0
    %1491 = vmatpush2.bf16.xpose.msra.mxu0 0
    %1492 = vmatprep.subr.bf16.mxu0 0
    %1493 = vmatpush2.bf16.xpose.msra.mxu0 0
    %1494 = vmatprep.subr.bf16.mxu0 0
    %1495 = vmatpush2.bf16.xpose.msra.mxu0 0
    %1496 = vmatprep.subr.bf16.mxu0 0
    %1497 = vmatpush2.bf16.xpose.msra.mxu0 0
    %1498 = vmatprep.subr.bf16.mxu0 0
    %1499 = vmatpush2.bf16.xpose.msra.mxu0 0
    %1500 = vmatprep.subr.bf16.mxu0 0
    %1501 = vmatpush2.bf16.xpose.msra.mxu0 0
    %1502 = vmatprep.mubr.bf16.mxu0 0
    %1503 = vmatmul.mubr.bf16.gmra.mxu0 %v1465
    %v1504 = vpop.f32.mrf.mxu0
    %v1505 = vadd.f32 0.0, %v1504
    %v1506 = vpop.f32.mrf.mxu0
    %v1507 = vpop.f32.mrf.mxu0
    %v1508 = vadd.f32 0.0, %v1507
    %v1509 = vpop.f32.mrf.mxu0
    %1510 = vdwg.mxu0
    %v1511 = vmul.f32 %v1505, 0.35355338
    %v1512 = vmul.f32 %v1508, 0.35355338
    %v1513 = vadd.f32 %v1511, %v71
    %v1514 = vadd.f32 %v1512, %v72
    %v1515 = vsel %vm382, %v1513, -inf
    %1516 = vmax.xlane.f32.xlu0 %v1515
    %v1517 = vpop.xlane.xlu0 %1516
    %v1518 = vsel %vm382, %v1514, -inf
    %1519 = vmax.xlane.f32.xlu0 %v1518
    %v1520 = vpop.xlane.xlu0 %1519
    %v1521 = vsub.f32 %v1513, %v1517
    %v1522 = vsub.f32 %v1514, %v1520
    %v1523 = vmul.f32 %v1521, 1.442695
    %v1524 = vpow.pop %v1523
    %v1525 = vmul.f32 %v1522, 1.442695
    %v1526 = vpow.pop %v1525
    %v1527 = vsel %vm382, %v1524, 0.0
    %1528 = vadd.xlane.f32.xlu0 %v1527
    %v1529 = vpop.xlane.xlu0 %1528
    %v1530 = vsel %vm382, %v1526, 0.0
    %1531 = vadd.xlane.f32.xlu0 %v1530
    %v1532 = vpop.xlane.xlu0 %1531
    %v1533 = vrcp.pop %v1529
    %v1534 = vrcp.pop %v1532
    %v1535 = vmul.f32 %v1524, %v1533
    %v1536 = vmul.f32 %v1526, %v1534
    %v1537 = vpack.c.bf16 %v1536, %v1535
    %1538 = vrot.lane.b32.xlu0 %v1210, 48
    %v1539 = vpop.permute.xlu0 %1538
    %v1542 = vsel %vm382, %v1537, 0
    %1544 = vmatprep.subr.bf16.mxu0 0
    %1545 = vmatpush1.bf16.msra.mxu0 0
    %1546 = vmatprep.subr.bf16.mxu0 0
    %1547 = vmatpush1.bf16.msra.mxu0 0
    %1548 = vmatprep.subr.bf16.mxu0 0
    %1549 = vmatpush1.bf16.msra.mxu0 0
    %1550 = vmatprep.subr.bf16.mxu0 0
    %1551 = vmatpush1.bf16.msra.mxu0 0
    %1552 = vmatprep.subr.bf16.mxu0 0
    %1553 = vmatpush1.bf16.msra.mxu0 0
    %1554 = vmatprep.subr.bf16.mxu0 0
    %1555 = vmatpush1.bf16.msra.mxu0 0
    %1556 = vmatprep.subr.bf16.mxu0 0
    %1557 = vmatpush1.bf16.msra.mxu0 0
    %1558 = vmatprep.subr.bf16.mxu0 0
    %1559 = vmatpush1.bf16.msra.mxu0 %v1539
    %1560 = vmatprep.subr.bf16.mxu0 0
    %1561 = vmatpush2.bf16.msra.mxu0 0
    %1562 = vmatprep.subr.bf16.mxu0 0
    %1563 = vmatpush2.bf16.msra.mxu0 0
    %1564 = vmatprep.subr.bf16.mxu0 0
    %1565 = vmatpush2.bf16.msra.mxu0 0
    %1566 = vmatprep.subr.bf16.mxu0 0
    %1567 = vmatpush2.bf16.msra.mxu0 0
    %1568 = vmatprep.subr.bf16.mxu0 0
    %1569 = vmatpush2.bf16.msra.mxu0 0
    %1570 = vmatprep.subr.bf16.mxu0 0
    %1571 = vmatpush2.bf16.msra.mxu0 0
    %1572 = vmatprep.subr.bf16.mxu0 0
    %1573 = vmatpush2.bf16.msra.mxu0 0
    %1574 = vmatprep.subr.bf16.mxu0 0
    %1575 = vmatpush2.bf16.msra.mxu0 0
    %1576 = vmatprep.mubr.bf16.mxu0 0
    %1577 = vmatmul.mubr.bf16.gmra.mxu0 %v1542
    %v1578 = vpop.f32.mrf.mxu0
    %v1579 = vadd.f32 0.0, %v1578
    %v1580 = vpop.f32.mrf.mxu0
    %v1581 = vpop.f32.mrf.mxu0
    %v1582 = vadd.f32 0.0, %v1581
    %v1583 = vpop.f32.mrf.mxu0
    %1584 = vdwg.mxu0
    %1585 = vrot.lane.b32.xlu0 %v1210, 104
    %v1586 = vpop.permute.xlu0 %1585
    %1587 = vrot.lane.b32.xlu0 %v1210, 72
    %v1588 = vpop.permute.xlu0 %1587
    %v1590 = vsel %vm330, %v1586, 0
    %v1593 = vsel %vm330, %v1588, 0
    %1595 = vmatprep.subr.bf16.mxu0 0
    %1596 = vmatpush1.bf16.xpose.msra.mxu0 0
    %1597 = vmatprep.subr.bf16.mxu0 0
    %1598 = vmatpush1.bf16.xpose.msra.mxu0 0
    %1599 = vmatprep.subr.bf16.mxu0 0
    %1600 = vmatpush1.bf16.xpose.msra.mxu0 0
    %1601 = vmatprep.subr.bf16.mxu0 0
    %1602 = vmatpush1.bf16.xpose.msra.mxu0 0
    %1603 = vmatprep.subr.bf16.mxu0 0
    %1604 = vmatpush1.bf16.xpose.msra.mxu0 0
    %1605 = vmatprep.subr.bf16.mxu0 0
    %1606 = vmatpush1.bf16.xpose.msra.mxu0 0
    %1607 = vmatprep.subr.bf16.mxu0 0
    %1608 = vmatpush1.bf16.xpose.msra.mxu0 0
    %1609 = vmatprep.subr.bf16.mxu0 0
    %1610 = vmatpush1.bf16.xpose.msra.mxu0 %v1593
    %1611 = vmatprep.subr.bf16.mxu0 0
    %1612 = vmatpush2.bf16.xpose.msra.mxu0 0
    %1613 = vmatprep.subr.bf16.mxu0 0
    %1614 = vmatpush2.bf16.xpose.msra.mxu0 0
    %1615 = vmatprep.subr.bf16.mxu0 0
    %1616 = vmatpush2.bf16.xpose.msra.mxu0 0
    %1617 = vmatprep.subr.bf16.mxu0 0
    %1618 = vmatpush2.bf16.xpose.msra.mxu0 0
    %1619 = vmatprep.subr.bf16.mxu0 0
    %1620 = vmatpush2.bf16.xpose.msra.mxu0 0
    %1621 = vmatprep.subr.bf16.mxu0 0
    %1622 = vmatpush2.bf16.xpose.msra.mxu0 0
    %1623 = vmatprep.subr.bf16.mxu0 0
    %1624 = vmatpush2.bf16.xpose.msra.mxu0 0
    %1625 = vmatprep.subr.bf16.mxu0 0
    %1626 = vmatpush2.bf16.xpose.msra.mxu0 0
    %1627 = vmatprep.mubr.bf16.mxu0 0
    %1628 = vmatmul.mubr.bf16.gmra.mxu0 %v1590
    %v1629 = vpop.f32.mrf.mxu0
    %v1630 = vadd.f32 0.0, %v1629
    %v1631 = vpop.f32.mrf.mxu0
    %v1632 = vpop.f32.mrf.mxu0
    %v1633 = vadd.f32 0.0, %v1632
    %v1634 = vpop.f32.mrf.mxu0
    %1635 = vdwg.mxu0
    %v1636 = vmul.f32 %v1630, 0.35355338
    %v1637 = vmul.f32 %v1633, 0.35355338
    %v1638 = vadd.f32 %v1636, %v71
    %v1639 = vadd.f32 %v1637, %v72
    %v1640 = vsel %vm382, %v1638, -inf
    %1641 = vmax.xlane.f32.xlu0 %v1640
    %v1642 = vpop.xlane.xlu0 %1641
    %v1643 = vsel %vm382, %v1639, -inf
    %1644 = vmax.xlane.f32.xlu0 %v1643
    %v1645 = vpop.xlane.xlu0 %1644
    %v1646 = vsub.f32 %v1638, %v1642
    %v1647 = vsub.f32 %v1639, %v1645
    %v1648 = vmul.f32 %v1646, 1.442695
    %v1649 = vpow.pop %v1648
    %v1650 = vmul.f32 %v1647, 1.442695
    %v1651 = vpow.pop %v1650
    %v1652 = vsel %vm382, %v1649, 0.0
    %1653 = vadd.xlane.f32.xlu0 %v1652
    %v1654 = vpop.xlane.xlu0 %1653
    %v1655 = vsel %vm382, %v1651, 0.0
    %1656 = vadd.xlane.f32.xlu0 %v1655
    %v1657 = vpop.xlane.xlu0 %1656
    %v1658 = vrcp.pop %v1654
    %v1659 = vrcp.pop %v1657
    %v1660 = vmul.f32 %v1649, %v1658
    %v1661 = vmul.f32 %v1651, %v1659
    %v1662 = vpack.c.bf16 %v1661, %v1660
    %1663 = vrot.lane.b32.xlu0 %v1210, 40
    %v1664 = vpop.permute.xlu0 %1663
    %v1667 = vsel %vm382, %v1662, 0
    %1669 = vmatprep.subr.bf16.mxu0 0
    %1670 = vmatpush1.bf16.msra.mxu0 0
    %1671 = vmatprep.subr.bf16.mxu0 0
    %1672 = vmatpush1.bf16.msra.mxu0 0
    %1673 = vmatprep.subr.bf16.mxu0 0
    %1674 = vmatpush1.bf16.msra.mxu0 0
    %1675 = vmatprep.subr.bf16.mxu0 0
    %1676 = vmatpush1.bf16.msra.mxu0 0
    %1677 = vmatprep.subr.bf16.mxu0 0
    %1678 = vmatpush1.bf16.msra.mxu0 0
    %1679 = vmatprep.subr.bf16.mxu0 0
    %1680 = vmatpush1.bf16.msra.mxu0 0
    %1681 = vmatprep.subr.bf16.mxu0 0
    %1682 = vmatpush1.bf16.msra.mxu0 0
    %1683 = vmatprep.subr.bf16.mxu0 0
    %1684 = vmatpush1.bf16.msra.mxu0 %v1664
    %1685 = vmatprep.subr.bf16.mxu0 0
    %1686 = vmatpush2.bf16.msra.mxu0 0
    %1687 = vmatprep.subr.bf16.mxu0 0
    %1688 = vmatpush2.bf16.msra.mxu0 0
    %1689 = vmatprep.subr.bf16.mxu0 0
    %1690 = vmatpush2.bf16.msra.mxu0 0
    %1691 = vmatprep.subr.bf16.mxu0 0
    %1692 = vmatpush2.bf16.msra.mxu0 0
    %1693 = vmatprep.subr.bf16.mxu0 0
    %1694 = vmatpush2.bf16.msra.mxu0 0
    %1695 = vmatprep.subr.bf16.mxu0 0
    %1696 = vmatpush2.bf16.msra.mxu0 0
    %1697 = vmatprep.subr.bf16.mxu0 0
    %1698 = vmatpush2.bf16.msra.mxu0 0
    %1699 = vmatprep.subr.bf16.mxu0 0
    %1700 = vmatpush2.bf16.msra.mxu0 0
    %1701 = vmatprep.mubr.bf16.mxu0 0
    %1702 = vmatmul.mubr.bf16.gmra.mxu0 %v1667
    %v1703 = vpop.f32.mrf.mxu0
    %v1704 = vadd.f32 0.0, %v1703
    %v1705 = vpop.f32.mrf.mxu0
    %v1706 = vpop.f32.mrf.mxu0
    %v1707 = vadd.f32 0.0, %v1706
    %v1708 = vpop.f32.mrf.mxu0
    %1709 = vdwg.mxu0
    %1712 = vrot.lane.b32.xlu0 %v1454, 8
    %v1713 = vpop.permute.xlu0 %1712
    %1714 = vrot.lane.b32.xlu0 %v1457, 8
    %v1715 = vpop.permute.xlu0 %1714
    %1720 = vrot.lane.b32.xlu0 %v1579, 16
    %v1721 = vpop.permute.xlu0 %1720
    %1722 = vrot.lane.b32.xlu0 %v1582, 16
    %v1723 = vpop.permute.xlu0 %1722
    %1728 = vrot.lane.b32.xlu0 %v1704, 24
    %v1729 = vpop.permute.xlu0 %1728
    %1730 = vrot.lane.b32.xlu0 %v1707, 24
    %v1731 = vpop.permute.xlu0 %1730
    %v1734 = vsel %vm330, %v1329, %v1713
    %v1735 = vsel %vm330, %v1332, %v1715
    %v1736 = vsel %vm382, %v1734, %v1721
    %v1737 = vsel %vm382, %v1735, %v1723
    %v1738 = vsel %vm856, %v1736, %v1729
    %v1739 = vsel %vm856, %v1737, %v1731
    %s1740 = scalar_lea.vmem %s10, 32
    %v1741 = vld [vmem:[%s1740] sm:$0xff]
    %v1742 = vld [vmem:[%s1740 + $0x8] sm:$0xff]
    %v1743 = vld [vmem:[%s1740 + $0x10] sm:$0xff]
    %v1744 = vld [vmem:[%s1740 + $0x18] sm:$0xff]
    %v1745 = vpack.c.bf16 %v1739, %v1738
    %v1746 = vpack.c.bf16 %v1742, %v1741
    %v1747 = vpack.c.bf16 %v1744, %v1743
    %s1748 = scalar_lea.vmem %s11, 1
    %v1749 = vld [vmem:[%s1748] sm:$0x1]
    %v1751 = vlaneseq
    %v1752 = vshrl.u32 %v1751, 7
    %v1753 = vsub.s32 0, %v1752
    %v1754 = vrot.slane %v1749, %v1753
    %v1757 = vsel %vm224, %v1745, 0
    %1759 = vmatprep.subr.bf16.mxu0 0
    %1760 = vmatpush1.bf16.msra.mxu0 0
    %1761 = vmatprep.subr.bf16.mxu0 0
    %1762 = vmatpush1.bf16.msra.mxu0 0
    %1763 = vmatprep.subr.bf16.mxu0 0
    %1764 = vmatpush1.bf16.msra.mxu0 0
    %1765 = vmatprep.subr.bf16.mxu0 0
    %1766 = vmatpush1.bf16.msra.mxu0 0
    %1767 = vmatprep.subr.bf16.mxu0 0
    %1768 = vmatpush1.bf16.msra.mxu0 0
    %1769 = vmatprep.subr.bf16.mxu0 0
    %1770 = vmatpush1.bf16.msra.mxu0 0
    %1771 = vmatprep.subr.bf16.mxu0 0
    %1772 = vmatpush1.bf16.msra.mxu0 %v1747
    %1773 = vmatprep.subr.bf16.mxu0 0
    %1774 = vmatpush1.bf16.msra.mxu0 %v1746
    %1775 = vmatprep.subr.bf16.mxu0 0
    %1776 = vmatpush2.bf16.msra.mxu0 0
    %1777 = vmatprep.subr.bf16.mxu0 0
    %1778 = vmatpush2.bf16.msra.mxu0 0
    %1779 = vmatprep.subr.bf16.mxu0 0
    %1780 = vmatpush2.bf16.msra.mxu0 0
    %1781 = vmatprep.subr.bf16.mxu0 0
    %1782 = vmatpush2.bf16.msra.mxu0 0
    %1783 = vmatprep.subr.bf16.mxu0 0
    %1784 = vmatpush2.bf16.msra.mxu0 0
    %1785 = vmatprep.subr.bf16.mxu0 0
    %1786 = vmatpush2.bf16.msra.mxu0 0
    %1787 = vmatprep.subr.bf16.mxu0 0
    %1788 = vmatpush2.bf16.msra.mxu0 0
    %1789 = vmatprep.subr.bf16.mxu0 0
    %1790 = vmatpush2.bf16.msra.mxu0 0
    %1791 = vmatprep.mubr.bf16.mxu0 0
    %1792 = vmatmul.mubr.bf16.gmra.mxu0 %v1757
    %v1793 = vpop.f32.mrf.mxu0
    %v1794 = vadd.f32 %v1754, %v1793
    %v1795 = vpop.f32.mrf.mxu0
    %v1796 = vpop.f32.mrf.mxu0
    %v1797 = vadd.f32 %v1754, %v1796
    %v1798 = vpop.f32.mrf.mxu0
    %1799 = vdwg.mxu0
    %v1800 = vadd.f32 %v1794, %v1148
    %v1801 = vadd.f32 %v1797, %v1149
    %s1802 = scalar_lea.vmem %s12, 1
    %v1803 = vld [vmem:[%s1802] sm:$0x1]
    %s1804 = scalar_lea.vmem %s13, 1
    %v1805 = vld [vmem:[%s1804] sm:$0x1]
    %v1806 = vsel %vm224, %v1800, 0.0
    %1807 = vadd.xlane.f32.xlu0 %v1806
    %v1808 = vpop.xlane.xlu0 %1807
    %v1809 = vsel %vm224, %v1801, 0.0
    %1810 = vadd.xlane.f32.xlu0 %v1809
    %v1811 = vpop.xlane.xlu0 %1810
    %v1812 = vmul.f32 %v1808, %v231
    %v1813 = vmul.f32 %v1811, %v231
    %v1814 = vsub.f32 %v1800, %v1812
    %v1815 = vsub.f32 %v1801, %v1813
    %v1816 = vmul.f32 %v1814, %v1814
    %v1817 = vmul.f32 %v1815, %v1815
    %v1818 = vsel %vm224, %v1816, 0.0
    %1819 = vadd.xlane.f32.xlu0 %v1818
    %v1820 = vpop.xlane.xlu0 %1819
    %v1821 = vsel %vm224, %v1817, 0.0
    %1822 = vadd.xlane.f32.xlu0 %v1821
    %v1823 = vpop.xlane.xlu0 %1822
    %v1824 = vmul.f32 %v1820, %v231
    %v1825 = vmul.f32 %v1823, %v231
    %v1826 = vadd.f32 %v1824, 1e-05
    %v1827 = vadd.f32 %v1825, 1e-05
    %v1828 = vrsqrt.pop %v1826
    %v1829 = vrsqrt.pop %v1827
    %v1830 = vmul.f32 %v1814, %v1828
    %v1831 = vmul.f32 %v1815, %v1829
    %v1833 = vlaneseq
    %v1834 = vshrl.u32 %v1833, 7
    %v1835 = vsub.s32 0, %v1834
    %v1836 = vrot.slane %v1803, %v1835
    %v1838 = vmul.f32 %v1830, %v1836
    %v1839 = vmul.f32 %v1831, %v1836
    %v1841 = vlaneseq
    %v1842 = vshrl.u32 %v1841, 7
    %v1843 = vsub.s32 0, %v1842
    %v1844 = vrot.slane %v1805, %v1843
    %v1846 = vadd.f32 %v1838, %v1844
    %v1847 = vadd.f32 %v1839, %v1844
    %s1848 = scalar_lea.vmem %s14, 32
    %v1849 = vld [vmem:[%s1848] sm:$0xff]
    %v1850 = vld [vmem:[%s1848 + $0x8] sm:$0xff]
    %v1851 = vld [vmem:[%s1848 + $0x10] sm:$0xff]
    %v1852 = vld [vmem:[%s1848 + $0x18] sm:$0xff]
    %v1853 = vpack.c.bf16 %v1847, %v1846
    %v1854 = vpack.c.bf16 %v1850, %v1849
    %v1855 = vpack.c.bf16 %v1852, %v1851
    %s1856 = scalar_lea.vmem %s15, 1
    %v1857 = vld [vmem:[%s1856] sm:$0x1]
    %v1859 = vlaneseq
    %v1860 = vshrl.u32 %v1859, 7
    %v1861 = vsub.s32 0, %v1860
    %v1862 = vrot.slane %v1857, %v1861
    %v1865 = vsel %vm224, %v1853, 0
    %1867 = vmatprep.subr.bf16.mxu0 0
    %1868 = vmatpush1.bf16.msra.mxu0 0
    %1869 = vmatprep.subr.bf16.mxu0 0
    %1870 = vmatpush1.bf16.msra.mxu0 0
    %1871 = vmatprep.subr.bf16.mxu0 0
    %1872 = vmatpush1.bf16.msra.mxu0 0
    %1873 = vmatprep.subr.bf16.mxu0 0
    %1874 = vmatpush1.bf16.msra.mxu0 0
    %1875 = vmatprep.subr.bf16.mxu0 0
    %1876 = vmatpush1.bf16.msra.mxu0 0
    %1877 = vmatprep.subr.bf16.mxu0 0
    %1878 = vmatpush1.bf16.msra.mxu0 0
    %1879 = vmatprep.subr.bf16.mxu0 0
    %1880 = vmatpush1.bf16.msra.mxu0 %v1855
    %1881 = vmatprep.subr.bf16.mxu0 0
    %1882 = vmatpush1.bf16.msra.mxu0 %v1854
    %1883 = vmatprep.subr.bf16.mxu0 0
    %1884 = vmatpush2.bf16.msra.mxu0 0
    %1885 = vmatprep.subr.bf16.mxu0 0
    %1886 = vmatpush2.bf16.msra.mxu0 0
    %1887 = vmatprep.subr.bf16.mxu0 0
    %1888 = vmatpush2.bf16.msra.mxu0 0
    %1889 = vmatprep.subr.bf16.mxu0 0
    %1890 = vmatpush2.bf16.msra.mxu0 0
    %1891 = vmatprep.subr.bf16.mxu0 0
    %1892 = vmatpush2.bf16.msra.mxu0 0
    %1893 = vmatprep.subr.bf16.mxu0 0
    %1894 = vmatpush2.bf16.msra.mxu0 0
    %1895 = vmatprep.subr.bf16.mxu0 0
    %1896 = vmatpush2.bf16.msra.mxu0 0
    %1897 = vmatprep.subr.bf16.mxu0 0
    %1898 = vmatpush2.bf16.msra.mxu0 0
    %1899 = vmatprep.mubr.bf16.mxu0 0
    %1900 = vmatmul.mubr.bf16.gmra.mxu0 %v1865
    %v1901 = vpop.f32.mrf.mxu0
    %v1902 = vadd.f32 %v1862, %v1901
    %v1903 = vpop.f32.mrf.mxu0
    %v1904 = vpop.f32.mrf.mxu0
    %v1905 = vadd.f32 %v1862, %v1904
    %v1906 = vpop.f32.mrf.mxu0
    %1907 = vdwg.mxu0
    %v1908 = vmul.f32 %v1902, 0.5
    %v1909 = vmul.f32 %v1905, 0.5
    %v1910 = vmul.f32 %v1902, 0.044715
    %v1911 = vmul.f32 %v1905, 0.044715
    %v1912 = vmul.f32 %v1910, %v1902
    %v1913 = vmul.f32 %v1911, %v1905
    %v1914 = vmul.f32 %v1912, %v1902
    %v1915 = vmul.f32 %v1913, %v1905
    %v1916 = vadd.f32 %v1902, %v1914
    %v1917 = vadd.f32 %v1905, %v1915
    %v1918 = vmul.f32 %v1916, 0.7978846
    %v1919 = vmul.f32 %v1917, 0.7978846
    %v1920 = vtanh.pop %v1918
    %v1921 = vtanh.pop %v1919
    %v1922 = vadd.f32 %v1920, 1.0
    %v1923 = vadd.f32 %v1921, 1.0
    %v1924 = vmul.f32 %v1908, %v1922
    %v1925 = vmul.f32 %v1909, %v1923
    %s1926 = scalar_lea.vmem %s16, 64
    %v1927 = vld [vmem:[%s1926] sm:$0xff]
    %v1928 = vld [vmem:[%s1926 + $0x8] sm:$0xff]
    %v1929 = vld [vmem:[%s1926 + $0x10] sm:$0xff]
    %v1930 = vld [vmem:[%s1926 + $0x18] sm:$0xff]
    %v1931 = vld [vmem:[%s1926 + $0x20] sm:$0xff]
    %v1932 = vld [vmem:[%s1926 + $0x28] sm:$0xff]
    %v1933 = vld [vmem:[%s1926 + $0x30] sm:$0xff]
    %v1934 = vld [vmem:[%s1926 + $0x38] sm:$0xff]
    %v1935 = vpack.c.bf16 %v1925, %v1924
    %v1936 = vpack.c.bf16 %v1928, %v1927
    %v1937 = vpack.c.bf16 %v1930, %v1929
    %v1938 = vpack.c.bf16 %v1932, %v1931
    %v1939 = vpack.c.bf16 %v1934, %v1933
    %s1940 = scalar_lea.vmem %s17, 1
    %v1941 = vld [vmem:[%s1940] sm:$0x1]
    %v1943 = vlaneseq
    %v1944 = vshrl.u32 %v1943, 7
    %v1945 = vsub.s32 0, %v1944
    %v1946 = vrot.slane %v1941, %v1945
    %v1949 = vsel %vm1059, %v1935, 0
    %1951 = vmatprep.subr.bf16.mxu0 0
    %1952 = vmatpush1.bf16.msra.mxu0 0
    %1953 = vmatprep.subr.bf16.mxu0 0
    %1954 = vmatpush1.bf16.msra.mxu0 0
    %1955 = vmatprep.subr.bf16.mxu0 0
    %1956 = vmatpush1.bf16.msra.mxu0 0
    %1957 = vmatprep.subr.bf16.mxu0 0
    %1958 = vmatpush1.bf16.msra.mxu0 0
    %1959 = vmatprep.subr.bf16.mxu0 0
    %1960 = vmatpush1.bf16.msra.mxu0 %v1939
    %1961 = vmatprep.subr.bf16.mxu0 0
    %1962 = vmatpush1.bf16.msra.mxu0 %v1938
    %1963 = vmatprep.subr.bf16.mxu0 0
    %1964 = vmatpush1.bf16.msra.mxu0 %v1937
    %1965 = vmatprep.subr.bf16.mxu0 0
    %1966 = vmatpush1.bf16.msra.mxu0 %v1936
    %1967 = vmatprep.subr.bf16.mxu0 0
    %1968 = vmatpush2.bf16.msra.mxu0 0
    %1969 = vmatprep.subr.bf16.mxu0 0
    %1970 = vmatpush2.bf16.msra.mxu0 0
    %1971 = vmatprep.subr.bf16.mxu0 0
    %1972 = vmatpush2.bf16.msra.mxu0 0
    %1973 = vmatprep.subr.bf16.mxu0 0
    %1974 = vmatpush2.bf16.msra.mxu0 0
    %1975 = vmatprep.subr.bf16.mxu0 0
    %1976 = vmatpush2.bf16.msra.mxu0 0
    %1977 = vmatprep.subr.bf16.mxu0 0
    %1978 = vmatpush2.bf16.msra.mxu0 0
    %1979 = vmatprep.subr.bf16.mxu0 0
    %1980 = vmatpush2.bf16.msra.mxu0 0
    %1981 = vmatprep.subr.bf16.mxu0 0
    %1982 = vmatpush2.bf16.msra.mxu0 0
    %1983 = vmatprep.mubr.bf16.mxu0 0
    %1984 = vmatmul.mubr.bf16.gmra.mxu0 %v1949
    %v1985 = vpop.f32.mrf.mxu0
    %v1986 = vadd.f32 %v1946, %v1985
    %v1987 = vpop.f32.mrf.mxu0
    %v1988 = vpop.f32.mrf.mxu0
    %v1989 = vadd.f32 %v1946, %v1988
    %v1990 = vpop.f32.mrf.mxu0
    %1991 = vdwg.mxu0
    %v1992 = vadd.f32 %v1986, %v1846
    %v1993 = vadd.f32 %v1989, %v1847
    %s1994 = scalar_lea.vmem %s18, 1
    %v1995 = vld [vmem:[%s1994] sm:$0x1]
    %s1996 = scalar_lea.vmem %s19, 1
    %v1997 = vld [vmem:[%s1996] sm:$0x1]
    %v1998 = vsel %vm224, %v1992, 0.0
    %1999 = vadd.xlane.f32.xlu0 %v1998
    %v2000 = vpop.xlane.xlu0 %1999
    %v2001 = vsel %vm224, %v1993, 0.0
    %2002 = vadd.xlane.f32.xlu0 %v2001
    %v2003 = vpop.xlane.xlu0 %2002
    %v2004 = vmul.f32 %v2000, %v231
    %v2005 = vmul.f32 %v2003, %v231
    %v2006 = vsub.f32 %v1992, %v2004
    %v2007 = vsub.f32 %v1993, %v2005
    %v2008 = vmul.f32 %v2006, %v2006
    %v2009 = vmul.f32 %v2007, %v2007
    %v2010 = vsel %vm224, %v2008, 0.0
    %2011 = vadd.xlane.f32.xlu0 %v2010
    %v2012 = vpop.xlane.xlu0 %2011
    %v2013 = vsel %vm224, %v2009, 0.0
    %2014 = vadd.xlane.f32.xlu0 %v2013
    %v2015 = vpop.xlane.xlu0 %2014
    %v2016 = vmul.f32 %v2012, %v231
    %v2017 = vmul.f32 %v2015, %v231
    %v2018 = vadd.f32 %v2016, 1e-05
    %v2019 = vadd.f32 %v2017, 1e-05
    %v2020 = vrsqrt.pop %v2018
    %v2021 = vrsqrt.pop %v2019
    %v2022 = vmul.f32 %v2006, %v2020
    %v2023 = vmul.f32 %v2007, %v2021
    %v2025 = vlaneseq
    %v2026 = vshrl.u32 %v2025, 7
    %v2027 = vsub.s32 0, %v2026
    %v2028 = vrot.slane %v1995, %v2027
    %v2030 = vmul.f32 %v2022, %v2028
    %v2031 = vmul.f32 %v2023, %v2028
    %v2033 = vlaneseq
    %v2034 = vshrl.u32 %v2033, 7
    %v2035 = vsub.s32 0, %v2034
    %v2036 = vrot.slane %v1997, %v2035
    %v2038 = vadd.f32 %v2030, %v2036
    %v2039 = vadd.f32 %v2031, %v2036
    %2040 = vst.msk [vmem:[#allocation2] sm:$0xff] %vm224, %v2038
    %2041 = vst.msk [vmem:[#allocation2 + $0x8] sm:$0xff] %vm224, %v2039
    // Predicated region
    $region82: #{xlmroberta_word_embedder.1} parent=1 // pred_check
      _
    $region83: #{xlmroberta_word_embedder.1} parent=1 // pred_check_branch
      %2043 = sbr.rel (0) target = $region85
    $region84: #{xlmroberta_word_embedder.1} parent=1 // pred_region
      %s2045 = ssub.s32 256, 256
      %2046 = vsyncadd [#allocation3], %s2045
      %s2047 = sshll.u32 [#allocation2], 4
      %s2048 = int_to_ptr.vmem [resolvable:$true] %s2047
      %2053 = dma.vmem_to_hbm [thread:$0]  %s2048, 256, %s20, [#allocation3], 128, 128, 8
    $region85: #{xlmroberta_word_embedder.1} parent=1 // pred_fallthru
      _
    // Predicated region
    $region86: #{xlmroberta_word_embedder.1} parent=1 // pred_check
      _
    $region87: #{xlmroberta_word_embedder.1} parent=1 // pred_check_branch
      %2055 = sbr.rel (0) target = $region89
    $region88: #{xlmroberta_word_embedder.1} parent=1 // pred_region
      %2056 = dma.done [#allocation3], 256
    $region89: #{xlmroberta_word_embedder.1} parent=1 // pred_fallthru
      _
    %2057 = vsyncpa [#allocation3], 1

</llo_original>
